<compile_context>
chip_gen: v7x
topology: tpu7x:2x2x1
jax: 0.10.0
libtpu: 0.0.40
codegen_flags: <defaults>
</compile_context>

<pallas_src>
import functools
import numpy as np
import jax
import jax.numpy as jnp
from jax import lax
from jax.experimental import pallas as pl
from jax.experimental.pallas import tpu as pltpu

# ---- config (Disentangle(nfeat, nhid, nebed, nfactor, beta, t)) ----
N       = 128    # number of nodes
NFEAT   = 32
NHID    = 16     # != 1  -> Factor2 path (two-layer MLP). nhid == 1 would be a single Linear.
NEBED   = 32
NFACTOR = 4
BETA    = 0.3
TEMP    = 1.0


def _pick_exp_dtype():
    """bf16 transcendentals only on chips with a bf16 EUP (v6e / v7x)."""
    try:
        kind = jax.devices()[0].device_kind.lower()
    except Exception:  # pragma: no cover - conservative fallback
        return jnp.float32
    if ("v6" in kind) or ("v7" in kind) or ("tpu7" in kind):
        return jnp.bfloat16
    return jnp.float32


EXP_DTYPE = _pick_exp_dtype()


# ---------------------------------------------------------------- glue: adjacency
def coo_to_adjacency_matrix(edge_index, n):
    row, col = edge_index
    return jnp.zeros((n, n), jnp.float32).at[row, col].add(1.0)


# ---------------------------------------------------------------- fused kernel
def fused_disentangle_kernel(x_ref, w1p_ref, b1p_ref, w2bd_ref, b2p_ref, adj_ref,
                             h_ref, lp_ref, alpha_scr,
                             *, nfactor, nebed, beta, temperature, exp_dtype):
    # ---- packed factor MLPs: one matmul per layer --------------------------------
    x = x_ref[...]                                                      # [N, NFEAT]
    hid = jnp.dot(x, w1p_ref[...], preferred_element_type=jnp.float32) + b1p_ref[...]
    hid = jnp.maximum(hid, 0.0)                                         # [N, F*NHID]
    # block-diagonal second layer -> lane-dense Z slab [N, F*NEBED]
    z_slab = jnp.dot(hid, w2bd_ref[...], preferred_element_type=jnp.float32) + b2p_ref[...]

    adj = adj_ref[...]                                                  # [N, N]
    nnodes = adj.shape[0]
    inv_t = 1.0 / temperature
    # contract the embedding dim of both operands: a @ b.T without an explicit transpose
    dn = (((1,), (1,)), ((), ()))

    # ---- per-factor gram logits: routing on f32 logits, exp in exp_dtype ----------
    # alpha0_i = exp(s_i) is written straight to the VMEM scratch slab so only
    # (best, p, s, alpha0_i) are live through the EUP-heavy part of the loop.
    best = None
    p = None
    for i in range(nfactor):
        z = z_slab[:, i * nebed:(i + 1) * nebed]                        # [N, NEBED]
        s = lax.dot_general(z, z, dn, preferred_element_type=jnp.float32) * inv_t
        if i == 0:
            best = s
            p = jnp.zeros_like(s)
        else:
            gt = s > best                                               # strict '>' keeps first
            best = jnp.where(gt, s, best)                               # index on ties (argmax)
            p = jnp.where(gt, jnp.float32(i), p)
        # exp is monotone, so routing above is identical to argmax on alpha.
        alpha_scr[i] = jnp.exp(s.astype(exp_dtype)).astype(jnp.float32)

    # tsum / inv_tsum from the slab (ld slots have slack; keeps vreg pressure down)
    tsum = alpha_scr[0]
    for i in range(1, nfactor):
        tsum = tsum + alpha_scr[i]
    inv_tsum = pl.reciprocal(tsum, approx=True)                         # alpha_i = alpha0_i*inv_tsum

    p_adj = (p + 1.0) * adj

    # ---- per-factor propagation + link prediction ---------------------------------
    ones_row = jnp.ones((1, nnodes), jnp.float32)
    for i in range(nfactor):
        a0 = alpha_scr[i]                                               # reload [N, N]
        mask = (p_adj == jnp.float32(i + 1)).astype(jnp.float32)
        alpha1 = mask * (a0 * inv_tsum)
        # rowsum[0, r] = sum_c alpha1[r, c]  (laid out along the lane axis, no transpose)
        rowsum = lax.dot_general(ones_row, alpha1, dn,
                                 preferred_element_type=jnp.float32)    # [1, N]
        rowsum = jnp.where(rowsum == 0.0, 1.0, rowsum)
        # matches the PyTorch broadcast: column j divided by the row-sum of row j
        alpha1 = alpha1 * pl.reciprocal(rowsum, approx=True)

        z = z_slab[:, i * nebed:(i + 1) * nebed]
        h = beta * z + (1.0 - beta) * jnp.dot(alpha1, z,
                                              preferred_element_type=jnp.float32)
        # write this factor's h directly into its lane slice of the output
        h_ref[:, i * nebed:(i + 1) * nebed] = h.astype(h_ref.dtype)

        g = lax.dot_general(h, h, dn, preferred_element_type=jnp.float32)  # h_i @ h_i^T
        contrib = g * a0
        if i == 0:
            lp_ref[...] = contrib
        else:
            lp_ref[...] = lp_ref[...] + contrib

    # sigmoid(x) = 0.5*(tanh(0.5*x)+1): single EUP pass; bf16 on v6e/v7x
    lp = lp_ref[...]
    lp_ref[...] = (0.5 * (jnp.tanh((0.5 * lp).astype(exp_dtype)).astype(jnp.float32)
                          + 1.0)).astype(lp_ref.dtype)


@jax.jit
def disentangle_forward(x, adj, w1, b1, w2, b2):
    F = NFACTOR
    # pack the 4 factor MLPs into one matmul per layer (done once, outside the kernel)
    w1p = jnp.transpose(w1, (1, 0, 2)).reshape(NFEAT, F * NHID)         # [NFEAT, F*NHID]
    b1p = b1.reshape(1, F * NHID)                                       # [1, F*NHID]
    w2bd = jnp.zeros((F * NHID, F * NEBED), jnp.float32)                # block-diagonal
    for f in range(F):
        w2bd = w2bd.at[f * NHID:(f + 1) * NHID, f * NEBED:(f + 1) * NEBED].set(w2[f])
    b2p = b2.reshape(1, F * NEBED)                                      # [1, F*NEBED]

    kernel = functools.partial(fused_disentangle_kernel, nfactor=F, nebed=NEBED,
                               beta=BETA, temperature=TEMP, exp_dtype=EXP_DTYPE)
    h_cat, lp = pl.pallas_call(
        kernel,
        out_shape=(jax.ShapeDtypeStruct((N, F * NEBED), jnp.float32),
                   jax.ShapeDtypeStruct((N, N), jnp.float32)),
        grid=(1,),
        in_specs=[
            pl.BlockSpec((N, NFEAT), lambda i: (0, 0)),
            pl.BlockSpec((NFEAT, F * NHID), lambda i: (0, 0)),
            pl.BlockSpec((1, F * NHID), lambda i: (0, 0)),
            pl.BlockSpec((F * NHID, F * NEBED), lambda i: (0, 0)),
            pl.BlockSpec((1, F * NEBED), lambda i: (0, 0)),
            pl.BlockSpec((N, N), lambda i: (0, 0)),
        ],
        out_specs=(pl.BlockSpec((N, F * NEBED), lambda i: (0, 0)),
                   pl.BlockSpec((N, N), lambda i: (0, 0))),
        scratch_shapes=[pltpu.VMEM((F, N, N), jnp.float32)],            # alpha0 slab (256 KiB)
        compiler_params=pltpu.CompilerParams(dimension_semantics=("arbitrary",)),
        cost_estimate=pl.CostEstimate(flops=16_000_000,
                                      transcendentals=82_000,
                                      bytes_accessed=256_000),
    )(x, w1p, b1p, w2bd, b2p, adj)
    # h_cat is already torch.cat(h_all_factor, dim=1): [N, NFACTOR*NEBED]
    return h_cat, lp


# ---------------------------------------------------------------- pure-JAX reference
def reference_forward(x, adj, w1, b1, w2, b2):
    P = lax.Precision.HIGHEST
    Z = []
    for f in range(NFACTOR):
        h = jnp.maximum(jnp.matmul(x, w1[f], precision=P) + b1[f], 0.0)
        Z.append(jnp.matmul(h, w2[f], precision=P) + b2[f])
    alpha0 = jnp.stack([jnp.exp(jnp.matmul(z, z.T, precision=P) / TEMP) for z in Z])
    alpha = alpha0 / jnp.sum(alpha0, axis=0)
    p = jnp.argmax(alpha, axis=0) + 1
    p_adj = p.astype(jnp.float32) * adj
    hs = []
    for i in range(NFACTOR):
        mask = (p_adj == float(i + 1)).astype(jnp.float32)
        a1 = mask * alpha[i]
        s = jnp.sum(a1, axis=1)
        s = jnp.where(s == 0.0, 1.0, s)
        a1 = a1 / s[None, :]
        hs.append(BETA * Z[i] + (1.0 - BETA) * jnp.matmul(a1, Z[i], precision=P))
    lp = jnp.zeros((N, N), jnp.float32)
    for i in range(NFACTOR):
        lp = lp + jnp.matmul(hs[i], hs[i].T, precision=P) * alpha0[i]
    return jnp.concatenate(hs, axis=1), jax.nn.sigmoid(lp)


if __name__ == "__main__":
    key = jax.random.PRNGKey(0)
    keys = jax.random.split(key, 4 * NFACTOR + 1)

    def linear_init(k, fan_in, shape):
        bound = 1.0 / np.sqrt(fan_in)
        return jax.random.uniform(k, shape, jnp.float32, -bound, bound)

    x = jax.random.normal(keys[0], (N, NFEAT), jnp.float32) * 0.5
    w1 = jnp.stack([linear_init(keys[1 + 4 * f + 0], NFEAT, (NFEAT, NHID)) for f in range(NFACTOR)])
    b1 = jnp.stack([linear_init(keys[1 + 4 * f + 1], NFEAT, (1, NHID)) for f in range(NFACTOR)])
    w2 = jnp.stack([linear_init(keys[1 + 4 * f + 2], NHID, (NHID, NEBED)) for f in range(NFACTOR)])
    b2 = jnp.stack([linear_init(keys[1 + 4 * f + 3], NHID, (1, NEBED)) for f in range(NFACTOR)])

    # deterministic edge_index (ring + skip-5), no duplicate edges
    rows = jnp.concatenate([jnp.arange(N), jnp.arange(N)]).astype(jnp.int32)
    cols = jnp.concatenate([(jnp.arange(N) + 1) % N, (jnp.arange(N) + 5) % N]).astype(jnp.int32)
    adj = coo_to_adjacency_matrix((rows, cols), N)

    h_cat, lp = disentangle_forward(x, adj, w1, b1, w2, b2)
    jax.block_until_ready((h_cat, lp))

    # sanity / correctness check against a pure-JAX reference
    h_ref, lp_ref = reference_forward(x, adj, w1, b1, w2, b2)
    assert h_cat.shape == (N, NFACTOR * NEBED) and lp.shape == (N, N)
    assert bool(jnp.all(jnp.isfinite(h_cat))) and bool(jnp.all(jnp.isfinite(lp)))
    # tolerant check: matmul precision / approx-reciprocal / (v6e+) bf16-exp differences;
    # routing itself is exact (argmax on f32 logits)
    h_close = float(np.mean(np.isclose(np.asarray(h_cat), np.asarray(h_ref), rtol=2e-2, atol=2e-2)))
    lp_close = float(np.mean(np.isclose(np.asarray(lp), np.asarray(lp_ref), rtol=2e-2, atol=2e-2)))
    assert h_close > 0.99 and lp_close > 0.99, (h_close, lp_close)

    print("KERNEL_OK")
</pallas_src>

<mosaic_0001>
module attributes {stable_mosaic.version = 11 : i64} {
  func.func @fused_disentangle_kernel(%arg0: i32, %arg1: memref<128x32xf32, #tpu.memory_space<vmem>>, %arg2: memref<32x64xf32, #tpu.memory_space<vmem>>, %arg3: memref<1x64xf32, #tpu.memory_space<vmem>>, %arg4: memref<64x128xf32, #tpu.memory_space<vmem>>, %arg5: memref<1x128xf32, #tpu.memory_space<vmem>>, %arg6: memref<128x128xf32, #tpu.memory_space<vmem>>, %arg7: memref<128x128xf32, #tpu.memory_space<vmem>>, %arg8: memref<128x128xf32, #tpu.memory_space<vmem>>, %arg9: memref<4x128x128xf32, #tpu.memory_space<vmem>>) attributes {dimension_semantics = [#tpu.dimension_semantics<arbitrary>], iteration_bounds = array<i64: 1>, scalar_prefetch = 0 : i64, scratch_operands = 1 : i64, tpu.core_type = #tpu.core_type<tc>, window_params = [{pipeline_mode = #tpu.pipeline_mode<synchronous>, transform_indices = @transform_0, window_bounds = array<i64: 128, 32>}, {pipeline_mode = #tpu.pipeline_mode<synchronous>, transform_indices = @transform_1, window_bounds = array<i64: 32, 64>}, {pipeline_mode = #tpu.pipeline_mode<synchronous>, transform_indices = @transform_2, window_bounds = array<i64: 1, 64>}, {pipeline_mode = #tpu.pipeline_mode<synchronous>, transform_indices = @transform_3, window_bounds = array<i64: 64, 128>}, {pipeline_mode = #tpu.pipeline_mode<synchronous>, transform_indices = @transform_4, window_bounds = array<i64: 1, 128>}, {pipeline_mode = #tpu.pipeline_mode<synchronous>, transform_indices = @transform_5, window_bounds = array<i64: 128, 128>}, {pipeline_mode = #tpu.pipeline_mode<synchronous>, transform_indices = @transform_6, window_bounds = array<i64: 128, 128>}, {pipeline_mode = #tpu.pipeline_mode<synchronous>, transform_indices = @transform_7, window_bounds = array<i64: 128, 128>}]} {
    %c0 = arith.constant 0 : index
    %c0_0 = arith.constant 0 : index
    %0 = vector.load %arg1[%c0, %c0_0] : memref<128x32xf32, #tpu.memory_space<vmem>>, vector<128x32xf32>
    %c0_1 = arith.constant 0 : index
    %c0_2 = arith.constant 0 : index
    %1 = vector.load %arg2[%c0_1, %c0_2] : memref<32x64xf32, #tpu.memory_space<vmem>>, vector<32x64xf32>
    %cst = arith.constant dense<0.000000e+00> : vector<128x64xf32>
    %2 = tpu.matmul %0, %1, %cst {dimension_numbers = #tpu.dot_dimension_numbers<[1], [0], [0], [1], [0, 0, 1, 1], [], []>} : vector<128x32xf32>, vector<32x64xf32>, vector<128x64xf32> -> vector<128x64xf32>
    %c0_3 = arith.constant 0 : index
    %c0_4 = arith.constant 0 : index
    %3 = vector.load %arg3[%c0_3, %c0_4] : memref<1x64xf32, #tpu.memory_space<vmem>>, vector<1x64xf32>
    %4 = vector.broadcast %3 : vector<1x64xf32> to vector<128x64xf32>
    %5 = arith.addf %2, %4 : vector<128x64xf32>
    %cst_5 = arith.constant 0.000000e+00 : f32
    %6 = vector.broadcast %cst_5 : f32 to vector<128x64xf32>
    %7 = arith.maximumf %5, %6 : vector<128x64xf32>
    %c0_6 = arith.constant 0 : index
    %c0_7 = arith.constant 0 : index
    %8 = vector.load %arg4[%c0_6, %c0_7] : memref<64x128xf32, #tpu.memory_space<vmem>>, vector<64x128xf32>
    %cst_8 = arith.constant dense<0.000000e+00> : vector<128x128xf32>
    %9 = tpu.matmul %7, %8, %cst_8 {dimension_numbers = #tpu.dot_dimension_numbers<[1], [0], [0], [1], [0, 0, 1, 1], [], []>} : vector<128x64xf32>, vector<64x128xf32>, vector<128x128xf32> -> vector<128x128xf32>
    %c0_9 = arith.constant 0 : index
    %c0_10 = arith.constant 0 : index
    %10 = vector.load %arg5[%c0_9, %c0_10] : memref<1x128xf32, #tpu.memory_space<vmem>>, vector<1x128xf32>
    %11 = vector.broadcast %10 : vector<1x128xf32> to vector<128x128xf32>
    %12 = arith.addf %9, %11 : vector<128x128xf32>
    %c0_11 = arith.constant 0 : index
    %c0_12 = arith.constant 0 : index
    %13 = vector.load %arg6[%c0_11, %c0_12] : memref<128x128xf32, #tpu.memory_space<vmem>>, vector<128x128xf32>
    %14 = vector.extract_strided_slice %12 {offsets = [0, 0], sizes = [128, 32], strides = [1, 1]} : vector<128x128xf32> to vector<128x32xf32>
    %cst_13 = arith.constant dense<0.000000e+00> : vector<128x128xf32>
    %15 = tpu.matmul %14, %14, %cst_13 {dimension_numbers = #tpu.dot_dimension_numbers<[1], [1], [0], [0], [0, 0, 1, 0], [], []>} : vector<128x32xf32>, vector<128x32xf32>, vector<128x128xf32> -> vector<128x128xf32>
    %cst_14 = arith.constant 1.000000e+00 : f32
    %16 = vector.broadcast %cst_14 : f32 to vector<128x128xf32>
    %17 = arith.mulf %15, %16 : vector<128x128xf32>
    %cst_15 = arith.constant 0.000000e+00 : f32
    %18 = vector.broadcast %cst_15 : f32 to vector<128x128xf32>
    %19 = math.exp %17 : vector<128x128xf32>
    %c0_16 = arith.constant 0 : index
    %c0_17 = arith.constant 0 : index
    %c0_18 = arith.constant 0 : index
    %20 = vector.load %arg9[%c0_16, %c0_17, %c0_18] : memref<4x128x128xf32, #tpu.memory_space<vmem>>, vector<1x128x128xf32>
    %21 = vector.shape_cast %20 : vector<1x128x128xf32> to vector<128x128xf32>
    %22 = vector.shape_cast %19 : vector<128x128xf32> to vector<1x128x128xf32>
    tpu.vector_store %arg9[%c0_16, %c0_17, %c0_18], %22 {strides = array<i32>} : memref<4x128x128xf32, #tpu.memory_space<vmem>>, vector<1x128x128xf32>,
    %23 = vector.extract_strided_slice %12 {offsets = [0, 32], sizes = [128, 32], strides = [1, 1]} : vector<128x128xf32> to vector<128x32xf32>
    %cst_19 = arith.constant dense<0.000000e+00> : vector<128x128xf32>
    %24 = tpu.matmul %23, %23, %cst_19 {dimension_numbers = #tpu.dot_dimension_numbers<[1], [1], [0], [0], [0, 0, 1, 0], [], []>} : vector<128x32xf32>, vector<128x32xf32>, vector<128x128xf32> -> vector<128x128xf32>
    %cst_20 = arith.constant 1.000000e+00 : f32
    %25 = vector.broadcast %cst_20 : f32 to vector<128x128xf32>
    %26 = arith.mulf %24, %25 : vector<128x128xf32>
    %27 = arith.cmpf ogt, %26, %17 : vector<128x128xf32>
    %28 = arith.select %27, %26, %17 : vector<128x128xi1>, vector<128x128xf32>
    %cst_21 = arith.constant 1.000000e+00 : f32
    %29 = vector.broadcast %cst_21 : f32 to vector<128x128xf32>
    %30 = arith.select %27, %29, %18 : vector<128x128xi1>, vector<128x128xf32>
    %31 = math.exp %26 : vector<128x128xf32>
    %c1 = arith.constant 1 : index
    %c0_22 = arith.constant 0 : index
    %c0_23 = arith.constant 0 : index
    %32 = vector.load %arg9[%c1, %c0_22, %c0_23] : memref<4x128x128xf32, #tpu.memory_space<vmem>>, vector<1x128x128xf32>
    %33 = vector.shape_cast %32 : vector<1x128x128xf32> to vector<128x128xf32>
    %34 = vector.shape_cast %31 : vector<128x128xf32> to vector<1x128x128xf32>
    tpu.vector_store %arg9[%c1, %c0_22, %c0_23], %34 {strides = array<i32>} : memref<4x128x128xf32, #tpu.memory_space<vmem>>, vector<1x128x128xf32>,
    %35 = vector.extract_strided_slice %12 {offsets = [0, 64], sizes = [128, 32], strides = [1, 1]} : vector<128x128xf32> to vector<128x32xf32>
    %cst_24 = arith.constant dense<0.000000e+00> : vector<128x128xf32>
    %36 = tpu.matmul %35, %35, %cst_24 {dimension_numbers = #tpu.dot_dimension_numbers<[1], [1], [0], [0], [0, 0, 1, 0], [], []>} : vector<128x32xf32>, vector<128x32xf32>, vector<128x128xf32> -> vector<128x128xf32>
    %cst_25 = arith.constant 1.000000e+00 : f32
    %37 = vector.broadcast %cst_25 : f32 to vector<128x128xf32>
    %38 = arith.mulf %36, %37 : vector<128x128xf32>
    %39 = arith.cmpf ogt, %38, %28 : vector<128x128xf32>
    %40 = arith.select %39, %38, %28 : vector<128x128xi1>, vector<128x128xf32>
    %cst_26 = arith.constant 2.000000e+00 : f32
    %41 = vector.broadcast %cst_26 : f32 to vector<128x128xf32>
    %42 = arith.select %39, %41, %30 : vector<128x128xi1>, vector<128x128xf32>
    %43 = math.exp %38 : vector<128x128xf32>
    %c2 = arith.constant 2 : index
    %c0_27 = arith.constant 0 : index
    %c0_28 = arith.constant 0 : index
    %44 = vector.load %arg9[%c2, %c0_27, %c0_28] : memref<4x128x128xf32, #tpu.memory_space<vmem>>, vector<1x128x128xf32>
    %45 = vector.shape_cast %44 : vector<1x128x128xf32> to vector<128x128xf32>
    %46 = vector.shape_cast %43 : vector<128x128xf32> to vector<1x128x128xf32>
    tpu.vector_store %arg9[%c2, %c0_27, %c0_28], %46 {strides = array<i32>} : memref<4x128x128xf32, #tpu.memory_space<vmem>>, vector<1x128x128xf32>,
    %47 = vector.extract_strided_slice %12 {offsets = [0, 96], sizes = [128, 32], strides = [1, 1]} : vector<128x128xf32> to vector<128x32xf32>
    %cst_29 = arith.constant dense<0.000000e+00> : vector<128x128xf32>
    %48 = tpu.matmul %47, %47, %cst_29 {dimension_numbers = #tpu.dot_dimension_numbers<[1], [1], [0], [0], [0, 0, 1, 0], [], []>} : vector<128x32xf32>, vector<128x32xf32>, vector<128x128xf32> -> vector<128x128xf32>
    %cst_30 = arith.constant 1.000000e+00 : f32
    %49 = vector.broadcast %cst_30 : f32 to vector<128x128xf32>
    %50 = arith.mulf %48, %49 : vector<128x128xf32>
    %51 = arith.cmpf ogt, %50, %40 : vector<128x128xf32>
    %cst_31 = arith.constant 3.000000e+00 : f32
    %52 = vector.broadcast %cst_31 : f32 to vector<128x128xf32>
    %53 = arith.select %51, %52, %42 : vector<128x128xi1>, vector<128x128xf32>
    %54 = math.exp %50 : vector<128x128xf32>
    %c3 = arith.constant 3 : index
    %c0_32 = arith.constant 0 : index
    %c0_33 = arith.constant 0 : index
    %55 = vector.load %arg9[%c3, %c0_32, %c0_33] : memref<4x128x128xf32, #tpu.memory_space<vmem>>, vector<1x128x128xf32>
    %56 = vector.shape_cast %55 : vector<1x128x128xf32> to vector<128x128xf32>
    %57 = vector.shape_cast %54 : vector<128x128xf32> to vector<1x128x128xf32>
    tpu.vector_store %arg9[%c3, %c0_32, %c0_33], %57 {strides = array<i32>} : memref<4x128x128xf32, #tpu.memory_space<vmem>>, vector<1x128x128xf32>,
    %c0_34 = arith.constant 0 : index
    %c0_35 = arith.constant 0 : index
    %c0_36 = arith.constant 0 : index
    %58 = vector.load %arg9[%c0_34, %c0_35, %c0_36] : memref<4x128x128xf32, #tpu.memory_space<vmem>>, vector<1x128x128xf32>
    %59 = vector.shape_cast %58 : vector<1x128x128xf32> to vector<128x128xf32>
    %c1_37 = arith.constant 1 : index
    %c0_38 = arith.constant 0 : index
    %c0_39 = arith.constant 0 : index
    %60 = vector.load %arg9[%c1_37, %c0_38, %c0_39] : memref<4x128x128xf32, #tpu.memory_space<vmem>>, vector<1x128x128xf32>
    %61 = vector.shape_cast %60 : vector<1x128x128xf32> to vector<128x128xf32>
    %62 = arith.addf %59, %61 : vector<128x128xf32>
    %c2_40 = arith.constant 2 : index
    %c0_41 = arith.constant 0 : index
    %c0_42 = arith.constant 0 : index
    %63 = vector.load %arg9[%c2_40, %c0_41, %c0_42] : memref<4x128x128xf32, #tpu.memory_space<vmem>>, vector<1x128x128xf32>
    %64 = vector.shape_cast %63 : vector<1x128x128xf32> to vector<128x128xf32>
    %65 = arith.addf %62, %64 : vector<128x128xf32>
    %c3_43 = arith.constant 3 : index
    %c0_44 = arith.constant 0 : index
    %c0_45 = arith.constant 0 : index
    %66 = vector.load %arg9[%c3_43, %c0_44, %c0_45] : memref<4x128x128xf32, #tpu.memory_space<vmem>>, vector<1x128x128xf32>
    %67 = vector.shape_cast %66 : vector<1x128x128xf32> to vector<128x128xf32>
    %68 = arith.addf %65, %67 : vector<128x128xf32>
    %69 = tpu.reciprocal %68 {approx = true} : vector<128x128xf32> -> vector<128x128xf32>
    %cst_46 = arith.constant 1.000000e+00 : f32
    %70 = vector.broadcast %cst_46 : f32 to vector<128x128xf32>
    %71 = arith.addf %53, %70 : vector<128x128xf32>
    %72 = arith.mulf %71, %13 : vector<128x128xf32>
    %cst_47 = arith.constant 1.000000e+00 : f32
    %73 = vector.broadcast %cst_47 : f32 to vector<1x128xf32>
    %c0_48 = arith.constant 0 : index
    %c0_49 = arith.constant 0 : index
    %c0_50 = arith.constant 0 : index
    %74 = vector.load %arg9[%c0_48, %c0_49, %c0_50] : memref<4x128x128xf32, #tpu.memory_space<vmem>>, vector<1x128x128xf32>
    %75 = vector.shape_cast %74 : vector<1x128x128xf32> to vector<128x128xf32>
    %cst_51 = arith.constant 1.000000e+00 : f32
    %76 = vector.broadcast %cst_51 : f32 to vector<128x128xf32>
    %77 = arith.cmpf oeq, %72, %76 : vector<128x128xf32>
    %78 = arith.extui %77 : vector<128x128xi1> to vector<128x128xi32>
    %79 = arith.sitofp %78 : vector<128x128xi32> to vector<128x128xf32>
    %80 = arith.mulf %75, %69 : vector<128x128xf32>
    %81 = arith.mulf %79, %80 : vector<128x128xf32>
    %cst_52 = arith.constant dense<0.000000e+00> : vector<1x128xf32>
    %82 = tpu.matmul %73, %81, %cst_52 {dimension_numbers = #tpu.dot_dimension_numbers<[1], [1], [0], [0], [0, 0, 1, 0], [], []>} : vector<1x128xf32>, vector<128x128xf32>, vector<1x128xf32> -> vector<1x128xf32>
    %cst_53 = arith.constant 0.000000e+00 : f32
    %83 = vector.broadcast %cst_53 : f32 to vector<1x128xf32>
    %84 = arith.cmpf oeq, %82, %83 : vector<1x128xf32>
    %cst_54 = arith.constant 1.000000e+00 : f32
    %85 = vector.broadcast %cst_54 : f32 to vector<1x128xf32>
    %86 = arith.select %84, %85, %82 : vector<1x128xi1>, vector<1x128xf32>
    %87 = tpu.reciprocal %86 {approx = true} : vector<1x128xf32> -> vector<1x128xf32>
    %88 = vector.broadcast %87 : vector<1x128xf32> to vector<128x128xf32>
    %89 = arith.mulf %81, %88 : vector<128x128xf32>
    %90 = vector.extract_strided_slice %12 {offsets = [0, 0], sizes = [128, 32], strides = [1, 1]} : vector<128x128xf32> to vector<128x32xf32>
    %cst_55 = arith.constant 3.000000e-01 : f32
    %91 = vector.broadcast %cst_55 : f32 to vector<128x32xf32>
    %92 = arith.mulf %91, %90 : vector<128x32xf32>
    %cst_56 = arith.constant dense<0.000000e+00> : vector<128x32xf32>
    %93 = tpu.matmul %89, %90, %cst_56 {dimension_numbers = #tpu.dot_dimension_numbers<[1], [0], [0], [1], [0, 0, 1, 1], [], []>} : vector<128x128xf32>, vector<128x32xf32>, vector<128x32xf32> -> vector<128x32xf32>
    %cst_57 = arith.constant 0.699999988 : f32
    %94 = vector.broadcast %cst_57 : f32 to vector<128x32xf32>
    %95 = arith.mulf %94, %93 : vector<128x32xf32>
    %96 = arith.addf %92, %95 : vector<128x32xf32>
    %c0_58 = arith.constant 0 : index
    %c0_59 = arith.constant 0 : index
    %97 = vector.load %arg7[%c0_58, %c0_59] : memref<128x128xf32, #tpu.memory_space<vmem>>, vector<128x32xf32>
    tpu.vector_store %arg7[%c0_58, %c0_59], %96 {strides = array<i32>} : memref<128x128xf32, #tpu.memory_space<vmem>>, vector<128x32xf32>,
    %cst_60 = arith.constant dense<0.000000e+00> : vector<128x128xf32>
    %98 = tpu.matmul %96, %96, %cst_60 {dimension_numbers = #tpu.dot_dimension_numbers<[1], [1], [0], [0], [0, 0, 1, 0], [], []>} : vector<128x32xf32>, vector<128x32xf32>, vector<128x128xf32> -> vector<128x128xf32>
    %99 = arith.mulf %98, %75 : vector<128x128xf32>
    %c0_61 = arith.constant 0 : index
    %c0_62 = arith.constant 0 : index
    %100 = vector.load %arg8[%c0_61, %c0_62] : memref<128x128xf32, #tpu.memory_space<vmem>>, vector<128x128xf32>
    tpu.vector_store %arg8[%c0_61, %c0_62], %99 {strides = array<i32>} : memref<128x128xf32, #tpu.memory_space<vmem>>, vector<128x128xf32>,
    %c1_63 = arith.constant 1 : index
    %c0_64 = arith.constant 0 : index
    %c0_65 = arith.constant 0 : index
    %101 = vector.load %arg9[%c1_63, %c0_64, %c0_65] : memref<4x128x128xf32, #tpu.memory_space<vmem>>, vector<1x128x128xf32>
    %102 = vector.shape_cast %101 : vector<1x128x128xf32> to vector<128x128xf32>
    %cst_66 = arith.constant 2.000000e+00 : f32
    %103 = vector.broadcast %cst_66 : f32 to vector<128x128xf32>
    %104 = arith.cmpf oeq, %72, %103 : vector<128x128xf32>
    %105 = arith.extui %104 : vector<128x128xi1> to vector<128x128xi32>
    %106 = arith.sitofp %105 : vector<128x128xi32> to vector<128x128xf32>
    %107 = arith.mulf %102, %69 : vector<128x128xf32>
    %108 = arith.mulf %106, %107 : vector<128x128xf32>
    %cst_67 = arith.constant dense<0.000000e+00> : vector<1x128xf32>
    %109 = tpu.matmul %73, %108, %cst_67 {dimension_numbers = #tpu.dot_dimension_numbers<[1], [1], [0], [0], [0, 0, 1, 0], [], []>} : vector<1x128xf32>, vector<128x128xf32>, vector<1x128xf32> -> vector<1x128xf32>
    %cst_68 = arith.constant 0.000000e+00 : f32
    %110 = vector.broadcast %cst_68 : f32 to vector<1x128xf32>
    %111 = arith.cmpf oeq, %109, %110 : vector<1x128xf32>
    %cst_69 = arith.constant 1.000000e+00 : f32
    %112 = vector.broadcast %cst_69 : f32 to vector<1x128xf32>
    %113 = arith.select %111, %112, %109 : vector<1x128xi1>, vector<1x128xf32>
    %114 = tpu.reciprocal %113 {approx = true} : vector<1x128xf32> -> vector<1x128xf32>
    %115 = vector.broadcast %114 : vector<1x128xf32> to vector<128x128xf32>
    %116 = arith.mulf %108, %115 : vector<128x128xf32>
    %117 = vector.extract_strided_slice %12 {offsets = [0, 32], sizes = [128, 32], strides = [1, 1]} : vector<128x128xf32> to vector<128x32xf32>
    %cst_70 = arith.constant 3.000000e-01 : f32
    %118 = vector.broadcast %cst_70 : f32 to vector<128x32xf32>
    %119 = arith.mulf %118, %117 : vector<128x32xf32>
    %cst_71 = arith.constant dense<0.000000e+00> : vector<128x32xf32>
    %120 = tpu.matmul %116, %117, %cst_71 {dimension_numbers = #tpu.dot_dimension_numbers<[1], [0], [0], [1], [0, 0, 1, 1], [], []>} : vector<128x128xf32>, vector<128x32xf32>, vector<128x32xf32> -> vector<128x32xf32>
    %cst_72 = arith.constant 0.699999988 : f32
    %121 = vector.broadcast %cst_72 : f32 to vector<128x32xf32>
    %122 = arith.mulf %121, %120 : vector<128x32xf32>
    %123 = arith.addf %119, %122 : vector<128x32xf32>
    %c0_73 = arith.constant 0 : index
    %c32 = arith.constant 32 : index
    %124 = vector.load %arg7[%c0_73, %c32] : memref<128x128xf32, #tpu.memory_space<vmem>>, vector<128x32xf32>
    tpu.vector_store %arg7[%c0_73, %c32], %123 {strides = array<i32>} : memref<128x128xf32, #tpu.memory_space<vmem>>, vector<128x32xf32>,
    %cst_74 = arith.constant dense<0.000000e+00> : vector<128x128xf32>
    %125 = tpu.matmul %123, %123, %cst_74 {dimension_numbers = #tpu.dot_dimension_numbers<[1], [1], [0], [0], [0, 0, 1, 0], [], []>} : vector<128x32xf32>, vector<128x32xf32>, vector<128x128xf32> -> vector<128x128xf32>
    %126 = arith.mulf %125, %102 : vector<128x128xf32>
    %c0_75 = arith.constant 0 : index
    %c0_76 = arith.constant 0 : index
    %127 = vector.load %arg8[%c0_75, %c0_76] : memref<128x128xf32, #tpu.memory_space<vmem>>, vector<128x128xf32>
    %128 = arith.addf %127, %126 : vector<128x128xf32>
    %c0_77 = arith.constant 0 : index
    %c0_78 = arith.constant 0 : index
    %129 = vector.load %arg8[%c0_77, %c0_78] : memref<128x128xf32, #tpu.memory_space<vmem>>, vector<128x128xf32>
    tpu.vector_store %arg8[%c0_77, %c0_78], %128 {strides = array<i32>} : memref<128x128xf32, #tpu.memory_space<vmem>>, vector<128x128xf32>,
    %c2_79 = arith.constant 2 : index
    %c0_80 = arith.constant 0 : index
    %c0_81 = arith.constant 0 : index
    %130 = vector.load %arg9[%c2_79, %c0_80, %c0_81] : memref<4x128x128xf32, #tpu.memory_space<vmem>>, vector<1x128x128xf32>
    %131 = vector.shape_cast %130 : vector<1x128x128xf32> to vector<128x128xf32>
    %cst_82 = arith.constant 3.000000e+00 : f32
    %132 = vector.broadcast %cst_82 : f32 to vector<128x128xf32>
    %133 = arith.cmpf oeq, %72, %132 : vector<128x128xf32>
    %134 = arith.extui %133 : vector<128x128xi1> to vector<128x128xi32>
    %135 = arith.sitofp %134 : vector<128x128xi32> to vector<128x128xf32>
    %136 = arith.mulf %131, %69 : vector<128x128xf32>
    %137 = arith.mulf %135, %136 : vector<128x128xf32>
    %cst_83 = arith.constant dense<0.000000e+00> : vector<1x128xf32>
    %138 = tpu.matmul %73, %137, %cst_83 {dimension_numbers = #tpu.dot_dimension_numbers<[1], [1], [0], [0], [0, 0, 1, 0], [], []>} : vector<1x128xf32>, vector<128x128xf32>, vector<1x128xf32> -> vector<1x128xf32>
    %cst_84 = arith.constant 0.000000e+00 : f32
    %139 = vector.broadcast %cst_84 : f32 to vector<1x128xf32>
    %140 = arith.cmpf oeq, %138, %139 : vector<1x128xf32>
    %cst_85 = arith.constant 1.000000e+00 : f32
    %141 = vector.broadcast %cst_85 : f32 to vector<1x128xf32>
    %142 = arith.select %140, %141, %138 : vector<1x128xi1>, vector<1x128xf32>
    %143 = tpu.reciprocal %142 {approx = true} : vector<1x128xf32> -> vector<1x128xf32>
    %144 = vector.broadcast %143 : vector<1x128xf32> to vector<128x128xf32>
    %145 = arith.mulf %137, %144 : vector<128x128xf32>
    %146 = vector.extract_strided_slice %12 {offsets = [0, 64], sizes = [128, 32], strides = [1, 1]} : vector<128x128xf32> to vector<128x32xf32>
    %cst_86 = arith.constant 3.000000e-01 : f32
    %147 = vector.broadcast %cst_86 : f32 to vector<128x32xf32>
    %148 = arith.mulf %147, %146 : vector<128x32xf32>
    %cst_87 = arith.constant dense<0.000000e+00> : vector<128x32xf32>
    %149 = tpu.matmul %145, %146, %cst_87 {dimension_numbers = #tpu.dot_dimension_numbers<[1], [0], [0], [1], [0, 0, 1, 1], [], []>} : vector<128x128xf32>, vector<128x32xf32>, vector<128x32xf32> -> vector<128x32xf32>
    %cst_88 = arith.constant 0.699999988 : f32
    %150 = vector.broadcast %cst_88 : f32 to vector<128x32xf32>
    %151 = arith.mulf %150, %149 : vector<128x32xf32>
    %152 = arith.addf %148, %151 : vector<128x32xf32>
    %c0_89 = arith.constant 0 : index
    %c64 = arith.constant 64 : index
    %153 = vector.load %arg7[%c0_89, %c64] : memref<128x128xf32, #tpu.memory_space<vmem>>, vector<128x32xf32>
    tpu.vector_store %arg7[%c0_89, %c64], %152 {strides = array<i32>} : memref<128x128xf32, #tpu.memory_space<vmem>>, vector<128x32xf32>,
    %cst_90 = arith.constant dense<0.000000e+00> : vector<128x128xf32>
    %154 = tpu.matmul %152, %152, %cst_90 {dimension_numbers = #tpu.dot_dimension_numbers<[1], [1], [0], [0], [0, 0, 1, 0], [], []>} : vector<128x32xf32>, vector<128x32xf32>, vector<128x128xf32> -> vector<128x128xf32>
    %155 = arith.mulf %154, %131 : vector<128x128xf32>
    %c0_91 = arith.constant 0 : index
    %c0_92 = arith.constant 0 : index
    %156 = vector.load %arg8[%c0_91, %c0_92] : memref<128x128xf32, #tpu.memory_space<vmem>>, vector<128x128xf32>
    %157 = arith.addf %156, %155 : vector<128x128xf32>
    %c0_93 = arith.constant 0 : index
    %c0_94 = arith.constant 0 : index
    %158 = vector.load %arg8[%c0_93, %c0_94] : memref<128x128xf32, #tpu.memory_space<vmem>>, vector<128x128xf32>
    tpu.vector_store %arg8[%c0_93, %c0_94], %157 {strides = array<i32>} : memref<128x128xf32, #tpu.memory_space<vmem>>, vector<128x128xf32>,
    %c3_95 = arith.constant 3 : index
    %c0_96 = arith.constant 0 : index
    %c0_97 = arith.constant 0 : index
    %159 = vector.load %arg9[%c3_95, %c0_96, %c0_97] : memref<4x128x128xf32, #tpu.memory_space<vmem>>, vector<1x128x128xf32>
    %160 = vector.shape_cast %159 : vector<1x128x128xf32> to vector<128x128xf32>
    %cst_98 = arith.constant 4.000000e+00 : f32
    %161 = vector.broadcast %cst_98 : f32 to vector<128x128xf32>
    %162 = arith.cmpf oeq, %72, %161 : vector<128x128xf32>
    %163 = arith.extui %162 : vector<128x128xi1> to vector<128x128xi32>
    %164 = arith.sitofp %163 : vector<128x128xi32> to vector<128x128xf32>
    %165 = arith.mulf %160, %69 : vector<128x128xf32>
    %166 = arith.mulf %164, %165 : vector<128x128xf32>
    %cst_99 = arith.constant dense<0.000000e+00> : vector<1x128xf32>
    %167 = tpu.matmul %73, %166, %cst_99 {dimension_numbers = #tpu.dot_dimension_numbers<[1], [1], [0], [0], [0, 0, 1, 0], [], []>} : vector<1x128xf32>, vector<128x128xf32>, vector<1x128xf32> -> vector<1x128xf32>
    %cst_100 = arith.constant 0.000000e+00 : f32
    %168 = vector.broadcast %cst_100 : f32 to vector<1x128xf32>
    %169 = arith.cmpf oeq, %167, %168 : vector<1x128xf32>
    %cst_101 = arith.constant 1.000000e+00 : f32
    %170 = vector.broadcast %cst_101 : f32 to vector<1x128xf32>
    %171 = arith.select %169, %170, %167 : vector<1x128xi1>, vector<1x128xf32>
    %172 = tpu.reciprocal %171 {approx = true} : vector<1x128xf32> -> vector<1x128xf32>
    %173 = vector.broadcast %172 : vector<1x128xf32> to vector<128x128xf32>
    %174 = arith.mulf %166, %173 : vector<128x128xf32>
    %175 = vector.extract_strided_slice %12 {offsets = [0, 96], sizes = [128, 32], strides = [1, 1]} : vector<128x128xf32> to vector<128x32xf32>
    %cst_102 = arith.constant 3.000000e-01 : f32
    %176 = vector.broadcast %cst_102 : f32 to vector<128x32xf32>
    %177 = arith.mulf %176, %175 : vector<128x32xf32>
    %cst_103 = arith.constant dense<0.000000e+00> : vector<128x32xf32>
    %178 = tpu.matmul %174, %175, %cst_103 {dimension_numbers = #tpu.dot_dimension_numbers<[1], [0], [0], [1], [0, 0, 1, 1], [], []>} : vector<128x128xf32>, vector<128x32xf32>, vector<128x32xf32> -> vector<128x32xf32>
    %cst_104 = arith.constant 0.699999988 : f32
    %179 = vector.broadcast %cst_104 : f32 to vector<128x32xf32>
    %180 = arith.mulf %179, %178 : vector<128x32xf32>
    %181 = arith.addf %177, %180 : vector<128x32xf32>
    %c0_105 = arith.constant 0 : index
    %c96 = arith.constant 96 : index
    %182 = vector.load %arg7[%c0_105, %c96] : memref<128x128xf32, #tpu.memory_space<vmem>>, vector<128x32xf32>
    tpu.vector_store %arg7[%c0_105, %c96], %181 {strides = array<i32>} : memref<128x128xf32, #tpu.memory_space<vmem>>, vector<128x32xf32>,
    %cst_106 = arith.constant dense<0.000000e+00> : vector<128x128xf32>
    %183 = tpu.matmul %181, %181, %cst_106 {dimension_numbers = #tpu.dot_dimension_numbers<[1], [1], [0], [0], [0, 0, 1, 0], [], []>} : vector<128x32xf32>, vector<128x32xf32>, vector<128x128xf32> -> vector<128x128xf32>
    %184 = arith.mulf %183, %160 : vector<128x128xf32>
    %c0_107 = arith.constant 0 : index
    %c0_108 = arith.constant 0 : index
    %185 = vector.load %arg8[%c0_107, %c0_108] : memref<128x128xf32, #tpu.memory_space<vmem>>, vector<128x128xf32>
    %186 = arith.addf %185, %184 : vector<128x128xf32>
    %c0_109 = arith.constant 0 : index
    %c0_110 = arith.constant 0 : index
    %187 = vector.load %arg8[%c0_109, %c0_110] : memref<128x128xf32, #tpu.memory_space<vmem>>, vector<128x128xf32>
    tpu.vector_store %arg8[%c0_109, %c0_110], %186 {strides = array<i32>} : memref<128x128xf32, #tpu.memory_space<vmem>>, vector<128x128xf32>,
    %c0_111 = arith.constant 0 : index
    %c0_112 = arith.constant 0 : index
    %188 = vector.load %arg8[%c0_111, %c0_112] : memref<128x128xf32, #tpu.memory_space<vmem>>, vector<128x128xf32>
    %cst_113 = arith.constant 5.000000e-01 : f32
    %189 = vector.broadcast %cst_113 : f32 to vector<128x128xf32>
    %190 = arith.mulf %189, %188 : vector<128x128xf32>
    %191 = math.tanh %190 : vector<128x128xf32>
    %cst_114 = arith.constant 1.000000e+00 : f32
    %192 = vector.broadcast %cst_114 : f32 to vector<128x128xf32>
    %193 = arith.addf %191, %192 : vector<128x128xf32>
    %cst_115 = arith.constant 5.000000e-01 : f32
    %194 = vector.broadcast %cst_115 : f32 to vector<128x128xf32>
    %195 = arith.mulf %194, %193 : vector<128x128xf32>
    %c0_116 = arith.constant 0 : index
    %c0_117 = arith.constant 0 : index
    %196 = vector.load %arg8[%c0_116, %c0_117] : memref<128x128xf32, #tpu.memory_space<vmem>>, vector<128x128xf32>
    tpu.vector_store %arg8[%c0_116, %c0_117], %195 {strides = array<i32>} : memref<128x128xf32, #tpu.memory_space<vmem>>, vector<128x128xf32>,
    return
  }
  func.func @transform_0(%arg0: i32) -> (i32, i32) {
    %c0_i32 = arith.constant 0 : i32
    %c0_i32_0 = arith.constant 0 : i32
    %c0_i32_1 = arith.constant 0 : i32
    return %c0_i32, %c0_i32_0 : i32, i32
  }
  func.func @transform_1(%arg0: i32) -> (i32, i32) {
    %c0_i32 = arith.constant 0 : i32
    %c0_i32_0 = arith.constant 0 : i32
    %c0_i32_1 = arith.constant 0 : i32
    return %c0_i32, %c0_i32_0 : i32, i32
  }
  func.func @transform_2(%arg0: i32) -> (i32, i32) {
    %c0_i32 = arith.constant 0 : i32
    %c0_i32_0 = arith.constant 0 : i32
    %c0_i32_1 = arith.constant 0 : i32
    return %c0_i32, %c0_i32_0 : i32, i32
  }
  func.func @transform_3(%arg0: i32) -> (i32, i32) {
    %c0_i32 = arith.constant 0 : i32
    %c0_i32_0 = arith.constant 0 : i32
    %c0_i32_1 = arith.constant 0 : i32
    return %c0_i32, %c0_i32_0 : i32, i32
  }
  func.func @transform_4(%arg0: i32) -> (i32, i32) {
    %c0_i32 = arith.constant 0 : i32
    %c0_i32_0 = arith.constant 0 : i32
    %c0_i32_1 = arith.constant 0 : i32
    return %c0_i32, %c0_i32_0 : i32, i32
  }
  func.func @transform_5(%arg0: i32) -> (i32, i32) {
    %c0_i32 = arith.constant 0 : i32
    %c0_i32_0 = arith.constant 0 : i32
    %c0_i32_1 = arith.constant 0 : i32
    return %c0_i32, %c0_i32_0 : i32, i32
  }
  func.func @transform_6(%arg0: i32) -> (i32, i32) {
    %c0_i32 = arith.constant 0 : i32
    %c0_i32_0 = arith.constant 0 : i32
    %c0_i32_1 = arith.constant 0 : i32
    return %c0_i32, %c0_i32_0 : i32, i32
  }
  func.func @transform_7(%arg0: i32) -> (i32, i32) {
    %c0_i32 = arith.constant 0 : i32
    %c0_i32_0 = arith.constant 0 : i32
    %c0_i32_1 = arith.constant 0 : i32
    return %c0_i32, %c0_i32_0 : i32, i32
  }
}

</mosaic_0001>

<llo_original>
// kernel: disentangle_forward.1
$region0: #{disentangle_forward.1}
  #allocation0 [shape = 'u32[]', space=smem, size = 0x4, offset = 0x4, fixed_abs, tag = 'smem constant byte address 0x4 - core index']
  #allocation1 [shape = 'u32[144,128]{1,0:T(1,128)}', space=vmem, size = 0x12000, scoped, tag = 'internal scratch']
  #allocation2 [shape = 'f32[4,128,128]{2,1,0:T(8,128)}', space=vmem, size = 0x40000, scoped, tag = 'scratch operand']
  %s0 = inlined_call_operand.vmem [shape: f32[128,32], index: 0, kind: input, shape index: {}]
  %s1 = inlined_call_operand.vmem [shape: f32[32,64], index: 1, kind: input, shape index: {}]
  %s2 = inlined_call_operand.vmem [shape: f32[1,64], index: 2, kind: input, shape index: {}]
  %s3 = inlined_call_operand.vmem [shape: f32[64,128], index: 3, kind: input, shape index: {}]
  %s4 = inlined_call_operand.vmem [shape: f32[1,128], index: 4, kind: input, shape index: {}]
  %s5 = inlined_call_operand.vmem [shape: f32[128,128], index: 5, kind: input, shape index: {}]
  %s6 = inlined_call_operand.hbm [shape: f32[128,128], index: 6, kind: output, shape index: {0}]
  %s7 = inlined_call_operand.hbm [shape: f32[128,128], index: 7, kind: output, shape index: {1}]
  %8 = xla_tuple %s6, %s7
  %s9 = sld [smem:[#allocation0]]
  $region42: #{disentangle_forward.1} parent=0
    _
  %s11 = ssub.s32 1, %s9
  %s12 = scalar_select 0, %s11, %s9
  $region1: #{disentangle_forward.1} parent=0
    #allocation3 [shape = 'u8[65536]{0}', space=vmem, size = 0x10000, scoped, tag = 'output window, operand 0, single buffered']
    #allocation4 [shape = 's32[1]{0}', space=sflag, size = 0x4, scoped, tag = 'scoped memory for disentangle_forward.1']
    #allocation5 [shape = 'u8[65536]{0}', space=vmem, size = 0x10000, scoped, tag = 'output window, operand 1, single buffered']
    #allocation6 [shape = 's32[1]{0}', space=sflag, size = 0x4, scoped, tag = 'scoped memory for disentangle_forward.1']
    %13 = vsyncpa [#allocation4], 0
    %14 = vsyncpa [#allocation6], 0
    // Predicated region
    $region2: #{disentangle_forward.1} parent=1 // pred_check
      _
    $region3: #{disentangle_forward.1} parent=1 // pred_check_branch
      %16 = sbr.rel (0) target = $region5
    $region4: #{disentangle_forward.1} parent=1 // pred_region
      _
    $region5: #{disentangle_forward.1} parent=1 // pred_fallthru
      _
    // Predicated region
    $region6: #{disentangle_forward.1} parent=1 // pred_check
      _
    $region7: #{disentangle_forward.1} parent=1 // pred_check_branch
      %18 = sbr.rel (0) target = $region9
    $region8: #{disentangle_forward.1} parent=1 // pred_region
      _
    $region9: #{disentangle_forward.1} parent=1 // pred_fallthru
      _
    // Predicated region
    $region10: #{disentangle_forward.1} parent=1 // pred_check
      _
    $region11: #{disentangle_forward.1} parent=1 // pred_check_branch
      %20 = sbr.rel (0) target = $region13
    $region12: #{disentangle_forward.1} parent=1 // pred_region
      _
    $region13: #{disentangle_forward.1} parent=1 // pred_fallthru
      _
    // Predicated region
    $region14: #{disentangle_forward.1} parent=1 // pred_check
      _
    $region15: #{disentangle_forward.1} parent=1 // pred_check_branch
      %22 = sbr.rel (0) target = $region17
    $region16: #{disentangle_forward.1} parent=1 // pred_region
      _
    $region17: #{disentangle_forward.1} parent=1 // pred_fallthru
      _
    // Predicated region
    $region18: #{disentangle_forward.1} parent=1 // pred_check
      _
    $region19: #{disentangle_forward.1} parent=1 // pred_check_branch
      %24 = sbr.rel (0) target = $region21
    $region20: #{disentangle_forward.1} parent=1 // pred_region
      _
    $region21: #{disentangle_forward.1} parent=1 // pred_fallthru
      _
    // Predicated region
    $region22: #{disentangle_forward.1} parent=1 // pred_check
      _
    $region23: #{disentangle_forward.1} parent=1 // pred_check_branch
      %26 = sbr.rel (0) target = $region25
    $region24: #{disentangle_forward.1} parent=1 // pred_region
      _
    $region25: #{disentangle_forward.1} parent=1 // pred_fallthru
      _
    %v27 = vld [vmem:[%s0] sm:$0xff]
    %v28 = vld [vmem:[%s0 + $0x8] sm:$0xff]
    %v29 = vld [vmem:[%s0 + $0x10] sm:$0xff]
    %v30 = vld [vmem:[%s0 + $0x18] sm:$0xff]
    %v31 = vld [vmem:[%s0 + $0x20] sm:$0xff]
    %v32 = vld [vmem:[%s0 + $0x28] sm:$0xff]
    %v33 = vld [vmem:[%s0 + $0x30] sm:$0xff]
    %v34 = vld [vmem:[%s0 + $0x38] sm:$0xff]
    %v35 = vld [vmem:[%s0 + $0x40] sm:$0xff]
    %v36 = vld [vmem:[%s0 + $0x48] sm:$0xff]
    %v37 = vld [vmem:[%s0 + $0x50] sm:$0xff]
    %v38 = vld [vmem:[%s0 + $0x58] sm:$0xff]
    %v39 = vld [vmem:[%s0 + $0x60] sm:$0xff]
    %v40 = vld [vmem:[%s0 + $0x68] sm:$0xff]
    %v41 = vld [vmem:[%s0 + $0x70] sm:$0xff]
    %v42 = vld [vmem:[%s0 + $0x78] sm:$0xff]
    %v43 = vld [vmem:[%s1] sm:$0xff]
    %v44 = vld [vmem:[%s1 + $0x8] sm:$0xff]
    %v45 = vld [vmem:[%s1 + $0x10] sm:$0xff]
    %v46 = vld [vmem:[%s1 + $0x18] sm:$0xff]
    %v47 = vld [vmem:[%s2] sm:$0x1]
    %v49 = vlaneseq
    %v50 = vshrl.u32 %v49, 7
    %v51 = vsub.s32 0, %v50
    %v52 = vrot.slane %v47, %v51
    %vm54 = vcmask 261120
    %v56 = vsel %vm54, %v27, 0
    %v59 = vsel %vm54, %v28, 0
    %v62 = vsel %vm54, %v29, 0
    %v65 = vsel %vm54, %v30, 0
    %v68 = vsel %vm54, %v31, 0
    %v71 = vsel %vm54, %v32, 0
    %v74 = vsel %vm54, %v33, 0
    %v77 = vsel %vm54, %v34, 0
    %v80 = vsel %vm54, %v35, 0
    %v83 = vsel %vm54, %v36, 0
    %v86 = vsel %vm54, %v37, 0
    %v89 = vsel %vm54, %v38, 0
    %v92 = vsel %vm54, %v39, 0
    %v95 = vsel %vm54, %v40, 0
    %v98 = vsel %vm54, %v41, 0
    %v101 = vsel %vm54, %v42, 0
    %103 = vmatprep.subr.mxu0 0.0
    %104 = vmatpush1.msra.mxu0 %v43
    %105 = vmatprep.subr.mxu0 0.0
    %106 = vmatpush1.msra.mxu0 %v44
    %107 = vmatprep.subr.mxu0 0.0
    %108 = vmatpush1.msra.mxu0 %v45
    %109 = vmatprep.subr.mxu0 0.0
    %110 = vmatpush1.msra.mxu0 %v46
    %111 = vmatprep.subr.mxu0 0.0
    %112 = vmatpush1.msra.mxu0 0.0
    %113 = vmatprep.subr.mxu0 0.0
    %114 = vmatpush1.msra.mxu0 0.0
    %115 = vmatprep.subr.mxu0 0.0
    %116 = vmatpush1.msra.mxu0 0.0
    %117 = vmatprep.subr.mxu0 0.0
    %118 = vmatpush1.msra.mxu0 0.0
    %119 = vmatprep.subr.mxu0 0.0
    %120 = vmatpush1.msra.mxu0 0.0
    %121 = vmatprep.subr.mxu0 0.0
    %122 = vmatpush1.msra.mxu0 0.0
    %123 = vmatprep.subr.mxu0 0.0
    %124 = vmatpush1.msra.mxu0 0.0
    %125 = vmatprep.subr.mxu0 0.0
    %126 = vmatpush1.msra.mxu0 0.0
    %127 = vmatprep.subr.mxu0 0.0
    %128 = vmatpush1.msra.mxu0 0.0
    %129 = vmatprep.subr.mxu0 0.0
    %130 = vmatpush1.msra.mxu0 0.0
    %131 = vmatprep.subr.mxu0 0.0
    %132 = vmatpush1.msra.mxu0 0.0
    %133 = vmatprep.subr.mxu0 0.0
    %134 = vmatpush1.msra.mxu0 0.0
    %135 = vmatprep.subr.mxu0 0.0
    %136 = vmatpush1.msra.mxu0 0.0
    %137 = vmatprep.subr.mxu0 0.0
    %138 = vmatpush1.msra.mxu0 0.0
    %139 = vmatprep.subr.mxu0 0.0
    %140 = vmatpush1.msra.mxu0 0.0
    %141 = vmatprep.subr.mxu0 0.0
    %142 = vmatpush1.msra.mxu0 0.0
    %143 = vmatprep.subr.mxu0 0.0
    %144 = vmatpush1.msra.mxu0 0.0
    %145 = vmatprep.subr.mxu0 0.0
    %146 = vmatpush1.msra.mxu0 0.0
    %147 = vmatprep.subr.mxu0 0.0
    %148 = vmatpush1.msra.mxu0 0.0
    %149 = vmatprep.subr.mxu0 0.0
    %150 = vmatpush1.msra.mxu0 0.0
    %151 = vmatprep.subr.mxu0 0.0
    %152 = vmatpush1.msra.mxu0 0.0
    %153 = vmatprep.subr.mxu0 0.0
    %154 = vmatpush1.msra.mxu0 0.0
    %155 = vmatprep.subr.mxu0 0.0
    %156 = vmatpush1.msra.mxu0 0.0
    %157 = vmatprep.subr.mxu0 0.0
    %158 = vmatpush1.msra.mxu0 0.0
    %159 = vmatprep.subr.mxu0 0.0
    %160 = vmatpush1.msra.mxu0 0.0
    %161 = vmatprep.subr.mxu0 0.0
    %162 = vmatpush1.msra.mxu0 0.0
    %163 = vmatprep.subr.mxu0 0.0
    %164 = vmatpush1.msra.mxu0 0.0
    %165 = vmatprep.subr.mxu0 0.0
    %166 = vmatpush1.msra.mxu0 0.0
    %167 = vmatprep.mubr.f32.mxu0 0.0
    %168 = vmatmul.mubr.f32.gmra.mrb[0].mxu0 %v56
    %v169 = vpop.f32.mrb[0].mxu0
    %v170 = vadd.f32 %v52, %v169
    %v171 = vpop.f32.mrb[0].mxu0
    %172 = vmatprep.mubr.f32.mxu0 0.0
    %173 = vmatmul.mubr.f32.gmra.mrb[0].mxu0 %v59
    %v174 = vpop.f32.mrb[0].mxu0
    %v175 = vadd.f32 %v52, %v174
    %v176 = vpop.f32.mrb[0].mxu0
    %177 = vmatprep.mubr.f32.mxu0 0.0
    %178 = vmatmul.mubr.f32.gmra.mrb[0].mxu0 %v62
    %v179 = vpop.f32.mrb[0].mxu0
    %v180 = vadd.f32 %v52, %v179
    %v181 = vpop.f32.mrb[0].mxu0
    %182 = vmatprep.mubr.f32.mxu0 0.0
    %183 = vmatmul.mubr.f32.gmra.mrb[0].mxu0 %v65
    %v184 = vpop.f32.mrb[0].mxu0
    %v185 = vadd.f32 %v52, %v184
    %v186 = vpop.f32.mrb[0].mxu0
    %187 = vmatprep.mubr.f32.mxu0 0.0
    %188 = vmatmul.mubr.f32.gmra.mrb[0].mxu0 %v68
    %v189 = vpop.f32.mrb[0].mxu0
    %v190 = vadd.f32 %v52, %v189
    %v191 = vpop.f32.mrb[0].mxu0
    %192 = vmatprep.mubr.f32.mxu0 0.0
    %193 = vmatmul.mubr.f32.gmra.mrb[0].mxu0 %v71
    %v194 = vpop.f32.mrb[0].mxu0
    %v195 = vadd.f32 %v52, %v194
    %v196 = vpop.f32.mrb[0].mxu0
    %197 = vmatprep.mubr.f32.mxu0 0.0
    %198 = vmatmul.mubr.f32.gmra.mrb[0].mxu0 %v74
    %v199 = vpop.f32.mrb[0].mxu0
    %v200 = vadd.f32 %v52, %v199
    %v201 = vpop.f32.mrb[0].mxu0
    %202 = vmatprep.mubr.f32.mxu0 0.0
    %203 = vmatmul.mubr.f32.gmra.mrb[0].mxu0 %v77
    %v204 = vpop.f32.mrb[0].mxu0
    %v205 = vadd.f32 %v52, %v204
    %v206 = vpop.f32.mrb[0].mxu0
    %207 = vmatprep.mubr.f32.mxu0 0.0
    %208 = vmatmul.mubr.f32.gmra.mrb[0].mxu0 %v80
    %v209 = vpop.f32.mrb[0].mxu0
    %v210 = vadd.f32 %v52, %v209
    %v211 = vpop.f32.mrb[0].mxu0
    %212 = vmatprep.mubr.f32.mxu0 0.0
    %213 = vmatmul.mubr.f32.gmra.mrb[0].mxu0 %v83
    %v214 = vpop.f32.mrb[0].mxu0
    %v215 = vadd.f32 %v52, %v214
    %v216 = vpop.f32.mrb[0].mxu0
    %217 = vmatprep.mubr.f32.mxu0 0.0
    %218 = vmatmul.mubr.f32.gmra.mrb[0].mxu0 %v86
    %v219 = vpop.f32.mrb[0].mxu0
    %v220 = vadd.f32 %v52, %v219
    %v221 = vpop.f32.mrb[0].mxu0
    %222 = vmatprep.mubr.f32.mxu0 0.0
    %223 = vmatmul.mubr.f32.gmra.mrb[0].mxu0 %v89
    %v224 = vpop.f32.mrb[0].mxu0
    %v225 = vadd.f32 %v52, %v224
    %v226 = vpop.f32.mrb[0].mxu0
    %227 = vmatprep.mubr.f32.mxu0 0.0
    %228 = vmatmul.mubr.f32.gmra.mrb[0].mxu0 %v92
    %v229 = vpop.f32.mrb[0].mxu0
    %v230 = vadd.f32 %v52, %v229
    %v231 = vpop.f32.mrb[0].mxu0
    %232 = vmatprep.mubr.f32.mxu0 0.0
    %233 = vmatmul.mubr.f32.gmra.mrb[0].mxu0 %v95
    %v234 = vpop.f32.mrb[0].mxu0
    %v235 = vadd.f32 %v52, %v234
    %v236 = vpop.f32.mrb[0].mxu0
    %237 = vmatprep.mubr.f32.mxu0 0.0
    %238 = vmatmul.mubr.f32.gmra.mrb[0].mxu0 %v98
    %v239 = vpop.f32.mrb[0].mxu0
    %v240 = vadd.f32 %v52, %v239
    %v241 = vpop.f32.mrb[0].mxu0
    %242 = vmatprep.mubr.f32.mxu0 0.0
    %243 = vmatmul.mubr.f32.gmra.mrb[0].mxu0 %v101
    %v244 = vpop.f32.mrb[0].mxu0
    %v245 = vadd.f32 %v52, %v244
    %v246 = vpop.f32.mrb[0].mxu0
    %247 = vdwg.mxu0
    %v248 = vmax.f32 %v170, 0.0
    %v249 = vmax.f32 %v175, 0.0
    %v250 = vmax.f32 %v180, 0.0
    %v251 = vmax.f32 %v185, 0.0
    %v252 = vmax.f32 %v190, 0.0
    %v253 = vmax.f32 %v195, 0.0
    %v254 = vmax.f32 %v200, 0.0
    %v255 = vmax.f32 %v205, 0.0
    %v256 = vmax.f32 %v210, 0.0
    %v257 = vmax.f32 %v215, 0.0
    %v258 = vmax.f32 %v220, 0.0
    %v259 = vmax.f32 %v225, 0.0
    %v260 = vmax.f32 %v230, 0.0
    %v261 = vmax.f32 %v235, 0.0
    %v262 = vmax.f32 %v240, 0.0
    %v263 = vmax.f32 %v245, 0.0
    %v264 = vld [vmem:[%s3] sm:$0xff]
    %v265 = vld [vmem:[%s3 + $0x8] sm:$0xff]
    %v266 = vld [vmem:[%s3 + $0x10] sm:$0xff]
    %v267 = vld [vmem:[%s3 + $0x18] sm:$0xff]
    %v268 = vld [vmem:[%s3 + $0x20] sm:$0xff]
    %v269 = vld [vmem:[%s3 + $0x28] sm:$0xff]
    %v270 = vld [vmem:[%s3 + $0x30] sm:$0xff]
    %v271 = vld [vmem:[%s3 + $0x38] sm:$0xff]
    %v272 = vld [vmem:[%s4] sm:$0x1]
    %v274 = vlaneseq
    %v275 = vshrl.u32 %v274, 7
    %v276 = vsub.s32 0, %v275
    %v277 = vrot.slane %v272, %v276
    %vm279 = vcmask 523264
    %v281 = vsel %vm279, %v248, 0
    %v284 = vsel %vm279, %v249, 0
    %v287 = vsel %vm279, %v250, 0
    %v290 = vsel %vm279, %v251, 0
    %v293 = vsel %vm279, %v252, 0
    %v296 = vsel %vm279, %v253, 0
    %v299 = vsel %vm279, %v254, 0
    %v302 = vsel %vm279, %v255, 0
    %v305 = vsel %vm279, %v256, 0
    %v308 = vsel %vm279, %v257, 0
    %v311 = vsel %vm279, %v258, 0
    %v314 = vsel %vm279, %v259, 0
    %v317 = vsel %vm279, %v260, 0
    %v320 = vsel %vm279, %v261, 0
    %v323 = vsel %vm279, %v262, 0
    %v326 = vsel %vm279, %v263, 0
    %328 = vmatprep.subr.mxu0 0.0
    %329 = vmatpush1.msra.mxu0 %v264
    %330 = vmatprep.subr.mxu0 0.0
    %331 = vmatpush1.msra.mxu0 %v265
    %332 = vmatprep.subr.mxu0 0.0
    %333 = vmatpush1.msra.mxu0 %v266
    %334 = vmatprep.subr.mxu0 0.0
    %335 = vmatpush1.msra.mxu0 %v267
    %336 = vmatprep.subr.mxu0 0.0
    %337 = vmatpush1.msra.mxu0 %v268
    %338 = vmatprep.subr.mxu0 0.0
    %339 = vmatpush1.msra.mxu0 %v269
    %340 = vmatprep.subr.mxu0 0.0
    %341 = vmatpush1.msra.mxu0 %v270
    %342 = vmatprep.subr.mxu0 0.0
    %343 = vmatpush1.msra.mxu0 %v271
    %344 = vmatprep.subr.mxu0 0.0
    %345 = vmatpush1.msra.mxu0 0.0
    %346 = vmatprep.subr.mxu0 0.0
    %347 = vmatpush1.msra.mxu0 0.0
    %348 = vmatprep.subr.mxu0 0.0
    %349 = vmatpush1.msra.mxu0 0.0
    %350 = vmatprep.subr.mxu0 0.0
    %351 = vmatpush1.msra.mxu0 0.0
    %352 = vmatprep.subr.mxu0 0.0
    %353 = vmatpush1.msra.mxu0 0.0
    %354 = vmatprep.subr.mxu0 0.0
    %355 = vmatpush1.msra.mxu0 0.0
    %356 = vmatprep.subr.mxu0 0.0
    %357 = vmatpush1.msra.mxu0 0.0
    %358 = vmatprep.subr.mxu0 0.0
    %359 = vmatpush1.msra.mxu0 0.0
    %360 = vmatprep.subr.mxu0 0.0
    %361 = vmatpush1.msra.mxu0 0.0
    %362 = vmatprep.subr.mxu0 0.0
    %363 = vmatpush1.msra.mxu0 0.0
    %364 = vmatprep.subr.mxu0 0.0
    %365 = vmatpush1.msra.mxu0 0.0
    %366 = vmatprep.subr.mxu0 0.0
    %367 = vmatpush1.msra.mxu0 0.0
    %368 = vmatprep.subr.mxu0 0.0
    %369 = vmatpush1.msra.mxu0 0.0
    %370 = vmatprep.subr.mxu0 0.0
    %371 = vmatpush1.msra.mxu0 0.0
    %372 = vmatprep.subr.mxu0 0.0
    %373 = vmatpush1.msra.mxu0 0.0
    %374 = vmatprep.subr.mxu0 0.0
    %375 = vmatpush1.msra.mxu0 0.0
    %376 = vmatprep.subr.mxu0 0.0
    %377 = vmatpush1.msra.mxu0 0.0
    %378 = vmatprep.subr.mxu0 0.0
    %379 = vmatpush1.msra.mxu0 0.0
    %380 = vmatprep.subr.mxu0 0.0
    %381 = vmatpush1.msra.mxu0 0.0
    %382 = vmatprep.subr.mxu0 0.0
    %383 = vmatpush1.msra.mxu0 0.0
    %384 = vmatprep.subr.mxu0 0.0
    %385 = vmatpush1.msra.mxu0 0.0
    %386 = vmatprep.subr.mxu0 0.0
    %387 = vmatpush1.msra.mxu0 0.0
    %388 = vmatprep.subr.mxu0 0.0
    %389 = vmatpush1.msra.mxu0 0.0
    %390 = vmatprep.subr.mxu0 0.0
    %391 = vmatpush1.msra.mxu0 0.0
    %392 = vmatprep.mubr.f32.mxu0 0.0
    %393 = vmatmul.mubr.f32.gmra.mrb[0].mxu0 %v281
    %v394 = vpop.f32.mrb[0].mxu0
    %v395 = vadd.f32 %v277, %v394
    %v396 = vpop.f32.mrb[0].mxu0
    %397 = vmatprep.mubr.f32.mxu0 0.0
    %398 = vmatmul.mubr.f32.gmra.mrb[0].mxu0 %v284
    %v399 = vpop.f32.mrb[0].mxu0
    %v400 = vadd.f32 %v277, %v399
    %v401 = vpop.f32.mrb[0].mxu0
    %402 = vmatprep.mubr.f32.mxu0 0.0
    %403 = vmatmul.mubr.f32.gmra.mrb[0].mxu0 %v287
    %v404 = vpop.f32.mrb[0].mxu0
    %v405 = vadd.f32 %v277, %v404
    %v406 = vpop.f32.mrb[0].mxu0
    %407 = vmatprep.mubr.f32.mxu0 0.0
    %408 = vmatmul.mubr.f32.gmra.mrb[0].mxu0 %v290
    %v409 = vpop.f32.mrb[0].mxu0
    %v410 = vadd.f32 %v277, %v409
    %v411 = vpop.f32.mrb[0].mxu0
    %412 = vmatprep.mubr.f32.mxu0 0.0
    %413 = vmatmul.mubr.f32.gmra.mrb[0].mxu0 %v293
    %v414 = vpop.f32.mrb[0].mxu0
    %v415 = vadd.f32 %v277, %v414
    %v416 = vpop.f32.mrb[0].mxu0
    %417 = vmatprep.mubr.f32.mxu0 0.0
    %418 = vmatmul.mubr.f32.gmra.mrb[0].mxu0 %v296
    %v419 = vpop.f32.mrb[0].mxu0
    %v420 = vadd.f32 %v277, %v419
    %v421 = vpop.f32.mrb[0].mxu0
    %422 = vmatprep.mubr.f32.mxu0 0.0
    %423 = vmatmul.mubr.f32.gmra.mrb[0].mxu0 %v299
    %v424 = vpop.f32.mrb[0].mxu0
    %v425 = vadd.f32 %v277, %v424
    %v426 = vpop.f32.mrb[0].mxu0
    %427 = vmatprep.mubr.f32.mxu0 0.0
    %428 = vmatmul.mubr.f32.gmra.mrb[0].mxu0 %v302
    %v429 = vpop.f32.mrb[0].mxu0
    %v430 = vadd.f32 %v277, %v429
    %v431 = vpop.f32.mrb[0].mxu0
    %432 = vmatprep.mubr.f32.mxu0 0.0
    %433 = vmatmul.mubr.f32.gmra.mrb[0].mxu0 %v305
    %v434 = vpop.f32.mrb[0].mxu0
    %v435 = vadd.f32 %v277, %v434
    %v436 = vpop.f32.mrb[0].mxu0
    %437 = vmatprep.mubr.f32.mxu0 0.0
    %438 = vmatmul.mubr.f32.gmra.mrb[0].mxu0 %v308
    %v439 = vpop.f32.mrb[0].mxu0
    %v440 = vadd.f32 %v277, %v439
    %v441 = vpop.f32.mrb[0].mxu0
    %442 = vmatprep.mubr.f32.mxu0 0.0
    %443 = vmatmul.mubr.f32.gmra.mrb[0].mxu0 %v311
    %v444 = vpop.f32.mrb[0].mxu0
    %v445 = vadd.f32 %v277, %v444
    %v446 = vpop.f32.mrb[0].mxu0
    %447 = vmatprep.mubr.f32.mxu0 0.0
    %448 = vmatmul.mubr.f32.gmra.mrb[0].mxu0 %v314
    %v449 = vpop.f32.mrb[0].mxu0
    %v450 = vadd.f32 %v277, %v449
    %v451 = vpop.f32.mrb[0].mxu0
    %452 = vmatprep.mubr.f32.mxu0 0.0
    %453 = vmatmul.mubr.f32.gmra.mrb[0].mxu0 %v317
    %v454 = vpop.f32.mrb[0].mxu0
    %v455 = vadd.f32 %v277, %v454
    %v456 = vpop.f32.mrb[0].mxu0
    %457 = vmatprep.mubr.f32.mxu0 0.0
    %458 = vmatmul.mubr.f32.gmra.mrb[0].mxu0 %v320
    %v459 = vpop.f32.mrb[0].mxu0
    %v460 = vadd.f32 %v277, %v459
    %v461 = vpop.f32.mrb[0].mxu0
    %462 = vmatprep.mubr.f32.mxu0 0.0
    %463 = vmatmul.mubr.f32.gmra.mrb[0].mxu0 %v323
    %v464 = vpop.f32.mrb[0].mxu0
    %v465 = vadd.f32 %v277, %v464
    %v466 = vpop.f32.mrb[0].mxu0
    %467 = vmatprep.mubr.f32.mxu0 0.0
    %468 = vmatmul.mubr.f32.gmra.mrb[0].mxu0 %v326
    %v469 = vpop.f32.mrb[0].mxu0
    %v470 = vadd.f32 %v277, %v469
    %v471 = vpop.f32.mrb[0].mxu0
    %472 = vdwg.mxu0
    %v473 = vld [vmem:[%s5] sm:$0xff]
    %v474 = vld [vmem:[%s5 + $0x8] sm:$0xff]
    %v475 = vld [vmem:[%s5 + $0x10] sm:$0xff]
    %v476 = vld [vmem:[%s5 + $0x18] sm:$0xff]
    %v477 = vld [vmem:[%s5 + $0x20] sm:$0xff]
    %v478 = vld [vmem:[%s5 + $0x28] sm:$0xff]
    %v479 = vld [vmem:[%s5 + $0x30] sm:$0xff]
    %v480 = vld [vmem:[%s5 + $0x38] sm:$0xff]
    %v481 = vld [vmem:[%s5 + $0x40] sm:$0xff]
    %v482 = vld [vmem:[%s5 + $0x48] sm:$0xff]
    %v483 = vld [vmem:[%s5 + $0x50] sm:$0xff]
    %v484 = vld [vmem:[%s5 + $0x58] sm:$0xff]
    %v485 = vld [vmem:[%s5 + $0x60] sm:$0xff]
    %v486 = vld [vmem:[%s5 + $0x68] sm:$0xff]
    %v487 = vld [vmem:[%s5 + $0x70] sm:$0xff]
    %v488 = vld [vmem:[%s5 + $0x78] sm:$0xff]
    %v490 = vsel %vm54, %v395, 0
    %v493 = vsel %vm54, %v400, 0
    %v496 = vsel %vm54, %v405, 0
    %v499 = vsel %vm54, %v410, 0
    %v502 = vsel %vm54, %v415, 0
    %v505 = vsel %vm54, %v420, 0
    %v508 = vsel %vm54, %v425, 0
    %v511 = vsel %vm54, %v430, 0
    %v514 = vsel %vm54, %v435, 0
    %v517 = vsel %vm54, %v440, 0
    %v520 = vsel %vm54, %v445, 0
    %v523 = vsel %vm54, %v450, 0
    %v526 = vsel %vm54, %v455, 0
    %v529 = vsel %vm54, %v460, 0
    %v532 = vsel %vm54, %v465, 0
    %v535 = vsel %vm54, %v470, 0
    %537 = vmatprep.subr.mxu0 0.0
    %538 = vmatpush1.xpose.msra.mxu0 %v490
    %539 = vmatprep.subr.mxu0 0.0
    %540 = vmatpush1.xpose.msra.mxu0 %v493
    %541 = vmatprep.subr.mxu0 0.0
    %542 = vmatpush1.xpose.msra.mxu0 %v496
    %543 = vmatprep.subr.mxu0 0.0
    %544 = vmatpush1.xpose.msra.mxu0 %v499
    %545 = vmatprep.subr.mxu0 0.0
    %546 = vmatpush1.xpose.msra.mxu0 %v502
    %547 = vmatprep.subr.mxu0 0.0
    %548 = vmatpush1.xpose.msra.mxu0 %v505
    %549 = vmatprep.subr.mxu0 0.0
    %550 = vmatpush1.xpose.msra.mxu0 %v508
    %551 = vmatprep.subr.mxu0 0.0
    %552 = vmatpush1.xpose.msra.mxu0 %v511
    %553 = vmatprep.subr.mxu0 0.0
    %554 = vmatpush1.xpose.msra.mxu0 %v514
    %555 = vmatprep.subr.mxu0 0.0
    %556 = vmatpush1.xpose.msra.mxu0 %v517
    %557 = vmatprep.subr.mxu0 0.0
    %558 = vmatpush1.xpose.msra.mxu0 %v520
    %559 = vmatprep.subr.mxu0 0.0
    %560 = vmatpush1.xpose.msra.mxu0 %v523
    %561 = vmatprep.subr.mxu0 0.0
    %562 = vmatpush1.xpose.msra.mxu0 %v526
    %563 = vmatprep.subr.mxu0 0.0
    %564 = vmatpush1.xpose.msra.mxu0 %v529
    %565 = vmatprep.subr.mxu0 0.0
    %566 = vmatpush1.xpose.msra.mxu0 %v532
    %567 = vmatprep.subr.mxu0 0.0
    %568 = vmatpush1.xpose.msra.mxu0 %v535
    %569 = vmatprep.subr.mxu0 0.0
    %570 = vmatpush1.xpose.msra.mxu0 0.0
    %571 = vmatprep.subr.mxu0 0.0
    %572 = vmatpush1.xpose.msra.mxu0 0.0
    %573 = vmatprep.subr.mxu0 0.0
    %574 = vmatpush1.xpose.msra.mxu0 0.0
    %575 = vmatprep.subr.mxu0 0.0
    %576 = vmatpush1.xpose.msra.mxu0 0.0
    %577 = vmatprep.subr.mxu0 0.0
    %578 = vmatpush1.xpose.msra.mxu0 0.0
    %579 = vmatprep.subr.mxu0 0.0
    %580 = vmatpush1.xpose.msra.mxu0 0.0
    %581 = vmatprep.subr.mxu0 0.0
    %582 = vmatpush1.xpose.msra.mxu0 0.0
    %583 = vmatprep.subr.mxu0 0.0
    %584 = vmatpush1.xpose.msra.mxu0 0.0
    %585 = vmatprep.subr.mxu0 0.0
    %586 = vmatpush1.xpose.msra.mxu0 0.0
    %587 = vmatprep.subr.mxu0 0.0
    %588 = vmatpush1.xpose.msra.mxu0 0.0
    %589 = vmatprep.subr.mxu0 0.0
    %590 = vmatpush1.xpose.msra.mxu0 0.0
    %591 = vmatprep.subr.mxu0 0.0
    %592 = vmatpush1.xpose.msra.mxu0 0.0
    %593 = vmatprep.subr.mxu0 0.0
    %594 = vmatpush1.xpose.msra.mxu0 0.0
    %595 = vmatprep.subr.mxu0 0.0
    %596 = vmatpush1.xpose.msra.mxu0 0.0
    %597 = vmatprep.subr.mxu0 0.0
    %598 = vmatpush1.xpose.msra.mxu0 0.0
    %599 = vmatprep.subr.mxu0 0.0
    %600 = vmatpush1.xpose.msra.mxu0 0.0
    %601 = vmatprep.mubr.f32.mxu0 0.0
    %602 = vmatmul.mubr.f32.gmra.mrb[0].mxu0 %v490
    %v603 = vpop.f32.mrb[0].mxu0
    %v604 = vadd.f32 0.0, %v603
    %v605 = vpop.f32.mrb[0].mxu0
    %606 = vmatprep.mubr.f32.mxu0 0.0
    %607 = vmatmul.mubr.f32.gmra.mrb[0].mxu0 %v493
    %v608 = vpop.f32.mrb[0].mxu0
    %v609 = vadd.f32 0.0, %v608
    %v610 = vpop.f32.mrb[0].mxu0
    %611 = vmatprep.mubr.f32.mxu0 0.0
    %612 = vmatmul.mubr.f32.gmra.mrb[0].mxu0 %v496
    %v613 = vpop.f32.mrb[0].mxu0
    %v614 = vadd.f32 0.0, %v613
    %v615 = vpop.f32.mrb[0].mxu0
    %616 = vmatprep.mubr.f32.mxu0 0.0
    %617 = vmatmul.mubr.f32.gmra.mrb[0].mxu0 %v499
    %v618 = vpop.f32.mrb[0].mxu0
    %v619 = vadd.f32 0.0, %v618
    %v620 = vpop.f32.mrb[0].mxu0
    %621 = vmatprep.mubr.f32.mxu0 0.0
    %622 = vmatmul.mubr.f32.gmra.mrb[0].mxu0 %v502
    %v623 = vpop.f32.mrb[0].mxu0
    %v624 = vadd.f32 0.0, %v623
    %v625 = vpop.f32.mrb[0].mxu0
    %626 = vmatprep.mubr.f32.mxu0 0.0
    %627 = vmatmul.mubr.f32.gmra.mrb[0].mxu0 %v505
    %v628 = vpop.f32.mrb[0].mxu0
    %v629 = vadd.f32 0.0, %v628
    %v630 = vpop.f32.mrb[0].mxu0
    %631 = vmatprep.mubr.f32.mxu0 0.0
    %632 = vmatmul.mubr.f32.gmra.mrb[0].mxu0 %v508
    %v633 = vpop.f32.mrb[0].mxu0
    %v634 = vadd.f32 0.0, %v633
    %v635 = vpop.f32.mrb[0].mxu0
    %636 = vmatprep.mubr.f32.mxu0 0.0
    %637 = vmatmul.mubr.f32.gmra.mrb[0].mxu0 %v511
    %v638 = vpop.f32.mrb[0].mxu0
    %v639 = vadd.f32 0.0, %v638
    %v640 = vpop.f32.mrb[0].mxu0
    %641 = vmatprep.mubr.f32.mxu0 0.0
    %642 = vmatmul.mubr.f32.gmra.mrb[0].mxu0 %v514
    %v643 = vpop.f32.mrb[0].mxu0
    %v644 = vadd.f32 0.0, %v643
    %v645 = vpop.f32.mrb[0].mxu0
    %646 = vmatprep.mubr.f32.mxu0 0.0
    %647 = vmatmul.mubr.f32.gmra.mrb[0].mxu0 %v517
    %v648 = vpop.f32.mrb[0].mxu0
    %v649 = vadd.f32 0.0, %v648
    %v650 = vpop.f32.mrb[0].mxu0
    %651 = vmatprep.mubr.f32.mxu0 0.0
    %652 = vmatmul.mubr.f32.gmra.mrb[0].mxu0 %v520
    %v653 = vpop.f32.mrb[0].mxu0
    %v654 = vadd.f32 0.0, %v653
    %v655 = vpop.f32.mrb[0].mxu0
    %656 = vmatprep.mubr.f32.mxu0 0.0
    %657 = vmatmul.mubr.f32.gmra.mrb[0].mxu0 %v523
    %v658 = vpop.f32.mrb[0].mxu0
    %v659 = vadd.f32 0.0, %v658
    %v660 = vpop.f32.mrb[0].mxu0
    %661 = vmatprep.mubr.f32.mxu0 0.0
    %662 = vmatmul.mubr.f32.gmra.mrb[0].mxu0 %v526
    %v663 = vpop.f32.mrb[0].mxu0
    %v664 = vadd.f32 0.0, %v663
    %v665 = vpop.f32.mrb[0].mxu0
    %666 = vmatprep.mubr.f32.mxu0 0.0
    %667 = vmatmul.mubr.f32.gmra.mrb[0].mxu0 %v529
    %v668 = vpop.f32.mrb[0].mxu0
    %v669 = vadd.f32 0.0, %v668
    %v670 = vpop.f32.mrb[0].mxu0
    %671 = vmatprep.mubr.f32.mxu0 0.0
    %672 = vmatmul.mubr.f32.gmra.mrb[0].mxu0 %v532
    %v673 = vpop.f32.mrb[0].mxu0
    %v674 = vadd.f32 0.0, %v673
    %v675 = vpop.f32.mrb[0].mxu0
    %676 = vmatprep.mubr.f32.mxu0 0.0
    %677 = vmatmul.mubr.f32.gmra.mrb[0].mxu0 %v535
    %v678 = vpop.f32.mrb[0].mxu0
    %v679 = vadd.f32 0.0, %v678
    %v680 = vpop.f32.mrb[0].mxu0
    %681 = vdwg.mxu0
    %v682 = vmul.f32 %v604, 1.442695
    %v683 = vpow.pop %v682
    %v684 = vmul.f32 %v609, 1.442695
    %v685 = vpow.pop %v684
    %v686 = vmul.f32 %v614, 1.442695
    %v687 = vpow.pop %v686
    %v688 = vmul.f32 %v619, 1.442695
    %v689 = vpow.pop %v688
    %v690 = vmul.f32 %v624, 1.442695
    %v691 = vpow.pop %v690
    %v692 = vmul.f32 %v629, 1.442695
    %v693 = vpow.pop %v692
    %v694 = vmul.f32 %v634, 1.442695
    %v695 = vpow.pop %v694
    %v696 = vmul.f32 %v639, 1.442695
    %v697 = vpow.pop %v696
    %v698 = vmul.f32 %v644, 1.442695
    %v699 = vpow.pop %v698
    %v700 = vmul.f32 %v649, 1.442695
    %v701 = vpow.pop %v700
    %v702 = vmul.f32 %v654, 1.442695
    %v703 = vpow.pop %v702
    %v704 = vmul.f32 %v659, 1.442695
    %v705 = vpow.pop %v704
    %v706 = vmul.f32 %v664, 1.442695
    %v707 = vpow.pop %v706
    %v708 = vmul.f32 %v669, 1.442695
    %v709 = vpow.pop %v708
    %v710 = vmul.f32 %v674, 1.442695
    %v711 = vpow.pop %v710
    %v712 = vmul.f32 %v679, 1.442695
    %v713 = vpow.pop %v712
    %714 = vst [vmem:[#allocation2] sm:$0xff] %v683
    %715 = vst [vmem:[#allocation2 + $0x8] sm:$0xff] %v685
    %716 = vst [vmem:[#allocation2 + $0x10] sm:$0xff] %v687
    %717 = vst [vmem:[#allocation2 + $0x18] sm:$0xff] %v689
    %718 = vst [vmem:[#allocation2 + $0x20] sm:$0xff] %v691
    %719 = vst [vmem:[#allocation2 + $0x28] sm:$0xff] %v693
    %720 = vst [vmem:[#allocation2 + $0x30] sm:$0xff] %v695
    %721 = vst [vmem:[#allocation2 + $0x38] sm:$0xff] %v697
    %722 = vst [vmem:[#allocation2 + $0x40] sm:$0xff] %v699
    %723 = vst [vmem:[#allocation2 + $0x48] sm:$0xff] %v701
    %724 = vst [vmem:[#allocation2 + $0x50] sm:$0xff] %v703
    %725 = vst [vmem:[#allocation2 + $0x58] sm:$0xff] %v705
    %726 = vst [vmem:[#allocation2 + $0x60] sm:$0xff] %v707
    %727 = vst [vmem:[#allocation2 + $0x68] sm:$0xff] %v709
    %728 = vst [vmem:[#allocation2 + $0x70] sm:$0xff] %v711
    %729 = vst [vmem:[#allocation2 + $0x78] sm:$0xff] %v713
    %730 = vrot.lane.b32.xlu0 %v395, 96
    %v731 = vpop.permute.xlu0 %730
    %732 = vrot.lane.b32.xlu0 %v400, 96
    %v733 = vpop.permute.xlu0 %732
    %734 = vrot.lane.b32.xlu0 %v405, 96
    %v735 = vpop.permute.xlu0 %734
    %736 = vrot.lane.b32.xlu0 %v410, 96
    %v737 = vpop.permute.xlu0 %736
    %738 = vrot.lane.b32.xlu0 %v415, 96
    %v739 = vpop.permute.xlu0 %738
    %740 = vrot.lane.b32.xlu0 %v420, 96
    %v741 = vpop.permute.xlu0 %740
    %742 = vrot.lane.b32.xlu0 %v425, 96
    %v743 = vpop.permute.xlu0 %742
    %744 = vrot.lane.b32.xlu0 %v430, 96
    %v745 = vpop.permute.xlu0 %744
    %746 = vrot.lane.b32.xlu0 %v435, 96
    %v747 = vpop.permute.xlu0 %746
    %748 = vrot.lane.b32.xlu0 %v440, 96
    %v749 = vpop.permute.xlu0 %748
    %750 = vrot.lane.b32.xlu0 %v445, 96
    %v751 = vpop.permute.xlu0 %750
    %752 = vrot.lane.b32.xlu0 %v450, 96
    %v753 = vpop.permute.xlu0 %752
    %754 = vrot.lane.b32.xlu0 %v455, 96
    %v755 = vpop.permute.xlu0 %754
    %756 = vrot.lane.b32.xlu0 %v460, 96
    %v757 = vpop.permute.xlu0 %756
    %758 = vrot.lane.b32.xlu0 %v465, 96
    %v759 = vpop.permute.xlu0 %758
    %760 = vrot.lane.b32.xlu0 %v470, 96
    %v761 = vpop.permute.xlu0 %760
    %v762 = vsel %vm54, %v731, 0
    %v764 = vsel %vm54, %v733, 0
    %v766 = vsel %vm54, %v735, 0
    %v768 = vsel %vm54, %v737, 0
    %v770 = vsel %vm54, %v739, 0
    %v772 = vsel %vm54, %v741, 0
    %v774 = vsel %vm54, %v743, 0
    %v776 = vsel %vm54, %v745, 0
    %v778 = vsel %vm54, %v747, 0
    %v780 = vsel %vm54, %v749, 0
    %v782 = vsel %vm54, %v751, 0
    %v784 = vsel %vm54, %v753, 0
    %v786 = vsel %vm54, %v755, 0
    %v788 = vsel %vm54, %v757, 0
    %v790 = vsel %vm54, %v759, 0
    %v792 = vsel %vm54, %v761, 0
    %794 = vmatprep.subr.mxu0 0.0
    %795 = vmatpush1.xpose.msra.mxu0 %v762
    %796 = vmatprep.subr.mxu0 0.0
    %797 = vmatpush1.xpose.msra.mxu0 %v764
    %798 = vmatprep.subr.mxu0 0.0
    %799 = vmatpush1.xpose.msra.mxu0 %v766
    %800 = vmatprep.subr.mxu0 0.0
    %801 = vmatpush1.xpose.msra.mxu0 %v768
    %802 = vmatprep.subr.mxu0 0.0
    %803 = vmatpush1.xpose.msra.mxu0 %v770
    %804 = vmatprep.subr.mxu0 0.0
    %805 = vmatpush1.xpose.msra.mxu0 %v772
    %806 = vmatprep.subr.mxu0 0.0
    %807 = vmatpush1.xpose.msra.mxu0 %v774
    %808 = vmatprep.subr.mxu0 0.0
    %809 = vmatpush1.xpose.msra.mxu0 %v776
    %810 = vmatprep.subr.mxu0 0.0
    %811 = vmatpush1.xpose.msra.mxu0 %v778
    %812 = vmatprep.subr.mxu0 0.0
    %813 = vmatpush1.xpose.msra.mxu0 %v780
    %814 = vmatprep.subr.mxu0 0.0
    %815 = vmatpush1.xpose.msra.mxu0 %v782
    %816 = vmatprep.subr.mxu0 0.0
    %817 = vmatpush1.xpose.msra.mxu0 %v784
    %818 = vmatprep.subr.mxu0 0.0
    %819 = vmatpush1.xpose.msra.mxu0 %v786
    %820 = vmatprep.subr.mxu0 0.0
    %821 = vmatpush1.xpose.msra.mxu0 %v788
    %822 = vmatprep.subr.mxu0 0.0
    %823 = vmatpush1.xpose.msra.mxu0 %v790
    %824 = vmatprep.subr.mxu0 0.0
    %825 = vmatpush1.xpose.msra.mxu0 %v792
    %826 = vmatprep.subr.mxu0 0.0
    %827 = vmatpush1.xpose.msra.mxu0 0.0
    %828 = vmatprep.subr.mxu0 0.0
    %829 = vmatpush1.xpose.msra.mxu0 0.0
    %830 = vmatprep.subr.mxu0 0.0
    %831 = vmatpush1.xpose.msra.mxu0 0.0
    %832 = vmatprep.subr.mxu0 0.0
    %833 = vmatpush1.xpose.msra.mxu0 0.0
    %834 = vmatprep.subr.mxu0 0.0
    %835 = vmatpush1.xpose.msra.mxu0 0.0
    %836 = vmatprep.subr.mxu0 0.0
    %837 = vmatpush1.xpose.msra.mxu0 0.0
    %838 = vmatprep.subr.mxu0 0.0
    %839 = vmatpush1.xpose.msra.mxu0 0.0
    %840 = vmatprep.subr.mxu0 0.0
    %841 = vmatpush1.xpose.msra.mxu0 0.0
    %842 = vmatprep.subr.mxu0 0.0
    %843 = vmatpush1.xpose.msra.mxu0 0.0
    %844 = vmatprep.subr.mxu0 0.0
    %845 = vmatpush1.xpose.msra.mxu0 0.0
    %846 = vmatprep.subr.mxu0 0.0
    %847 = vmatpush1.xpose.msra.mxu0 0.0
    %848 = vmatprep.subr.mxu0 0.0
    %849 = vmatpush1.xpose.msra.mxu0 0.0
    %850 = vmatprep.subr.mxu0 0.0
    %851 = vmatpush1.xpose.msra.mxu0 0.0
    %852 = vmatprep.subr.mxu0 0.0
    %853 = vmatpush1.xpose.msra.mxu0 0.0
    %854 = vmatprep.subr.mxu0 0.0
    %855 = vmatpush1.xpose.msra.mxu0 0.0
    %856 = vmatprep.subr.mxu0 0.0
    %857 = vmatpush1.xpose.msra.mxu0 0.0
    %858 = vmatprep.mubr.f32.mxu0 0.0
    %859 = vmatmul.mubr.f32.gmra.mrb[0].mxu0 %v762
    %v860 = vpop.f32.mrb[0].mxu0
    %v861 = vadd.f32 0.0, %v860
    %v862 = vpop.f32.mrb[0].mxu0
    %863 = vmatprep.mubr.f32.mxu0 0.0
    %864 = vmatmul.mubr.f32.gmra.mrb[0].mxu0 %v764
    %v865 = vpop.f32.mrb[0].mxu0
    %v866 = vadd.f32 0.0, %v865
    %v867 = vpop.f32.mrb[0].mxu0
    %868 = vmatprep.mubr.f32.mxu0 0.0
    %869 = vmatmul.mubr.f32.gmra.mrb[0].mxu0 %v766
    %v870 = vpop.f32.mrb[0].mxu0
    %v871 = vadd.f32 0.0, %v870
    %v872 = vpop.f32.mrb[0].mxu0
    %873 = vmatprep.mubr.f32.mxu0 0.0
    %874 = vmatmul.mubr.f32.gmra.mrb[0].mxu0 %v768
    %v875 = vpop.f32.mrb[0].mxu0
    %v876 = vadd.f32 0.0, %v875
    %v877 = vpop.f32.mrb[0].mxu0
    %878 = vmatprep.mubr.f32.mxu0 0.0
    %879 = vmatmul.mubr.f32.gmra.mrb[0].mxu0 %v770
    %v880 = vpop.f32.mrb[0].mxu0
    %v881 = vadd.f32 0.0, %v880
    %v882 = vpop.f32.mrb[0].mxu0
    %883 = vmatprep.mubr.f32.mxu0 0.0
    %884 = vmatmul.mubr.f32.gmra.mrb[0].mxu0 %v772
    %v885 = vpop.f32.mrb[0].mxu0
    %v886 = vadd.f32 0.0, %v885
    %v887 = vpop.f32.mrb[0].mxu0
    %888 = vmatprep.mubr.f32.mxu0 0.0
    %889 = vmatmul.mubr.f32.gmra.mrb[0].mxu0 %v774
    %v890 = vpop.f32.mrb[0].mxu0
    %v891 = vadd.f32 0.0, %v890
    %v892 = vpop.f32.mrb[0].mxu0
    %893 = vmatprep.mubr.f32.mxu0 0.0
    %894 = vmatmul.mubr.f32.gmra.mrb[0].mxu0 %v776
    %v895 = vpop.f32.mrb[0].mxu0
    %v896 = vadd.f32 0.0, %v895
    %v897 = vpop.f32.mrb[0].mxu0
    %898 = vmatprep.mubr.f32.mxu0 0.0
    %899 = vmatmul.mubr.f32.gmra.mrb[0].mxu0 %v778
    %v900 = vpop.f32.mrb[0].mxu0
    %v901 = vadd.f32 0.0, %v900
    %v902 = vpop.f32.mrb[0].mxu0
    %903 = vmatprep.mubr.f32.mxu0 0.0
    %904 = vmatmul.mubr.f32.gmra.mrb[0].mxu0 %v780
    %v905 = vpop.f32.mrb[0].mxu0
    %v906 = vadd.f32 0.0, %v905
    %v907 = vpop.f32.mrb[0].mxu0
    %908 = vmatprep.mubr.f32.mxu0 0.0
    %909 = vmatmul.mubr.f32.gmra.mrb[0].mxu0 %v782
    %v910 = vpop.f32.mrb[0].mxu0
    %v911 = vadd.f32 0.0, %v910
    %v912 = vpop.f32.mrb[0].mxu0
    %913 = vmatprep.mubr.f32.mxu0 0.0
    %914 = vmatmul.mubr.f32.gmra.mrb[0].mxu0 %v784
    %v915 = vpop.f32.mrb[0].mxu0
    %v916 = vadd.f32 0.0, %v915
    %v917 = vpop.f32.mrb[0].mxu0
    %918 = vmatprep.mubr.f32.mxu0 0.0
    %919 = vmatmul.mubr.f32.gmra.mrb[0].mxu0 %v786
    %v920 = vpop.f32.mrb[0].mxu0
    %v921 = vadd.f32 0.0, %v920
    %v922 = vpop.f32.mrb[0].mxu0
    %923 = vmatprep.mubr.f32.mxu0 0.0
    %924 = vmatmul.mubr.f32.gmra.mrb[0].mxu0 %v788
    %v925 = vpop.f32.mrb[0].mxu0
    %v926 = vadd.f32 0.0, %v925
    %v927 = vpop.f32.mrb[0].mxu0
    %928 = vmatprep.mubr.f32.mxu0 0.0
    %929 = vmatmul.mubr.f32.gmra.mrb[0].mxu0 %v790
    %v930 = vpop.f32.mrb[0].mxu0
    %v931 = vadd.f32 0.0, %v930
    %v932 = vpop.f32.mrb[0].mxu0
    %933 = vmatprep.mubr.f32.mxu0 0.0
    %934 = vmatmul.mubr.f32.gmra.mrb[0].mxu0 %v792
    %v935 = vpop.f32.mrb[0].mxu0
    %v936 = vadd.f32 0.0, %v935
    %v937 = vpop.f32.mrb[0].mxu0
    %938 = vdwg.mxu0
    %vm939 = vcmp.gt.f32.partialorder %v861, %v604
    %vm940 = vcmp.gt.f32.partialorder %v866, %v609
    %vm941 = vcmp.gt.f32.partialorder %v871, %v614
    %vm942 = vcmp.gt.f32.partialorder %v876, %v619
    %vm943 = vcmp.gt.f32.partialorder %v881, %v624
    %vm944 = vcmp.gt.f32.partialorder %v886, %v629
    %vm945 = vcmp.gt.f32.partialorder %v891, %v634
    %vm946 = vcmp.gt.f32.partialorder %v896, %v639
    %vm947 = vcmp.gt.f32.partialorder %v901, %v644
    %vm948 = vcmp.gt.f32.partialorder %v906, %v649
    %vm949 = vcmp.gt.f32.partialorder %v911, %v654
    %vm950 = vcmp.gt.f32.partialorder %v916, %v659
    %vm951 = vcmp.gt.f32.partialorder %v921, %v664
    %vm952 = vcmp.gt.f32.partialorder %v926, %v669
    %vm953 = vcmp.gt.f32.partialorder %v931, %v674
    %vm954 = vcmp.gt.f32.partialorder %v936, %v679
    %v955 = vsel %vm939, %v861, %v604
    %v956 = vsel %vm940, %v866, %v609
    %v957 = vsel %vm941, %v871, %v614
    %v958 = vsel %vm942, %v876, %v619
    %v959 = vsel %vm943, %v881, %v624
    %v960 = vsel %vm944, %v886, %v629
    %v961 = vsel %vm945, %v891, %v634
    %v962 = vsel %vm946, %v896, %v639
    %v963 = vsel %vm947, %v901, %v644
    %v964 = vsel %vm948, %v906, %v649
    %v965 = vsel %vm949, %v911, %v654
    %v966 = vsel %vm950, %v916, %v659
    %v967 = vsel %vm951, %v921, %v664
    %v968 = vsel %vm952, %v926, %v669
    %v969 = vsel %vm953, %v931, %v674
    %v970 = vsel %vm954, %v936, %v679
    %v971 = vsel %vm939, 1.0, 0.0
    %v972 = vsel %vm940, 1.0, 0.0
    %v973 = vsel %vm941, 1.0, 0.0
    %v974 = vsel %vm942, 1.0, 0.0
    %v975 = vsel %vm943, 1.0, 0.0
    %v976 = vsel %vm944, 1.0, 0.0
    %v977 = vsel %vm945, 1.0, 0.0
    %v978 = vsel %vm946, 1.0, 0.0
    %v979 = vsel %vm947, 1.0, 0.0
    %v980 = vsel %vm948, 1.0, 0.0
    %v981 = vsel %vm949, 1.0, 0.0
    %v982 = vsel %vm950, 1.0, 0.0
    %v983 = vsel %vm951, 1.0, 0.0
    %v984 = vsel %vm952, 1.0, 0.0
    %v985 = vsel %vm953, 1.0, 0.0
    %v986 = vsel %vm954, 1.0, 0.0
    %v987 = vmul.f32 %v861, 1.442695
    %v988 = vpow.pop %v987
    %v989 = vmul.f32 %v866, 1.442695
    %v990 = vpow.pop %v989
    %v991 = vmul.f32 %v871, 1.442695
    %v992 = vpow.pop %v991
    %v993 = vmul.f32 %v876, 1.442695
    %v994 = vpow.pop %v993
    %v995 = vmul.f32 %v881, 1.442695
    %v996 = vpow.pop %v995
    %v997 = vmul.f32 %v886, 1.442695
    %v998 = vpow.pop %v997
    %v999 = vmul.f32 %v891, 1.442695
    %v1000 = vpow.pop %v999
    %v1001 = vmul.f32 %v896, 1.442695
    %v1002 = vpow.pop %v1001
    %v1003 = vmul.f32 %v901, 1.442695
    %v1004 = vpow.pop %v1003
    %v1005 = vmul.f32 %v906, 1.442695
    %v1006 = vpow.pop %v1005
    %v1007 = vmul.f32 %v911, 1.442695
    %v1008 = vpow.pop %v1007
    %v1009 = vmul.f32 %v916, 1.442695
    %v1010 = vpow.pop %v1009
    %v1011 = vmul.f32 %v921, 1.442695
    %v1012 = vpow.pop %v1011
    %v1013 = vmul.f32 %v926, 1.442695
    %v1014 = vpow.pop %v1013
    %v1015 = vmul.f32 %v931, 1.442695
    %v1016 = vpow.pop %v1015
    %v1017 = vmul.f32 %v936, 1.442695
    %v1018 = vpow.pop %v1017
    %s1019 = scalar_lea.vmem [#allocation2], 128
    %1020 = vst [vmem:[%s1019] sm:$0xff] %v988
    %1021 = vst [vmem:[%s1019 + $0x8] sm:$0xff] %v990
    %1022 = vst [vmem:[%s1019 + $0x10] sm:$0xff] %v992
    %1023 = vst [vmem:[%s1019 + $0x18] sm:$0xff] %v994
    %1024 = vst [vmem:[%s1019 + $0x20] sm:$0xff] %v996
    %1025 = vst [vmem:[%s1019 + $0x28] sm:$0xff] %v998
    %1026 = vst [vmem:[%s1019 + $0x30] sm:$0xff] %v1000
    %1027 = vst [vmem:[%s1019 + $0x38] sm:$0xff] %v1002
    %1028 = vst [vmem:[%s1019 + $0x40] sm:$0xff] %v1004
    %1029 = vst [vmem:[%s1019 + $0x48] sm:$0xff] %v1006
    %1030 = vst [vmem:[%s1019 + $0x50] sm:$0xff] %v1008
    %1031 = vst [vmem:[%s1019 + $0x58] sm:$0xff] %v1010
    %1032 = vst [vmem:[%s1019 + $0x60] sm:$0xff] %v1012
    %1033 = vst [vmem:[%s1019 + $0x68] sm:$0xff] %v1014
    %1034 = vst [vmem:[%s1019 + $0x70] sm:$0xff] %v1016
    %1035 = vst [vmem:[%s1019 + $0x78] sm:$0xff] %v1018
    %1036 = vrot.lane.b32.xlu0 %v395, 64
    %v1037 = vpop.permute.xlu0 %1036
    %1038 = vrot.lane.b32.xlu0 %v400, 64
    %v1039 = vpop.permute.xlu0 %1038
    %1040 = vrot.lane.b32.xlu0 %v405, 64
    %v1041 = vpop.permute.xlu0 %1040
    %1042 = vrot.lane.b32.xlu0 %v410, 64
    %v1043 = vpop.permute.xlu0 %1042
    %1044 = vrot.lane.b32.xlu0 %v415, 64
    %v1045 = vpop.permute.xlu0 %1044
    %1046 = vrot.lane.b32.xlu0 %v420, 64
    %v1047 = vpop.permute.xlu0 %1046
    %1048 = vrot.lane.b32.xlu0 %v425, 64
    %v1049 = vpop.permute.xlu0 %1048
    %1050 = vrot.lane.b32.xlu0 %v430, 64
    %v1051 = vpop.permute.xlu0 %1050
    %1052 = vrot.lane.b32.xlu0 %v435, 64
    %v1053 = vpop.permute.xlu0 %1052
    %1054 = vrot.lane.b32.xlu0 %v440, 64
    %v1055 = vpop.permute.xlu0 %1054
    %1056 = vrot.lane.b32.xlu0 %v445, 64
    %v1057 = vpop.permute.xlu0 %1056
    %1058 = vrot.lane.b32.xlu0 %v450, 64
    %v1059 = vpop.permute.xlu0 %1058
    %1060 = vrot.lane.b32.xlu0 %v455, 64
    %v1061 = vpop.permute.xlu0 %1060
    %1062 = vrot.lane.b32.xlu0 %v460, 64
    %v1063 = vpop.permute.xlu0 %1062
    %1064 = vrot.lane.b32.xlu0 %v465, 64
    %v1065 = vpop.permute.xlu0 %1064
    %1066 = vrot.lane.b32.xlu0 %v470, 64
    %v1067 = vpop.permute.xlu0 %1066
    %v1068 = vsel %vm54, %v1037, 0
    %v1070 = vsel %vm54, %v1039, 0
    %v1072 = vsel %vm54, %v1041, 0
    %v1074 = vsel %vm54, %v1043, 0
    %v1076 = vsel %vm54, %v1045, 0
    %v1078 = vsel %vm54, %v1047, 0
    %v1080 = vsel %vm54, %v1049, 0
    %v1082 = vsel %vm54, %v1051, 0
    %v1084 = vsel %vm54, %v1053, 0
    %v1086 = vsel %vm54, %v1055, 0
    %v1088 = vsel %vm54, %v1057, 0
    %v1090 = vsel %vm54, %v1059, 0
    %v1092 = vsel %vm54, %v1061, 0
    %v1094 = vsel %vm54, %v1063, 0
    %v1096 = vsel %vm54, %v1065, 0
    %v1098 = vsel %vm54, %v1067, 0
    %1100 = vmatprep.subr.mxu0 0.0
    %1101 = vmatpush1.xpose.msra.mxu0 %v1068
    %1102 = vmatprep.subr.mxu0 0.0
    %1103 = vmatpush1.xpose.msra.mxu0 %v1070
    %1104 = vmatprep.subr.mxu0 0.0
    %1105 = vmatpush1.xpose.msra.mxu0 %v1072
    %1106 = vmatprep.subr.mxu0 0.0
    %1107 = vmatpush1.xpose.msra.mxu0 %v1074
    %1108 = vmatprep.subr.mxu0 0.0
    %1109 = vmatpush1.xpose.msra.mxu0 %v1076
    %1110 = vmatprep.subr.mxu0 0.0
    %1111 = vmatpush1.xpose.msra.mxu0 %v1078
    %1112 = vmatprep.subr.mxu0 0.0
    %1113 = vmatpush1.xpose.msra.mxu0 %v1080
    %1114 = vmatprep.subr.mxu0 0.0
    %1115 = vmatpush1.xpose.msra.mxu0 %v1082
    %1116 = vmatprep.subr.mxu0 0.0
    %1117 = vmatpush1.xpose.msra.mxu0 %v1084
    %1118 = vmatprep.subr.mxu0 0.0
    %1119 = vmatpush1.xpose.msra.mxu0 %v1086
    %1120 = vmatprep.subr.mxu0 0.0
    %1121 = vmatpush1.xpose.msra.mxu0 %v1088
    %1122 = vmatprep.subr.mxu0 0.0
    %1123 = vmatpush1.xpose.msra.mxu0 %v1090
    %1124 = vmatprep.subr.mxu0 0.0
    %1125 = vmatpush1.xpose.msra.mxu0 %v1092
    %1126 = vmatprep.subr.mxu0 0.0
    %1127 = vmatpush1.xpose.msra.mxu0 %v1094
    %1128 = vmatprep.subr.mxu0 0.0
    %1129 = vmatpush1.xpose.msra.mxu0 %v1096
    %1130 = vmatprep.subr.mxu0 0.0
    %1131 = vmatpush1.xpose.msra.mxu0 %v1098
    %1132 = vmatprep.subr.mxu0 0.0
    %1133 = vmatpush1.xpose.msra.mxu0 0.0
    %1134 = vmatprep.subr.mxu0 0.0
    %1135 = vmatpush1.xpose.msra.mxu0 0.0
    %1136 = vmatprep.subr.mxu0 0.0
    %1137 = vmatpush1.xpose.msra.mxu0 0.0
    %1138 = vmatprep.subr.mxu0 0.0
    %1139 = vmatpush1.xpose.msra.mxu0 0.0
    %1140 = vmatprep.subr.mxu0 0.0
    %1141 = vmatpush1.xpose.msra.mxu0 0.0
    %1142 = vmatprep.subr.mxu0 0.0
    %1143 = vmatpush1.xpose.msra.mxu0 0.0
    %1144 = vmatprep.subr.mxu0 0.0
    %1145 = vmatpush1.xpose.msra.mxu0 0.0
    %1146 = vmatprep.subr.mxu0 0.0
    %1147 = vmatpush1.xpose.msra.mxu0 0.0
    %1148 = vmatprep.subr.mxu0 0.0
    %1149 = vmatpush1.xpose.msra.mxu0 0.0
    %1150 = vmatprep.subr.mxu0 0.0
    %1151 = vmatpush1.xpose.msra.mxu0 0.0
    %1152 = vmatprep.subr.mxu0 0.0
    %1153 = vmatpush1.xpose.msra.mxu0 0.0
    %1154 = vmatprep.subr.mxu0 0.0
    %1155 = vmatpush1.xpose.msra.mxu0 0.0
    %1156 = vmatprep.subr.mxu0 0.0
    %1157 = vmatpush1.xpose.msra.mxu0 0.0
    %1158 = vmatprep.subr.mxu0 0.0
    %1159 = vmatpush1.xpose.msra.mxu0 0.0
    %1160 = vmatprep.subr.mxu0 0.0
    %1161 = vmatpush1.xpose.msra.mxu0 0.0
    %1162 = vmatprep.subr.mxu0 0.0
    %1163 = vmatpush1.xpose.msra.mxu0 0.0
    %1164 = vmatprep.mubr.f32.mxu0 0.0
    %1165 = vmatmul.mubr.f32.gmra.mrb[0].mxu0 %v1068
    %v1166 = vpop.f32.mrb[0].mxu0
    %v1167 = vadd.f32 0.0, %v1166
    %v1168 = vpop.f32.mrb[0].mxu0
    %1169 = vmatprep.mubr.f32.mxu0 0.0
    %1170 = vmatmul.mubr.f32.gmra.mrb[0].mxu0 %v1070
    %v1171 = vpop.f32.mrb[0].mxu0
    %v1172 = vadd.f32 0.0, %v1171
    %v1173 = vpop.f32.mrb[0].mxu0
    %1174 = vmatprep.mubr.f32.mxu0 0.0
    %1175 = vmatmul.mubr.f32.gmra.mrb[0].mxu0 %v1072
    %v1176 = vpop.f32.mrb[0].mxu0
    %v1177 = vadd.f32 0.0, %v1176
    %v1178 = vpop.f32.mrb[0].mxu0
    %1179 = vmatprep.mubr.f32.mxu0 0.0
    %1180 = vmatmul.mubr.f32.gmra.mrb[0].mxu0 %v1074
    %v1181 = vpop.f32.mrb[0].mxu0
    %v1182 = vadd.f32 0.0, %v1181
    %v1183 = vpop.f32.mrb[0].mxu0
    %1184 = vmatprep.mubr.f32.mxu0 0.0
    %1185 = vmatmul.mubr.f32.gmra.mrb[0].mxu0 %v1076
    %v1186 = vpop.f32.mrb[0].mxu0
    %v1187 = vadd.f32 0.0, %v1186
    %v1188 = vpop.f32.mrb[0].mxu0
    %1189 = vmatprep.mubr.f32.mxu0 0.0
    %1190 = vmatmul.mubr.f32.gmra.mrb[0].mxu0 %v1078
    %v1191 = vpop.f32.mrb[0].mxu0
    %v1192 = vadd.f32 0.0, %v1191
    %v1193 = vpop.f32.mrb[0].mxu0
    %1194 = vmatprep.mubr.f32.mxu0 0.0
    %1195 = vmatmul.mubr.f32.gmra.mrb[0].mxu0 %v1080
    %v1196 = vpop.f32.mrb[0].mxu0
    %v1197 = vadd.f32 0.0, %v1196
    %v1198 = vpop.f32.mrb[0].mxu0
    %1199 = vmatprep.mubr.f32.mxu0 0.0
    %1200 = vmatmul.mubr.f32.gmra.mrb[0].mxu0 %v1082
    %v1201 = vpop.f32.mrb[0].mxu0
    %v1202 = vadd.f32 0.0, %v1201
    %v1203 = vpop.f32.mrb[0].mxu0
    %1204 = vmatprep.mubr.f32.mxu0 0.0
    %1205 = vmatmul.mubr.f32.gmra.mrb[0].mxu0 %v1084
    %v1206 = vpop.f32.mrb[0].mxu0
    %v1207 = vadd.f32 0.0, %v1206
    %v1208 = vpop.f32.mrb[0].mxu0
    %1209 = vmatprep.mubr.f32.mxu0 0.0
    %1210 = vmatmul.mubr.f32.gmra.mrb[0].mxu0 %v1086
    %v1211 = vpop.f32.mrb[0].mxu0
    %v1212 = vadd.f32 0.0, %v1211
    %v1213 = vpop.f32.mrb[0].mxu0
    %1214 = vmatprep.mubr.f32.mxu0 0.0
    %1215 = vmatmul.mubr.f32.gmra.mrb[0].mxu0 %v1088
    %v1216 = vpop.f32.mrb[0].mxu0
    %v1217 = vadd.f32 0.0, %v1216
    %v1218 = vpop.f32.mrb[0].mxu0
    %1219 = vmatprep.mubr.f32.mxu0 0.0
    %1220 = vmatmul.mubr.f32.gmra.mrb[0].mxu0 %v1090
    %v1221 = vpop.f32.mrb[0].mxu0
    %v1222 = vadd.f32 0.0, %v1221
    %v1223 = vpop.f32.mrb[0].mxu0
    %1224 = vmatprep.mubr.f32.mxu0 0.0
    %1225 = vmatmul.mubr.f32.gmra.mrb[0].mxu0 %v1092
    %v1226 = vpop.f32.mrb[0].mxu0
    %v1227 = vadd.f32 0.0, %v1226
    %v1228 = vpop.f32.mrb[0].mxu0
    %1229 = vmatprep.mubr.f32.mxu0 0.0
    %1230 = vmatmul.mubr.f32.gmra.mrb[0].mxu0 %v1094
    %v1231 = vpop.f32.mrb[0].mxu0
    %v1232 = vadd.f32 0.0, %v1231
    %v1233 = vpop.f32.mrb[0].mxu0
    %1234 = vmatprep.mubr.f32.mxu0 0.0
    %1235 = vmatmul.mubr.f32.gmra.mrb[0].mxu0 %v1096
    %v1236 = vpop.f32.mrb[0].mxu0
    %v1237 = vadd.f32 0.0, %v1236
    %v1238 = vpop.f32.mrb[0].mxu0
    %1239 = vmatprep.mubr.f32.mxu0 0.0
    %1240 = vmatmul.mubr.f32.gmra.mrb[0].mxu0 %v1098
    %v1241 = vpop.f32.mrb[0].mxu0
    %v1242 = vadd.f32 0.0, %v1241
    %v1243 = vpop.f32.mrb[0].mxu0
    %1244 = vdwg.mxu0
    %vm1245 = vcmp.gt.f32.partialorder %v1167, %v955
    %vm1246 = vcmp.gt.f32.partialorder %v1172, %v956
    %vm1247 = vcmp.gt.f32.partialorder %v1177, %v957
    %vm1248 = vcmp.gt.f32.partialorder %v1182, %v958
    %vm1249 = vcmp.gt.f32.partialorder %v1187, %v959
    %vm1250 = vcmp.gt.f32.partialorder %v1192, %v960
    %vm1251 = vcmp.gt.f32.partialorder %v1197, %v961
    %vm1252 = vcmp.gt.f32.partialorder %v1202, %v962
    %vm1253 = vcmp.gt.f32.partialorder %v1207, %v963
    %vm1254 = vcmp.gt.f32.partialorder %v1212, %v964
    %vm1255 = vcmp.gt.f32.partialorder %v1217, %v965
    %vm1256 = vcmp.gt.f32.partialorder %v1222, %v966
    %vm1257 = vcmp.gt.f32.partialorder %v1227, %v967
    %vm1258 = vcmp.gt.f32.partialorder %v1232, %v968
    %vm1259 = vcmp.gt.f32.partialorder %v1237, %v969
    %vm1260 = vcmp.gt.f32.partialorder %v1242, %v970
    %v1261 = vsel %vm1245, %v1167, %v955
    %v1262 = vsel %vm1246, %v1172, %v956
    %v1263 = vsel %vm1247, %v1177, %v957
    %v1264 = vsel %vm1248, %v1182, %v958
    %v1265 = vsel %vm1249, %v1187, %v959
    %v1266 = vsel %vm1250, %v1192, %v960
    %v1267 = vsel %vm1251, %v1197, %v961
    %v1268 = vsel %vm1252, %v1202, %v962
    %v1269 = vsel %vm1253, %v1207, %v963
    %v1270 = vsel %vm1254, %v1212, %v964
    %v1271 = vsel %vm1255, %v1217, %v965
    %v1272 = vsel %vm1256, %v1222, %v966
    %v1273 = vsel %vm1257, %v1227, %v967
    %v1274 = vsel %vm1258, %v1232, %v968
    %v1275 = vsel %vm1259, %v1237, %v969
    %v1276 = vsel %vm1260, %v1242, %v970
    %v1277 = vsel %vm1245, 2.0, %v971
    %v1278 = vsel %vm1246, 2.0, %v972
    %v1279 = vsel %vm1247, 2.0, %v973
    %v1280 = vsel %vm1248, 2.0, %v974
    %v1281 = vsel %vm1249, 2.0, %v975
    %v1282 = vsel %vm1250, 2.0, %v976
    %v1283 = vsel %vm1251, 2.0, %v977
    %v1284 = vsel %vm1252, 2.0, %v978
    %v1285 = vsel %vm1253, 2.0, %v979
    %v1286 = vsel %vm1254, 2.0, %v980
    %v1287 = vsel %vm1255, 2.0, %v981
    %v1288 = vsel %vm1256, 2.0, %v982
    %v1289 = vsel %vm1257, 2.0, %v983
    %v1290 = vsel %vm1258, 2.0, %v984
    %v1291 = vsel %vm1259, 2.0, %v985
    %v1292 = vsel %vm1260, 2.0, %v986
    %v1293 = vmul.f32 %v1167, 1.442695
    %v1294 = vpow.pop %v1293
    %v1295 = vmul.f32 %v1172, 1.442695
    %v1296 = vpow.pop %v1295
    %v1297 = vmul.f32 %v1177, 1.442695
    %v1298 = vpow.pop %v1297
    %v1299 = vmul.f32 %v1182, 1.442695
    %v1300 = vpow.pop %v1299
    %v1301 = vmul.f32 %v1187, 1.442695
    %v1302 = vpow.pop %v1301
    %v1303 = vmul.f32 %v1192, 1.442695
    %v1304 = vpow.pop %v1303
    %v1305 = vmul.f32 %v1197, 1.442695
    %v1306 = vpow.pop %v1305
    %v1307 = vmul.f32 %v1202, 1.442695
    %v1308 = vpow.pop %v1307
    %v1309 = vmul.f32 %v1207, 1.442695
    %v1310 = vpow.pop %v1309
    %v1311 = vmul.f32 %v1212, 1.442695
    %v1312 = vpow.pop %v1311
    %v1313 = vmul.f32 %v1217, 1.442695
    %v1314 = vpow.pop %v1313
    %v1315 = vmul.f32 %v1222, 1.442695
    %v1316 = vpow.pop %v1315
    %v1317 = vmul.f32 %v1227, 1.442695
    %v1318 = vpow.pop %v1317
    %v1319 = vmul.f32 %v1232, 1.442695
    %v1320 = vpow.pop %v1319
    %v1321 = vmul.f32 %v1237, 1.442695
    %v1322 = vpow.pop %v1321
    %v1323 = vmul.f32 %v1242, 1.442695
    %v1324 = vpow.pop %v1323
    %s1325 = scalar_lea.vmem [#allocation2], 256
    %1326 = vst [vmem:[%s1325] sm:$0xff] %v1294
    %1327 = vst [vmem:[%s1325 + $0x8] sm:$0xff] %v1296
    %1328 = vst [vmem:[%s1325 + $0x10] sm:$0xff] %v1298
    %1329 = vst [vmem:[%s1325 + $0x18] sm:$0xff] %v1300
    %1330 = vst [vmem:[%s1325 + $0x20] sm:$0xff] %v1302
    %1331 = vst [vmem:[%s1325 + $0x28] sm:$0xff] %v1304
    %1332 = vst [vmem:[%s1325 + $0x30] sm:$0xff] %v1306
    %1333 = vst [vmem:[%s1325 + $0x38] sm:$0xff] %v1308
    %1334 = vst [vmem:[%s1325 + $0x40] sm:$0xff] %v1310
    %1335 = vst [vmem:[%s1325 + $0x48] sm:$0xff] %v1312
    %1336 = vst [vmem:[%s1325 + $0x50] sm:$0xff] %v1314
    %1337 = vst [vmem:[%s1325 + $0x58] sm:$0xff] %v1316
    %1338 = vst [vmem:[%s1325 + $0x60] sm:$0xff] %v1318
    %1339 = vst [vmem:[%s1325 + $0x68] sm:$0xff] %v1320
    %1340 = vst [vmem:[%s1325 + $0x70] sm:$0xff] %v1322
    %1341 = vst [vmem:[%s1325 + $0x78] sm:$0xff] %v1324
    %1342 = vrot.lane.b32.xlu0 %v395, 32
    %v1343 = vpop.permute.xlu0 %1342
    %1344 = vrot.lane.b32.xlu0 %v400, 32
    %v1345 = vpop.permute.xlu0 %1344
    %1346 = vrot.lane.b32.xlu0 %v405, 32
    %v1347 = vpop.permute.xlu0 %1346
    %1348 = vrot.lane.b32.xlu0 %v410, 32
    %v1349 = vpop.permute.xlu0 %1348
    %1350 = vrot.lane.b32.xlu0 %v415, 32
    %v1351 = vpop.permute.xlu0 %1350
    %1352 = vrot.lane.b32.xlu0 %v420, 32
    %v1353 = vpop.permute.xlu0 %1352
    %1354 = vrot.lane.b32.xlu0 %v425, 32
    %v1355 = vpop.permute.xlu0 %1354
    %1356 = vrot.lane.b32.xlu0 %v430, 32
    %v1357 = vpop.permute.xlu0 %1356
    %1358 = vrot.lane.b32.xlu0 %v435, 32
    %v1359 = vpop.permute.xlu0 %1358
    %1360 = vrot.lane.b32.xlu0 %v440, 32
    %v1361 = vpop.permute.xlu0 %1360
    %1362 = vrot.lane.b32.xlu0 %v445, 32
    %v1363 = vpop.permute.xlu0 %1362
    %1364 = vrot.lane.b32.xlu0 %v450, 32
    %v1365 = vpop.permute.xlu0 %1364
    %1366 = vrot.lane.b32.xlu0 %v455, 32
    %v1367 = vpop.permute.xlu0 %1366
    %1368 = vrot.lane.b32.xlu0 %v460, 32
    %v1369 = vpop.permute.xlu0 %1368
    %1370 = vrot.lane.b32.xlu0 %v465, 32
    %v1371 = vpop.permute.xlu0 %1370
    %1372 = vrot.lane.b32.xlu0 %v470, 32
    %v1373 = vpop.permute.xlu0 %1372
    %v1374 = vsel %vm54, %v1343, 0
    %v1376 = vsel %vm54, %v1345, 0
    %v1378 = vsel %vm54, %v1347, 0
    %v1380 = vsel %vm54, %v1349, 0
    %v1382 = vsel %vm54, %v1351, 0
    %v1384 = vsel %vm54, %v1353, 0
    %v1386 = vsel %vm54, %v1355, 0
    %v1388 = vsel %vm54, %v1357, 0
    %v1390 = vsel %vm54, %v1359, 0
    %v1392 = vsel %vm54, %v1361, 0
    %v1394 = vsel %vm54, %v1363, 0
    %v1396 = vsel %vm54, %v1365, 0
    %v1398 = vsel %vm54, %v1367, 0
    %v1400 = vsel %vm54, %v1369, 0
    %v1402 = vsel %vm54, %v1371, 0
    %v1404 = vsel %vm54, %v1373, 0
    %1406 = vmatprep.subr.mxu0 0.0
    %1407 = vmatpush1.xpose.msra.mxu0 %v1374
    %1408 = vmatprep.subr.mxu0 0.0
    %1409 = vmatpush1.xpose.msra.mxu0 %v1376
    %1410 = vmatprep.subr.mxu0 0.0
    %1411 = vmatpush1.xpose.msra.mxu0 %v1378
    %1412 = vmatprep.subr.mxu0 0.0
    %1413 = vmatpush1.xpose.msra.mxu0 %v1380
    %1414 = vmatprep.subr.mxu0 0.0
    %1415 = vmatpush1.xpose.msra.mxu0 %v1382
    %1416 = vmatprep.subr.mxu0 0.0
    %1417 = vmatpush1.xpose.msra.mxu0 %v1384
    %1418 = vmatprep.subr.mxu0 0.0
    %1419 = vmatpush1.xpose.msra.mxu0 %v1386
    %1420 = vmatprep.subr.mxu0 0.0
    %1421 = vmatpush1.xpose.msra.mxu0 %v1388
    %1422 = vmatprep.subr.mxu0 0.0
    %1423 = vmatpush1.xpose.msra.mxu0 %v1390
    %1424 = vmatprep.subr.mxu0 0.0
    %1425 = vmatpush1.xpose.msra.mxu0 %v1392
    %1426 = vmatprep.subr.mxu0 0.0
    %1427 = vmatpush1.xpose.msra.mxu0 %v1394
    %1428 = vmatprep.subr.mxu0 0.0
    %1429 = vmatpush1.xpose.msra.mxu0 %v1396
    %1430 = vmatprep.subr.mxu0 0.0
    %1431 = vmatpush1.xpose.msra.mxu0 %v1398
    %1432 = vmatprep.subr.mxu0 0.0
    %1433 = vmatpush1.xpose.msra.mxu0 %v1400
    %1434 = vmatprep.subr.mxu0 0.0
    %1435 = vmatpush1.xpose.msra.mxu0 %v1402
    %1436 = vmatprep.subr.mxu0 0.0
    %1437 = vmatpush1.xpose.msra.mxu0 %v1404
    %1438 = vmatprep.subr.mxu0 0.0
    %1439 = vmatpush1.xpose.msra.mxu0 0.0
    %1440 = vmatprep.subr.mxu0 0.0
    %1441 = vmatpush1.xpose.msra.mxu0 0.0
    %1442 = vmatprep.subr.mxu0 0.0
    %1443 = vmatpush1.xpose.msra.mxu0 0.0
    %1444 = vmatprep.subr.mxu0 0.0
    %1445 = vmatpush1.xpose.msra.mxu0 0.0
    %1446 = vmatprep.subr.mxu0 0.0
    %1447 = vmatpush1.xpose.msra.mxu0 0.0
    %1448 = vmatprep.subr.mxu0 0.0
    %1449 = vmatpush1.xpose.msra.mxu0 0.0
    %1450 = vmatprep.subr.mxu0 0.0
    %1451 = vmatpush1.xpose.msra.mxu0 0.0
    %1452 = vmatprep.subr.mxu0 0.0
    %1453 = vmatpush1.xpose.msra.mxu0 0.0
    %1454 = vmatprep.subr.mxu0 0.0
    %1455 = vmatpush1.xpose.msra.mxu0 0.0
    %1456 = vmatprep.subr.mxu0 0.0
    %1457 = vmatpush1.xpose.msra.mxu0 0.0
    %1458 = vmatprep.subr.mxu0 0.0
    %1459 = vmatpush1.xpose.msra.mxu0 0.0
    %1460 = vmatprep.subr.mxu0 0.0
    %1461 = vmatpush1.xpose.msra.mxu0 0.0
    %1462 = vmatprep.subr.mxu0 0.0
    %1463 = vmatpush1.xpose.msra.mxu0 0.0
    %1464 = vmatprep.subr.mxu0 0.0
    %1465 = vmatpush1.xpose.msra.mxu0 0.0
    %1466 = vmatprep.subr.mxu0 0.0
    %1467 = vmatpush1.xpose.msra.mxu0 0.0
    %1468 = vmatprep.subr.mxu0 0.0
    %1469 = vmatpush1.xpose.msra.mxu0 0.0
    %1470 = vmatprep.mubr.f32.mxu0 0.0
    %1471 = vmatmul.mubr.f32.gmra.mrb[0].mxu0 %v1374
    %v1472 = vpop.f32.mrb[0].mxu0
    %v1473 = vadd.f32 0.0, %v1472
    %v1474 = vpop.f32.mrb[0].mxu0
    %1475 = vmatprep.mubr.f32.mxu0 0.0
    %1476 = vmatmul.mubr.f32.gmra.mrb[0].mxu0 %v1376
    %v1477 = vpop.f32.mrb[0].mxu0
    %v1478 = vadd.f32 0.0, %v1477
    %v1479 = vpop.f32.mrb[0].mxu0
    %1480 = vmatprep.mubr.f32.mxu0 0.0
    %1481 = vmatmul.mubr.f32.gmra.mrb[0].mxu0 %v1378
    %v1482 = vpop.f32.mrb[0].mxu0
    %v1483 = vadd.f32 0.0, %v1482
    %v1484 = vpop.f32.mrb[0].mxu0
    %1485 = vmatprep.mubr.f32.mxu0 0.0
    %1486 = vmatmul.mubr.f32.gmra.mrb[0].mxu0 %v1380
    %v1487 = vpop.f32.mrb[0].mxu0
    %v1488 = vadd.f32 0.0, %v1487
    %v1489 = vpop.f32.mrb[0].mxu0
    %1490 = vmatprep.mubr.f32.mxu0 0.0
    %1491 = vmatmul.mubr.f32.gmra.mrb[0].mxu0 %v1382
    %v1492 = vpop.f32.mrb[0].mxu0
    %v1493 = vadd.f32 0.0, %v1492
    %v1494 = vpop.f32.mrb[0].mxu0
    %1495 = vmatprep.mubr.f32.mxu0 0.0
    %1496 = vmatmul.mubr.f32.gmra.mrb[0].mxu0 %v1384
    %v1497 = vpop.f32.mrb[0].mxu0
    %v1498 = vadd.f32 0.0, %v1497
    %v1499 = vpop.f32.mrb[0].mxu0
    %1500 = vmatprep.mubr.f32.mxu0 0.0
    %1501 = vmatmul.mubr.f32.gmra.mrb[0].mxu0 %v1386
    %v1502 = vpop.f32.mrb[0].mxu0
    %v1503 = vadd.f32 0.0, %v1502
    %v1504 = vpop.f32.mrb[0].mxu0
    %1505 = vmatprep.mubr.f32.mxu0 0.0
    %1506 = vmatmul.mubr.f32.gmra.mrb[0].mxu0 %v1388
    %v1507 = vpop.f32.mrb[0].mxu0
    %v1508 = vadd.f32 0.0, %v1507
    %v1509 = vpop.f32.mrb[0].mxu0
    %1510 = vmatprep.mubr.f32.mxu0 0.0
    %1511 = vmatmul.mubr.f32.gmra.mrb[0].mxu0 %v1390
    %v1512 = vpop.f32.mrb[0].mxu0
    %v1513 = vadd.f32 0.0, %v1512
    %v1514 = vpop.f32.mrb[0].mxu0
    %1515 = vmatprep.mubr.f32.mxu0 0.0
    %1516 = vmatmul.mubr.f32.gmra.mrb[0].mxu0 %v1392
    %v1517 = vpop.f32.mrb[0].mxu0
    %v1518 = vadd.f32 0.0, %v1517
    %v1519 = vpop.f32.mrb[0].mxu0
    %1520 = vmatprep.mubr.f32.mxu0 0.0
    %1521 = vmatmul.mubr.f32.gmra.mrb[0].mxu0 %v1394
    %v1522 = vpop.f32.mrb[0].mxu0
    %v1523 = vadd.f32 0.0, %v1522
    %v1524 = vpop.f32.mrb[0].mxu0
    %1525 = vmatprep.mubr.f32.mxu0 0.0
    %1526 = vmatmul.mubr.f32.gmra.mrb[0].mxu0 %v1396
    %v1527 = vpop.f32.mrb[0].mxu0
    %v1528 = vadd.f32 0.0, %v1527
    %v1529 = vpop.f32.mrb[0].mxu0
    %1530 = vmatprep.mubr.f32.mxu0 0.0
    %1531 = vmatmul.mubr.f32.gmra.mrb[0].mxu0 %v1398
    %v1532 = vpop.f32.mrb[0].mxu0
    %v1533 = vadd.f32 0.0, %v1532
    %v1534 = vpop.f32.mrb[0].mxu0
    %1535 = vmatprep.mubr.f32.mxu0 0.0
    %1536 = vmatmul.mubr.f32.gmra.mrb[0].mxu0 %v1400
    %v1537 = vpop.f32.mrb[0].mxu0
    %v1538 = vadd.f32 0.0, %v1537
    %v1539 = vpop.f32.mrb[0].mxu0
    %1540 = vmatprep.mubr.f32.mxu0 0.0
    %1541 = vmatmul.mubr.f32.gmra.mrb[0].mxu0 %v1402
    %v1542 = vpop.f32.mrb[0].mxu0
    %v1543 = vadd.f32 0.0, %v1542
    %v1544 = vpop.f32.mrb[0].mxu0
    %1545 = vmatprep.mubr.f32.mxu0 0.0
    %1546 = vmatmul.mubr.f32.gmra.mrb[0].mxu0 %v1404
    %v1547 = vpop.f32.mrb[0].mxu0
    %v1548 = vadd.f32 0.0, %v1547
    %v1549 = vpop.f32.mrb[0].mxu0
    %1550 = vdwg.mxu0
    %vm1551 = vcmp.gt.f32.partialorder %v1473, %v1261
    %vm1552 = vcmp.gt.f32.partialorder %v1478, %v1262
    %vm1553 = vcmp.gt.f32.partialorder %v1483, %v1263
    %vm1554 = vcmp.gt.f32.partialorder %v1488, %v1264
    %vm1555 = vcmp.gt.f32.partialorder %v1493, %v1265
    %vm1556 = vcmp.gt.f32.partialorder %v1498, %v1266
    %vm1557 = vcmp.gt.f32.partialorder %v1503, %v1267
    %vm1558 = vcmp.gt.f32.partialorder %v1508, %v1268
    %vm1559 = vcmp.gt.f32.partialorder %v1513, %v1269
    %vm1560 = vcmp.gt.f32.partialorder %v1518, %v1270
    %vm1561 = vcmp.gt.f32.partialorder %v1523, %v1271
    %vm1562 = vcmp.gt.f32.partialorder %v1528, %v1272
    %vm1563 = vcmp.gt.f32.partialorder %v1533, %v1273
    %vm1564 = vcmp.gt.f32.partialorder %v1538, %v1274
    %vm1565 = vcmp.gt.f32.partialorder %v1543, %v1275
    %vm1566 = vcmp.gt.f32.partialorder %v1548, %v1276
    %v1567 = vsel %vm1551, 3.0, %v1277
    %v1568 = vsel %vm1552, 3.0, %v1278
    %v1569 = vsel %vm1553, 3.0, %v1279
    %v1570 = vsel %vm1554, 3.0, %v1280
    %v1571 = vsel %vm1555, 3.0, %v1281
    %v1572 = vsel %vm1556, 3.0, %v1282
    %v1573 = vsel %vm1557, 3.0, %v1283
    %v1574 = vsel %vm1558, 3.0, %v1284
    %v1575 = vsel %vm1559, 3.0, %v1285
    %v1576 = vsel %vm1560, 3.0, %v1286
    %v1577 = vsel %vm1561, 3.0, %v1287
    %v1578 = vsel %vm1562, 3.0, %v1288
    %v1579 = vsel %vm1563, 3.0, %v1289
    %v1580 = vsel %vm1564, 3.0, %v1290
    %v1581 = vsel %vm1565, 3.0, %v1291
    %v1582 = vsel %vm1566, 3.0, %v1292
    %v1583 = vmul.f32 %v1473, 1.442695
    %v1584 = vpow.pop %v1583
    %v1585 = vmul.f32 %v1478, 1.442695
    %v1586 = vpow.pop %v1585
    %v1587 = vmul.f32 %v1483, 1.442695
    %v1588 = vpow.pop %v1587
    %v1589 = vmul.f32 %v1488, 1.442695
    %v1590 = vpow.pop %v1589
    %v1591 = vmul.f32 %v1493, 1.442695
    %v1592 = vpow.pop %v1591
    %v1593 = vmul.f32 %v1498, 1.442695
    %v1594 = vpow.pop %v1593
    %v1595 = vmul.f32 %v1503, 1.442695
    %v1596 = vpow.pop %v1595
    %v1597 = vmul.f32 %v1508, 1.442695
    %v1598 = vpow.pop %v1597
    %v1599 = vmul.f32 %v1513, 1.442695
    %v1600 = vpow.pop %v1599
    %v1601 = vmul.f32 %v1518, 1.442695
    %v1602 = vpow.pop %v1601
    %v1603 = vmul.f32 %v1523, 1.442695
    %v1604 = vpow.pop %v1603
    %v1605 = vmul.f32 %v1528, 1.442695
    %v1606 = vpow.pop %v1605
    %v1607 = vmul.f32 %v1533, 1.442695
    %v1608 = vpow.pop %v1607
    %v1609 = vmul.f32 %v1538, 1.442695
    %v1610 = vpow.pop %v1609
    %v1611 = vmul.f32 %v1543, 1.442695
    %v1612 = vpow.pop %v1611
    %v1613 = vmul.f32 %v1548, 1.442695
    %v1614 = vpow.pop %v1613
    %s1615 = scalar_lea.vmem [#allocation2], 384
    %1616 = vst [vmem:[%s1615] sm:$0xff] %v1584
    %1617 = vst [vmem:[%s1615 + $0x8] sm:$0xff] %v1586
    %1618 = vst [vmem:[%s1615 + $0x10] sm:$0xff] %v1588
    %1619 = vst [vmem:[%s1615 + $0x18] sm:$0xff] %v1590
    %1620 = vst [vmem:[%s1615 + $0x20] sm:$0xff] %v1592
    %1621 = vst [vmem:[%s1615 + $0x28] sm:$0xff] %v1594
    %1622 = vst [vmem:[%s1615 + $0x30] sm:$0xff] %v1596
    %1623 = vst [vmem:[%s1615 + $0x38] sm:$0xff] %v1598
    %1624 = vst [vmem:[%s1615 + $0x40] sm:$0xff] %v1600
    %1625 = vst [vmem:[%s1615 + $0x48] sm:$0xff] %v1602
    %1626 = vst [vmem:[%s1615 + $0x50] sm:$0xff] %v1604
    %1627 = vst [vmem:[%s1615 + $0x58] sm:$0xff] %v1606
    %1628 = vst [vmem:[%s1615 + $0x60] sm:$0xff] %v1608
    %1629 = vst [vmem:[%s1615 + $0x68] sm:$0xff] %v1610
    %1630 = vst [vmem:[%s1615 + $0x70] sm:$0xff] %v1612
    %1631 = vst [vmem:[%s1615 + $0x78] sm:$0xff] %v1614
    %v1632 = vld [vmem:[#allocation2] sm:$0xff]
    %v1633 = vld [vmem:[#allocation2 + $0x8] sm:$0xff]
    %v1634 = vld [vmem:[#allocation2 + $0x10] sm:$0xff]
    %v1635 = vld [vmem:[#allocation2 + $0x18] sm:$0xff]
    %v1636 = vld [vmem:[#allocation2 + $0x20] sm:$0xff]
    %v1637 = vld [vmem:[#allocation2 + $0x28] sm:$0xff]
    %v1638 = vld [vmem:[#allocation2 + $0x30] sm:$0xff]
    %v1639 = vld [vmem:[#allocation2 + $0x38] sm:$0xff]
    %v1640 = vld [vmem:[#allocation2 + $0x40] sm:$0xff]
    %v1641 = vld [vmem:[#allocation2 + $0x48] sm:$0xff]
    %v1642 = vld [vmem:[#allocation2 + $0x50] sm:$0xff]
    %v1643 = vld [vmem:[#allocation2 + $0x58] sm:$0xff]
    %v1644 = vld [vmem:[#allocation2 + $0x60] sm:$0xff]
    %v1645 = vld [vmem:[#allocation2 + $0x68] sm:$0xff]
    %v1646 = vld [vmem:[#allocation2 + $0x70] sm:$0xff]
    %v1647 = vld [vmem:[#allocation2 + $0x78] sm:$0xff]
    %v1648 = vld [vmem:[%s1019] sm:$0xff]
    %v1649 = vld [vmem:[%s1019 + $0x8] sm:$0xff]
    %v1650 = vld [vmem:[%s1019 + $0x10] sm:$0xff]
    %v1651 = vld [vmem:[%s1019 + $0x18] sm:$0xff]
    %v1652 = vld [vmem:[%s1019 + $0x20] sm:$0xff]
    %v1653 = vld [vmem:[%s1019 + $0x28] sm:$0xff]
    %v1654 = vld [vmem:[%s1019 + $0x30] sm:$0xff]
    %v1655 = vld [vmem:[%s1019 + $0x38] sm:$0xff]
    %v1656 = vld [vmem:[%s1019 + $0x40] sm:$0xff]
    %v1657 = vld [vmem:[%s1019 + $0x48] sm:$0xff]
    %v1658 = vld [vmem:[%s1019 + $0x50] sm:$0xff]
    %v1659 = vld [vmem:[%s1019 + $0x58] sm:$0xff]
    %v1660 = vld [vmem:[%s1019 + $0x60] sm:$0xff]
    %v1661 = vld [vmem:[%s1019 + $0x68] sm:$0xff]
    %v1662 = vld [vmem:[%s1019 + $0x70] sm:$0xff]
    %v1663 = vld [vmem:[%s1019 + $0x78] sm:$0xff]
    %v1664 = vadd.f32 %v1632, %v1648
    %v1665 = vadd.f32 %v1633, %v1649
    %v1666 = vadd.f32 %v1634, %v1650
    %v1667 = vadd.f32 %v1635, %v1651
    %v1668 = vadd.f32 %v1636, %v1652
    %v1669 = vadd.f32 %v1637, %v1653
    %v1670 = vadd.f32 %v1638, %v1654
    %v1671 = vadd.f32 %v1639, %v1655
    %v1672 = vadd.f32 %v1640, %v1656
    %v1673 = vadd.f32 %v1641, %v1657
    %v1674 = vadd.f32 %v1642, %v1658
    %v1675 = vadd.f32 %v1643, %v1659
    %v1676 = vadd.f32 %v1644, %v1660
    %v1677 = vadd.f32 %v1645, %v1661
    %v1678 = vadd.f32 %v1646, %v1662
    %v1679 = vadd.f32 %v1647, %v1663
    %v1680 = vld [vmem:[%s1325] sm:$0xff]
    %v1681 = vld [vmem:[%s1325 + $0x8] sm:$0xff]
    %v1682 = vld [vmem:[%s1325 + $0x10] sm:$0xff]
    %v1683 = vld [vmem:[%s1325 + $0x18] sm:$0xff]
    %v1684 = vld [vmem:[%s1325 + $0x20] sm:$0xff]
    %v1685 = vld [vmem:[%s1325 + $0x28] sm:$0xff]
    %v1686 = vld [vmem:[%s1325 + $0x30] sm:$0xff]
    %v1687 = vld [vmem:[%s1325 + $0x38] sm:$0xff]
    %v1688 = vld [vmem:[%s1325 + $0x40] sm:$0xff]
    %v1689 = vld [vmem:[%s1325 + $0x48] sm:$0xff]
    %v1690 = vld [vmem:[%s1325 + $0x50] sm:$0xff]
    %v1691 = vld [vmem:[%s1325 + $0x58] sm:$0xff]
    %v1692 = vld [vmem:[%s1325 + $0x60] sm:$0xff]
    %v1693 = vld [vmem:[%s1325 + $0x68] sm:$0xff]
    %v1694 = vld [vmem:[%s1325 + $0x70] sm:$0xff]
    %v1695 = vld [vmem:[%s1325 + $0x78] sm:$0xff]
    %v1696 = vadd.f32 %v1664, %v1680
    %v1697 = vadd.f32 %v1665, %v1681
    %v1698 = vadd.f32 %v1666, %v1682
    %v1699 = vadd.f32 %v1667, %v1683
    %v1700 = vadd.f32 %v1668, %v1684
    %v1701 = vadd.f32 %v1669, %v1685
    %v1702 = vadd.f32 %v1670, %v1686
    %v1703 = vadd.f32 %v1671, %v1687
    %v1704 = vadd.f32 %v1672, %v1688
    %v1705 = vadd.f32 %v1673, %v1689
    %v1706 = vadd.f32 %v1674, %v1690
    %v1707 = vadd.f32 %v1675, %v1691
    %v1708 = vadd.f32 %v1676, %v1692
    %v1709 = vadd.f32 %v1677, %v1693
    %v1710 = vadd.f32 %v1678, %v1694
    %v1711 = vadd.f32 %v1679, %v1695
    %v1712 = vld [vmem:[%s1615] sm:$0xff]
    %v1713 = vld [vmem:[%s1615 + $0x8] sm:$0xff]
    %v1714 = vld [vmem:[%s1615 + $0x10] sm:$0xff]
    %v1715 = vld [vmem:[%s1615 + $0x18] sm:$0xff]
    %v1716 = vld [vmem:[%s1615 + $0x20] sm:$0xff]
    %v1717 = vld [vmem:[%s1615 + $0x28] sm:$0xff]
    %v1718 = vld [vmem:[%s1615 + $0x30] sm:$0xff]
    %v1719 = vld [vmem:[%s1615 + $0x38] sm:$0xff]
    %v1720 = vld [vmem:[%s1615 + $0x40] sm:$0xff]
    %v1721 = vld [vmem:[%s1615 + $0x48] sm:$0xff]
    %v1722 = vld [vmem:[%s1615 + $0x50] sm:$0xff]
    %v1723 = vld [vmem:[%s1615 + $0x58] sm:$0xff]
    %v1724 = vld [vmem:[%s1615 + $0x60] sm:$0xff]
    %v1725 = vld [vmem:[%s1615 + $0x68] sm:$0xff]
    %v1726 = vld [vmem:[%s1615 + $0x70] sm:$0xff]
    %v1727 = vld [vmem:[%s1615 + $0x78] sm:$0xff]
    %v1728 = vadd.f32 %v1696, %v1712
    %v1729 = vadd.f32 %v1697, %v1713
    %v1730 = vadd.f32 %v1698, %v1714
    %v1731 = vadd.f32 %v1699, %v1715
    %v1732 = vadd.f32 %v1700, %v1716
    %v1733 = vadd.f32 %v1701, %v1717
    %v1734 = vadd.f32 %v1702, %v1718
    %v1735 = vadd.f32 %v1703, %v1719
    %v1736 = vadd.f32 %v1704, %v1720
    %v1737 = vadd.f32 %v1705, %v1721
    %v1738 = vadd.f32 %v1706, %v1722
    %v1739 = vadd.f32 %v1707, %v1723
    %v1740 = vadd.f32 %v1708, %v1724
    %v1741 = vadd.f32 %v1709, %v1725
    %v1742 = vadd.f32 %v1710, %v1726
    %v1743 = vadd.f32 %v1711, %v1727
    %v1744 = vrcp.pop %v1728
    %v1745 = vrcp.pop %v1729
    %v1746 = vrcp.pop %v1730
    %v1747 = vrcp.pop %v1731
    %v1748 = vrcp.pop %v1732
    %v1749 = vrcp.pop %v1733
    %v1750 = vrcp.pop %v1734
    %v1751 = vrcp.pop %v1735
    %v1752 = vrcp.pop %v1736
    %v1753 = vrcp.pop %v1737
    %v1754 = vrcp.pop %v1738
    %v1755 = vrcp.pop %v1739
    %v1756 = vrcp.pop %v1740
    %v1757 = vrcp.pop %v1741
    %v1758 = vrcp.pop %v1742
    %v1759 = vrcp.pop %v1743
    %v1760 = vadd.f32 %v1567, 1.0
    %v1761 = vadd.f32 %v1568, 1.0
    %v1762 = vadd.f32 %v1569, 1.0
    %v1763 = vadd.f32 %v1570, 1.0
    %v1764 = vadd.f32 %v1571, 1.0
    %v1765 = vadd.f32 %v1572, 1.0
    %v1766 = vadd.f32 %v1573, 1.0
    %v1767 = vadd.f32 %v1574, 1.0
    %v1768 = vadd.f32 %v1575, 1.0
    %v1769 = vadd.f32 %v1576, 1.0
    %v1770 = vadd.f32 %v1577, 1.0
    %v1771 = vadd.f32 %v1578, 1.0
    %v1772 = vadd.f32 %v1579, 1.0
    %v1773 = vadd.f32 %v1580, 1.0
    %v1774 = vadd.f32 %v1581, 1.0
    %v1775 = vadd.f32 %v1582, 1.0
    %v1776 = vmul.f32 %v1760, %v473
    %v1777 = vmul.f32 %v1761, %v474
    %v1778 = vmul.f32 %v1762, %v475
    %v1779 = vmul.f32 %v1763, %v476
    %v1780 = vmul.f32 %v1764, %v477
    %v1781 = vmul.f32 %v1765, %v478
    %v1782 = vmul.f32 %v1766, %v479
    %v1783 = vmul.f32 %v1767, %v480
    %v1784 = vmul.f32 %v1768, %v481
    %v1785 = vmul.f32 %v1769, %v482
    %v1786 = vmul.f32 %v1770, %v483
    %v1787 = vmul.f32 %v1771, %v484
    %v1788 = vmul.f32 %v1772, %v485
    %v1789 = vmul.f32 %v1773, %v486
    %v1790 = vmul.f32 %v1774, %v487
    %v1791 = vmul.f32 %v1775, %v488
    %vm1792 = vcmp.eq.f32.partialorder %v1776, 1.0
    %vm1793 = vcmp.eq.f32.partialorder %v1777, 1.0
    %vm1794 = vcmp.eq.f32.partialorder %v1778, 1.0
    %vm1795 = vcmp.eq.f32.partialorder %v1779, 1.0
    %vm1796 = vcmp.eq.f32.partialorder %v1780, 1.0
    %vm1797 = vcmp.eq.f32.partialorder %v1781, 1.0
    %vm1798 = vcmp.eq.f32.partialorder %v1782, 1.0
    %vm1799 = vcmp.eq.f32.partialorder %v1783, 1.0
    %vm1800 = vcmp.eq.f32.partialorder %v1784, 1.0
    %vm1801 = vcmp.eq.f32.partialorder %v1785, 1.0
    %vm1802 = vcmp.eq.f32.partialorder %v1786, 1.0
    %vm1803 = vcmp.eq.f32.partialorder %v1787, 1.0
    %vm1804 = vcmp.eq.f32.partialorder %v1788, 1.0
    %vm1805 = vcmp.eq.f32.partialorder %v1789, 1.0
    %vm1806 = vcmp.eq.f32.partialorder %v1790, 1.0
    %vm1807 = vcmp.eq.f32.partialorder %v1791, 1.0
    %v1808 = vsel %vm1792, 1, 0
    %v1809 = vsel %vm1793, 1, 0
    %v1810 = vsel %vm1794, 1, 0
    %v1811 = vsel %vm1795, 1, 0
    %v1812 = vsel %vm1796, 1, 0
    %v1813 = vsel %vm1797, 1, 0
    %v1814 = vsel %vm1798, 1, 0
    %v1815 = vsel %vm1799, 1, 0
    %v1816 = vsel %vm1800, 1, 0
    %v1817 = vsel %vm1801, 1, 0
    %v1818 = vsel %vm1802, 1, 0
    %v1819 = vsel %vm1803, 1, 0
    %v1820 = vsel %vm1804, 1, 0
    %v1821 = vsel %vm1805, 1, 0
    %v1822 = vsel %vm1806, 1, 0
    %v1823 = vsel %vm1807, 1, 0
    %v1824 = vcvt.s32.f32 %v1808
    %v1825 = vcvt.s32.f32 %v1809
    %v1826 = vcvt.s32.f32 %v1810
    %v1827 = vcvt.s32.f32 %v1811
    %v1828 = vcvt.s32.f32 %v1812
    %v1829 = vcvt.s32.f32 %v1813
    %v1830 = vcvt.s32.f32 %v1814
    %v1831 = vcvt.s32.f32 %v1815
    %v1832 = vcvt.s32.f32 %v1816
    %v1833 = vcvt.s32.f32 %v1817
    %v1834 = vcvt.s32.f32 %v1818
    %v1835 = vcvt.s32.f32 %v1819
    %v1836 = vcvt.s32.f32 %v1820
    %v1837 = vcvt.s32.f32 %v1821
    %v1838 = vcvt.s32.f32 %v1822
    %v1839 = vcvt.s32.f32 %v1823
    %v1840 = vmul.f32 %v1632, %v1744
    %v1841 = vmul.f32 %v1633, %v1745
    %v1842 = vmul.f32 %v1634, %v1746
    %v1843 = vmul.f32 %v1635, %v1747
    %v1844 = vmul.f32 %v1636, %v1748
    %v1845 = vmul.f32 %v1637, %v1749
    %v1846 = vmul.f32 %v1638, %v1750
    %v1847 = vmul.f32 %v1639, %v1751
    %v1848 = vmul.f32 %v1640, %v1752
    %v1849 = vmul.f32 %v1641, %v1753
    %v1850 = vmul.f32 %v1642, %v1754
    %v1851 = vmul.f32 %v1643, %v1755
    %v1852 = vmul.f32 %v1644, %v1756
    %v1853 = vmul.f32 %v1645, %v1757
    %v1854 = vmul.f32 %v1646, %v1758
    %v1855 = vmul.f32 %v1647, %v1759
    %v1856 = vmul.f32 %v1824, %v1840
    %v1857 = vmul.f32 %v1825, %v1841
    %v1858 = vmul.f32 %v1826, %v1842
    %v1859 = vmul.f32 %v1827, %v1843
    %v1860 = vmul.f32 %v1828, %v1844
    %v1861 = vmul.f32 %v1829, %v1845
    %v1862 = vmul.f32 %v1830, %v1846
    %v1863 = vmul.f32 %v1831, %v1847
    %v1864 = vmul.f32 %v1832, %v1848
    %v1865 = vmul.f32 %v1833, %v1849
    %v1866 = vmul.f32 %v1834, %v1850
    %v1867 = vmul.f32 %v1835, %v1851
    %v1868 = vmul.f32 %v1836, %v1852
    %v1869 = vmul.f32 %v1837, %v1853
    %v1870 = vmul.f32 %v1838, %v1854
    %v1871 = vmul.f32 %v1839, %v1855
    %1872 = vmatprep.subr.mxu0 0.0
    %1873 = vmatpush1.xpose.msra.mxu0 %v1856
    %1874 = vmatprep.subr.mxu0 0.0
    %1875 = vmatpush1.xpose.msra.mxu0 %v1857
    %1876 = vmatprep.subr.mxu0 0.0
    %1877 = vmatpush1.xpose.msra.mxu0 %v1858
    %1878 = vmatprep.subr.mxu0 0.0
    %1879 = vmatpush1.xpose.msra.mxu0 %v1859
    %1880 = vmatprep.subr.mxu0 0.0
    %1881 = vmatpush1.xpose.msra.mxu0 %v1860
    %1882 = vmatprep.subr.mxu0 0.0
    %1883 = vmatpush1.xpose.msra.mxu0 %v1861
    %1884 = vmatprep.subr.mxu0 0.0
    %1885 = vmatpush1.xpose.msra.mxu0 %v1862
    %1886 = vmatprep.subr.mxu0 0.0
    %1887 = vmatpush1.xpose.msra.mxu0 %v1863
    %1888 = vmatprep.subr.mxu0 0.0
    %1889 = vmatpush1.xpose.msra.mxu0 %v1864
    %1890 = vmatprep.subr.mxu0 0.0
    %1891 = vmatpush1.xpose.msra.mxu0 %v1865
    %1892 = vmatprep.subr.mxu0 0.0
    %1893 = vmatpush1.xpose.msra.mxu0 %v1866
    %1894 = vmatprep.subr.mxu0 0.0
    %1895 = vmatpush1.xpose.msra.mxu0 %v1867
    %1896 = vmatprep.subr.mxu0 0.0
    %1897 = vmatpush1.xpose.msra.mxu0 %v1868
    %1898 = vmatprep.subr.mxu0 0.0
    %1899 = vmatpush1.xpose.msra.mxu0 %v1869
    %1900 = vmatprep.subr.mxu0 0.0
    %1901 = vmatpush1.xpose.msra.mxu0 %v1870
    %1902 = vmatprep.subr.mxu0 0.0
    %1903 = vmatpush1.xpose.msra.mxu0 %v1871
    %1904 = vmatprep.subr.mxu0 0.0
    %1905 = vmatpush1.xpose.msra.mxu0 0.0
    %1906 = vmatprep.subr.mxu0 0.0
    %1907 = vmatpush1.xpose.msra.mxu0 0.0
    %1908 = vmatprep.subr.mxu0 0.0
    %1909 = vmatpush1.xpose.msra.mxu0 0.0
    %1910 = vmatprep.subr.mxu0 0.0
    %1911 = vmatpush1.xpose.msra.mxu0 0.0
    %1912 = vmatprep.subr.mxu0 0.0
    %1913 = vmatpush1.xpose.msra.mxu0 0.0
    %1914 = vmatprep.subr.mxu0 0.0
    %1915 = vmatpush1.xpose.msra.mxu0 0.0
    %1916 = vmatprep.subr.mxu0 0.0
    %1917 = vmatpush1.xpose.msra.mxu0 0.0
    %1918 = vmatprep.subr.mxu0 0.0
    %1919 = vmatpush1.xpose.msra.mxu0 0.0
    %1920 = vmatprep.subr.mxu0 0.0
    %1921 = vmatpush1.xpose.msra.mxu0 0.0
    %1922 = vmatprep.subr.mxu0 0.0
    %1923 = vmatpush1.xpose.msra.mxu0 0.0
    %1924 = vmatprep.subr.mxu0 0.0
    %1925 = vmatpush1.xpose.msra.mxu0 0.0
    %1926 = vmatprep.subr.mxu0 0.0
    %1927 = vmatpush1.xpose.msra.mxu0 0.0
    %1928 = vmatprep.subr.mxu0 0.0
    %1929 = vmatpush1.xpose.msra.mxu0 0.0
    %1930 = vmatprep.subr.mxu0 0.0
    %1931 = vmatpush1.xpose.msra.mxu0 0.0
    %1932 = vmatprep.subr.mxu0 0.0
    %1933 = vmatpush1.xpose.msra.mxu0 0.0
    %1934 = vmatprep.subr.mxu0 0.0
    %1935 = vmatpush1.xpose.msra.mxu0 0.0
    %1936 = vmatprep.mubr.f32.mxu0 0.0
    %1937 = vmatmul.mubr.f32.gmra.mrb[0].mxu0 1.0
    %v1938 = vpop.f32.mrb[0].mxu0
    %v1939 = vadd.f32 0.0, %v1938
    %v1940 = vpop.f32.mrb[0].mxu0
    %1941 = vdwg.mxu0
    %vm1942 = vcmp.eq.f32.partialorder %v1939, 0.0
    %v1943 = vsel %vm1942, 1.0, %v1939
    %v1944 = vrcp.pop %v1943
    %v1945 = vlaneseq
    %v1946 = vshrl.u32 %v1945, 7
    %v1947 = vsub.s32 0, %v1946
    %v1948 = vrot.slane %v1944, %v1947
    %v1949 = vmul.f32 %v1856, %v1948
    %v1950 = vmul.f32 %v1857, %v1948
    %v1951 = vmul.f32 %v1858, %v1948
    %v1952 = vmul.f32 %v1859, %v1948
    %v1953 = vmul.f32 %v1860, %v1948
    %v1954 = vmul.f32 %v1861, %v1948
    %v1955 = vmul.f32 %v1862, %v1948
    %v1956 = vmul.f32 %v1863, %v1948
    %v1957 = vmul.f32 %v1864, %v1948
    %v1958 = vmul.f32 %v1865, %v1948
    %v1959 = vmul.f32 %v1866, %v1948
    %v1960 = vmul.f32 %v1867, %v1948
    %v1961 = vmul.f32 %v1868, %v1948
    %v1962 = vmul.f32 %v1869, %v1948
    %v1963 = vmul.f32 %v1870, %v1948
    %v1964 = vmul.f32 %v1871, %v1948
    %v1965 = vmul.f32 %v395, 0.3
    %v1966 = vmul.f32 %v400, 0.3
    %v1967 = vmul.f32 %v405, 0.3
    %v1968 = vmul.f32 %v410, 0.3
    %v1969 = vmul.f32 %v415, 0.3
    %v1970 = vmul.f32 %v420, 0.3
    %v1971 = vmul.f32 %v425, 0.3
    %v1972 = vmul.f32 %v430, 0.3
    %v1973 = vmul.f32 %v435, 0.3
    %v1974 = vmul.f32 %v440, 0.3
    %v1975 = vmul.f32 %v445, 0.3
    %v1976 = vmul.f32 %v450, 0.3
    %v1977 = vmul.f32 %v455, 0.3
    %v1978 = vmul.f32 %v460, 0.3
    %v1979 = vmul.f32 %v465, 0.3
    %v1980 = vmul.f32 %v470, 0.3
    %1981 = vmatprep.subr.mxu0 0.0
    %1982 = vmatpush1.msra.mxu0 %v395
    %1983 = vmatprep.subr.mxu0 0.0
    %1984 = vmatpush1.msra.mxu0 %v400
    %1985 = vmatprep.subr.mxu0 0.0
    %1986 = vmatpush1.msra.mxu0 %v405
    %1987 = vmatprep.subr.mxu0 0.0
    %1988 = vmatpush1.msra.mxu0 %v410
    %1989 = vmatprep.subr.mxu0 0.0
    %1990 = vmatpush1.msra.mxu0 %v415
    %1991 = vmatprep.subr.mxu0 0.0
    %1992 = vmatpush1.msra.mxu0 %v420
    %1993 = vmatprep.subr.mxu0 0.0
    %1994 = vmatpush1.msra.mxu0 %v425
    %1995 = vmatprep.subr.mxu0 0.0
    %1996 = vmatpush1.msra.mxu0 %v430
    %1997 = vmatprep.subr.mxu0 0.0
    %1998 = vmatpush1.msra.mxu0 %v435
    %1999 = vmatprep.subr.mxu0 0.0
    %2000 = vmatpush1.msra.mxu0 %v440
    %2001 = vmatprep.subr.mxu0 0.0
    %2002 = vmatpush1.msra.mxu0 %v445
    %2003 = vmatprep.subr.mxu0 0.0
    %2004 = vmatpush1.msra.mxu0 %v450
    %2005 = vmatprep.subr.mxu0 0.0
    %2006 = vmatpush1.msra.mxu0 %v455
    %2007 = vmatprep.subr.mxu0 0.0
    %2008 = vmatpush1.msra.mxu0 %v460
    %2009 = vmatprep.subr.mxu0 0.0
    %2010 = vmatpush1.msra.mxu0 %v465
    %2011 = vmatprep.subr.mxu0 0.0
    %2012 = vmatpush1.msra.mxu0 %v470
    %2013 = vmatprep.subr.mxu0 0.0
    %2014 = vmatpush1.msra.mxu0 0.0
    %2015 = vmatprep.subr.mxu0 0.0
    %2016 = vmatpush1.msra.mxu0 0.0
    %2017 = vmatprep.subr.mxu0 0.0
    %2018 = vmatpush1.msra.mxu0 0.0
    %2019 = vmatprep.subr.mxu0 0.0
    %2020 = vmatpush1.msra.mxu0 0.0
    %2021 = vmatprep.subr.mxu0 0.0
    %2022 = vmatpush1.msra.mxu0 0.0
    %2023 = vmatprep.subr.mxu0 0.0
    %2024 = vmatpush1.msra.mxu0 0.0
    %2025 = vmatprep.subr.mxu0 0.0
    %2026 = vmatpush1.msra.mxu0 0.0
    %2027 = vmatprep.subr.mxu0 0.0
    %2028 = vmatpush1.msra.mxu0 0.0
    %2029 = vmatprep.subr.mxu0 0.0
    %2030 = vmatpush1.msra.mxu0 0.0
    %2031 = vmatprep.subr.mxu0 0.0
    %2032 = vmatpush1.msra.mxu0 0.0
    %2033 = vmatprep.subr.mxu0 0.0
    %2034 = vmatpush1.msra.mxu0 0.0
    %2035 = vmatprep.subr.mxu0 0.0
    %2036 = vmatpush1.msra.mxu0 0.0
    %2037 = vmatprep.subr.mxu0 0.0
    %2038 = vmatpush1.msra.mxu0 0.0
    %2039 = vmatprep.subr.mxu0 0.0
    %2040 = vmatpush1.msra.mxu0 0.0
    %2041 = vmatprep.subr.mxu0 0.0
    %2042 = vmatpush1.msra.mxu0 0.0
    %2043 = vmatprep.subr.mxu0 0.0
    %2044 = vmatpush1.msra.mxu0 0.0
    %2045 = vmatprep.mubr.f32.mxu0 0.0
    %2046 = vmatmul.mubr.f32.gmra.mrb[0].mxu0 %v1949
    %v2047 = vpop.f32.mrb[0].mxu0
    %v2048 = vadd.f32 0.0, %v2047
    %v2049 = vpop.f32.mrb[0].mxu0
    %2050 = vmatprep.mubr.f32.mxu0 0.0
    %2051 = vmatmul.mubr.f32.gmra.mrb[0].mxu0 %v1950
    %v2052 = vpop.f32.mrb[0].mxu0
    %v2053 = vadd.f32 0.0, %v2052
    %v2054 = vpop.f32.mrb[0].mxu0
    %2055 = vmatprep.mubr.f32.mxu0 0.0
    %2056 = vmatmul.mubr.f32.gmra.mrb[0].mxu0 %v1951
    %v2057 = vpop.f32.mrb[0].mxu0
    %v2058 = vadd.f32 0.0, %v2057
    %v2059 = vpop.f32.mrb[0].mxu0
    %2060 = vmatprep.mubr.f32.mxu0 0.0
    %2061 = vmatmul.mubr.f32.gmra.mrb[0].mxu0 %v1952
    %v2062 = vpop.f32.mrb[0].mxu0
    %v2063 = vadd.f32 0.0, %v2062
    %v2064 = vpop.f32.mrb[0].mxu0
    %2065 = vmatprep.mubr.f32.mxu0 0.0
    %2066 = vmatmul.mubr.f32.gmra.mrb[0].mxu0 %v1953
    %v2067 = vpop.f32.mrb[0].mxu0
    %v2068 = vadd.f32 0.0, %v2067
    %v2069 = vpop.f32.mrb[0].mxu0
    %2070 = vmatprep.mubr.f32.mxu0 0.0
    %2071 = vmatmul.mubr.f32.gmra.mrb[0].mxu0 %v1954
    %v2072 = vpop.f32.mrb[0].mxu0
    %v2073 = vadd.f32 0.0, %v2072
    %v2074 = vpop.f32.mrb[0].mxu0
    %2075 = vmatprep.mubr.f32.mxu0 0.0
    %2076 = vmatmul.mubr.f32.gmra.mrb[0].mxu0 %v1955
    %v2077 = vpop.f32.mrb[0].mxu0
    %v2078 = vadd.f32 0.0, %v2077
    %v2079 = vpop.f32.mrb[0].mxu0
    %2080 = vmatprep.mubr.f32.mxu0 0.0
    %2081 = vmatmul.mubr.f32.gmra.mrb[0].mxu0 %v1956
    %v2082 = vpop.f32.mrb[0].mxu0
    %v2083 = vadd.f32 0.0, %v2082
    %v2084 = vpop.f32.mrb[0].mxu0
    %2085 = vmatprep.mubr.f32.mxu0 0.0
    %2086 = vmatmul.mubr.f32.gmra.mrb[0].mxu0 %v1957
    %v2087 = vpop.f32.mrb[0].mxu0
    %v2088 = vadd.f32 0.0, %v2087
    %v2089 = vpop.f32.mrb[0].mxu0
    %2090 = vmatprep.mubr.f32.mxu0 0.0
    %2091 = vmatmul.mubr.f32.gmra.mrb[0].mxu0 %v1958
    %v2092 = vpop.f32.mrb[0].mxu0
    %v2093 = vadd.f32 0.0, %v2092
    %v2094 = vpop.f32.mrb[0].mxu0
    %2095 = vmatprep.mubr.f32.mxu0 0.0
    %2096 = vmatmul.mubr.f32.gmra.mrb[0].mxu0 %v1959
    %v2097 = vpop.f32.mrb[0].mxu0
    %v2098 = vadd.f32 0.0, %v2097
    %v2099 = vpop.f32.mrb[0].mxu0
    %2100 = vmatprep.mubr.f32.mxu0 0.0
    %2101 = vmatmul.mubr.f32.gmra.mrb[0].mxu0 %v1960
    %v2102 = vpop.f32.mrb[0].mxu0
    %v2103 = vadd.f32 0.0, %v2102
    %v2104 = vpop.f32.mrb[0].mxu0
    %2105 = vmatprep.mubr.f32.mxu0 0.0
    %2106 = vmatmul.mubr.f32.gmra.mrb[0].mxu0 %v1961
    %v2107 = vpop.f32.mrb[0].mxu0
    %v2108 = vadd.f32 0.0, %v2107
    %v2109 = vpop.f32.mrb[0].mxu0
    %2110 = vmatprep.mubr.f32.mxu0 0.0
    %2111 = vmatmul.mubr.f32.gmra.mrb[0].mxu0 %v1962
    %v2112 = vpop.f32.mrb[0].mxu0
    %v2113 = vadd.f32 0.0, %v2112
    %v2114 = vpop.f32.mrb[0].mxu0
    %2115 = vmatprep.mubr.f32.mxu0 0.0
    %2116 = vmatmul.mubr.f32.gmra.mrb[0].mxu0 %v1963
    %v2117 = vpop.f32.mrb[0].mxu0
    %v2118 = vadd.f32 0.0, %v2117
    %v2119 = vpop.f32.mrb[0].mxu0
    %2120 = vmatprep.mubr.f32.mxu0 0.0
    %2121 = vmatmul.mubr.f32.gmra.mrb[0].mxu0 %v1964
    %v2122 = vpop.f32.mrb[0].mxu0
    %v2123 = vadd.f32 0.0, %v2122
    %v2124 = vpop.f32.mrb[0].mxu0
    %2125 = vdwg.mxu0
    %v2126 = vmul.f32 %v2048, 0.7
    %v2127 = vmul.f32 %v2053, 0.7
    %v2128 = vmul.f32 %v2058, 0.7
    %v2129 = vmul.f32 %v2063, 0.7
    %v2130 = vmul.f32 %v2068, 0.7
    %v2131 = vmul.f32 %v2073, 0.7
    %v2132 = vmul.f32 %v2078, 0.7
    %v2133 = vmul.f32 %v2083, 0.7
    %v2134 = vmul.f32 %v2088, 0.7
    %v2135 = vmul.f32 %v2093, 0.7
    %v2136 = vmul.f32 %v2098, 0.7
    %v2137 = vmul.f32 %v2103, 0.7
    %v2138 = vmul.f32 %v2108, 0.7
    %v2139 = vmul.f32 %v2113, 0.7
    %v2140 = vmul.f32 %v2118, 0.7
    %v2141 = vmul.f32 %v2123, 0.7
    %v2142 = vadd.f32 %v1965, %v2126
    %v2143 = vadd.f32 %v1966, %v2127
    %v2144 = vadd.f32 %v1967, %v2128
    %v2145 = vadd.f32 %v1968, %v2129
    %v2146 = vadd.f32 %v1969, %v2130
    %v2147 = vadd.f32 %v1970, %v2131
    %v2148 = vadd.f32 %v1971, %v2132
    %v2149 = vadd.f32 %v1972, %v2133
    %v2150 = vadd.f32 %v1973, %v2134
    %v2151 = vadd.f32 %v1974, %v2135
    %v2152 = vadd.f32 %v1975, %v2136
    %v2153 = vadd.f32 %v1976, %v2137
    %v2154 = vadd.f32 %v1977, %v2138
    %v2155 = vadd.f32 %v1978, %v2139
    %v2156 = vadd.f32 %v1979, %v2140
    %v2157 = vadd.f32 %v1980, %v2141
    %2158 = vst.msk [vmem:[#allocation3] sm:$0xff] %vm54, %v2142
    %2159 = vst.msk [vmem:[#allocation3 + $0x8] sm:$0xff] %vm54, %v2143
    %2160 = vst.msk [vmem:[#allocation3 + $0x10] sm:$0xff] %vm54, %v2144
    %2161 = vst.msk [vmem:[#allocation3 + $0x18] sm:$0xff] %vm54, %v2145
    %2162 = vst.msk [vmem:[#allocation3 + $0x20] sm:$0xff] %vm54, %v2146
    %2163 = vst.msk [vmem:[#allocation3 + $0x28] sm:$0xff] %vm54, %v2147
    %2164 = vst.msk [vmem:[#allocation3 + $0x30] sm:$0xff] %vm54, %v2148
    %2165 = vst.msk [vmem:[#allocation3 + $0x38] sm:$0xff] %vm54, %v2149
    %2166 = vst.msk [vmem:[#allocation3 + $0x40] sm:$0xff] %vm54, %v2150
    %2167 = vst.msk [vmem:[#allocation3 + $0x48] sm:$0xff] %vm54, %v2151
    %2168 = vst.msk [vmem:[#allocation3 + $0x50] sm:$0xff] %vm54, %v2152
    %2169 = vst.msk [vmem:[#allocation3 + $0x58] sm:$0xff] %vm54, %v2153
    %2170 = vst.msk [vmem:[#allocation3 + $0x60] sm:$0xff] %vm54, %v2154
    %2171 = vst.msk [vmem:[#allocation3 + $0x68] sm:$0xff] %vm54, %v2155
    %2172 = vst.msk [vmem:[#allocation3 + $0x70] sm:$0xff] %vm54, %v2156
    %2173 = vst.msk [vmem:[#allocation3 + $0x78] sm:$0xff] %vm54, %v2157
    %v2175 = vsel %vm54, %v2142, 0
    %v2178 = vsel %vm54, %v2143, 0
    %v2181 = vsel %vm54, %v2144, 0
    %v2184 = vsel %vm54, %v2145, 0
    %v2187 = vsel %vm54, %v2146, 0
    %v2190 = vsel %vm54, %v2147, 0
    %v2193 = vsel %vm54, %v2148, 0
    %v2196 = vsel %vm54, %v2149, 0
    %v2199 = vsel %vm54, %v2150, 0
    %v2202 = vsel %vm54, %v2151, 0
    %v2205 = vsel %vm54, %v2152, 0
    %v2208 = vsel %vm54, %v2153, 0
    %v2211 = vsel %vm54, %v2154, 0
    %v2214 = vsel %vm54, %v2155, 0
    %v2217 = vsel %vm54, %v2156, 0
    %v2220 = vsel %vm54, %v2157, 0
    %2222 = vmatprep.subr.mxu0 0.0
    %2223 = vmatpush1.xpose.msra.mxu0 %v2175
    %2224 = vmatprep.subr.mxu0 0.0
    %2225 = vmatpush1.xpose.msra.mxu0 %v2178
    %2226 = vmatprep.subr.mxu0 0.0
    %2227 = vmatpush1.xpose.msra.mxu0 %v2181
    %2228 = vmatprep.subr.mxu0 0.0
    %2229 = vmatpush1.xpose.msra.mxu0 %v2184
    %2230 = vmatprep.subr.mxu0 0.0
    %2231 = vmatpush1.xpose.msra.mxu0 %v2187
    %2232 = vmatprep.subr.mxu0 0.0
    %2233 = vmatpush1.xpose.msra.mxu0 %v2190
    %2234 = vmatprep.subr.mxu0 0.0
    %2235 = vmatpush1.xpose.msra.mxu0 %v2193
    %2236 = vmatprep.subr.mxu0 0.0
    %2237 = vmatpush1.xpose.msra.mxu0 %v2196
    %2238 = vmatprep.subr.mxu0 0.0
    %2239 = vmatpush1.xpose.msra.mxu0 %v2199
    %2240 = vmatprep.subr.mxu0 0.0
    %2241 = vmatpush1.xpose.msra.mxu0 %v2202
    %2242 = vmatprep.subr.mxu0 0.0
    %2243 = vmatpush1.xpose.msra.mxu0 %v2205
    %2244 = vmatprep.subr.mxu0 0.0
    %2245 = vmatpush1.xpose.msra.mxu0 %v2208
    %2246 = vmatprep.subr.mxu0 0.0
    %2247 = vmatpush1.xpose.msra.mxu0 %v2211
    %2248 = vmatprep.subr.mxu0 0.0
    %2249 = vmatpush1.xpose.msra.mxu0 %v2214
    %2250 = vmatprep.subr.mxu0 0.0
    %2251 = vmatpush1.xpose.msra.mxu0 %v2217
    %2252 = vmatprep.subr.mxu0 0.0
    %2253 = vmatpush1.xpose.msra.mxu0 %v2220
    %2254 = vmatprep.subr.mxu0 0.0
    %2255 = vmatpush1.xpose.msra.mxu0 0.0
    %2256 = vmatprep.subr.mxu0 0.0
    %2257 = vmatpush1.xpose.msra.mxu0 0.0
    %2258 = vmatprep.subr.mxu0 0.0
    %2259 = vmatpush1.xpose.msra.mxu0 0.0
    %2260 = vmatprep.subr.mxu0 0.0
    %2261 = vmatpush1.xpose.msra.mxu0 0.0
    %2262 = vmatprep.subr.mxu0 0.0
    %2263 = vmatpush1.xpose.msra.mxu0 0.0
    %2264 = vmatprep.subr.mxu0 0.0
    %2265 = vmatpush1.xpose.msra.mxu0 0.0
    %2266 = vmatprep.subr.mxu0 0.0
    %2267 = vmatpush1.xpose.msra.mxu0 0.0
    %2268 = vmatprep.subr.mxu0 0.0
    %2269 = vmatpush1.xpose.msra.mxu0 0.0
    %2270 = vmatprep.subr.mxu0 0.0
    %2271 = vmatpush1.xpose.msra.mxu0 0.0
    %2272 = vmatprep.subr.mxu0 0.0
    %2273 = vmatpush1.xpose.msra.mxu0 0.0
    %2274 = vmatprep.subr.mxu0 0.0
    %2275 = vmatpush1.xpose.msra.mxu0 0.0
    %2276 = vmatprep.subr.mxu0 0.0
    %2277 = vmatpush1.xpose.msra.mxu0 0.0
    %2278 = vmatprep.subr.mxu0 0.0
    %2279 = vmatpush1.xpose.msra.mxu0 0.0
    %2280 = vmatprep.subr.mxu0 0.0
    %2281 = vmatpush1.xpose.msra.mxu0 0.0
    %2282 = vmatprep.subr.mxu0 0.0
    %2283 = vmatpush1.xpose.msra.mxu0 0.0
    %2284 = vmatprep.subr.mxu0 0.0
    %2285 = vmatpush1.xpose.msra.mxu0 0.0
    %2286 = vmatprep.mubr.f32.mxu0 0.0
    %2287 = vmatmul.mubr.f32.gmra.mrb[0].mxu0 %v2175
    %v2288 = vpop.f32.mrb[0].mxu0
    %v2289 = vadd.f32 0.0, %v2288
    %v2290 = vpop.f32.mrb[0].mxu0
    %2291 = vmatprep.mubr.f32.mxu0 0.0
    %2292 = vmatmul.mubr.f32.gmra.mrb[0].mxu0 %v2178
    %v2293 = vpop.f32.mrb[0].mxu0
    %v2294 = vadd.f32 0.0, %v2293
    %v2295 = vpop.f32.mrb[0].mxu0
    %2296 = vmatprep.mubr.f32.mxu0 0.0
    %2297 = vmatmul.mubr.f32.gmra.mrb[0].mxu0 %v2181
    %v2298 = vpop.f32.mrb[0].mxu0
    %v2299 = vadd.f32 0.0, %v2298
    %v2300 = vpop.f32.mrb[0].mxu0
    %2301 = vmatprep.mubr.f32.mxu0 0.0
    %2302 = vmatmul.mubr.f32.gmra.mrb[0].mxu0 %v2184
    %v2303 = vpop.f32.mrb[0].mxu0
    %v2304 = vadd.f32 0.0, %v2303
    %v2305 = vpop.f32.mrb[0].mxu0
    %2306 = vmatprep.mubr.f32.mxu0 0.0
    %2307 = vmatmul.mubr.f32.gmra.mrb[0].mxu0 %v2187
    %v2308 = vpop.f32.mrb[0].mxu0
    %v2309 = vadd.f32 0.0, %v2308
    %v2310 = vpop.f32.mrb[0].mxu0
    %2311 = vmatprep.mubr.f32.mxu0 0.0
    %2312 = vmatmul.mubr.f32.gmra.mrb[0].mxu0 %v2190
    %v2313 = vpop.f32.mrb[0].mxu0
    %v2314 = vadd.f32 0.0, %v2313
    %v2315 = vpop.f32.mrb[0].mxu0
    %2316 = vmatprep.mubr.f32.mxu0 0.0
    %2317 = vmatmul.mubr.f32.gmra.mrb[0].mxu0 %v2193
    %v2318 = vpop.f32.mrb[0].mxu0
    %v2319 = vadd.f32 0.0, %v2318
    %v2320 = vpop.f32.mrb[0].mxu0
    %2321 = vmatprep.mubr.f32.mxu0 0.0
    %2322 = vmatmul.mubr.f32.gmra.mrb[0].mxu0 %v2196
    %v2323 = vpop.f32.mrb[0].mxu0
    %v2324 = vadd.f32 0.0, %v2323
    %v2325 = vpop.f32.mrb[0].mxu0
    %2326 = vmatprep.mubr.f32.mxu0 0.0
    %2327 = vmatmul.mubr.f32.gmra.mrb[0].mxu0 %v2199
    %v2328 = vpop.f32.mrb[0].mxu0
    %v2329 = vadd.f32 0.0, %v2328
    %v2330 = vpop.f32.mrb[0].mxu0
    %2331 = vmatprep.mubr.f32.mxu0 0.0
    %2332 = vmatmul.mubr.f32.gmra.mrb[0].mxu0 %v2202
    %v2333 = vpop.f32.mrb[0].mxu0
    %v2334 = vadd.f32 0.0, %v2333
    %v2335 = vpop.f32.mrb[0].mxu0
    %2336 = vmatprep.mubr.f32.mxu0 0.0
    %2337 = vmatmul.mubr.f32.gmra.mrb[0].mxu0 %v2205
    %v2338 = vpop.f32.mrb[0].mxu0
    %v2339 = vadd.f32 0.0, %v2338
    %v2340 = vpop.f32.mrb[0].mxu0
    %2341 = vmatprep.mubr.f32.mxu0 0.0
    %2342 = vmatmul.mubr.f32.gmra.mrb[0].mxu0 %v2208
    %v2343 = vpop.f32.mrb[0].mxu0
    %v2344 = vadd.f32 0.0, %v2343
    %v2345 = vpop.f32.mrb[0].mxu0
    %2346 = vmatprep.mubr.f32.mxu0 0.0
    %2347 = vmatmul.mubr.f32.gmra.mrb[0].mxu0 %v2211
    %v2348 = vpop.f32.mrb[0].mxu0
    %v2349 = vadd.f32 0.0, %v2348
    %v2350 = vpop.f32.mrb[0].mxu0
    %2351 = vmatprep.mubr.f32.mxu0 0.0
    %2352 = vmatmul.mubr.f32.gmra.mrb[0].mxu0 %v2214
    %v2353 = vpop.f32.mrb[0].mxu0
    %v2354 = vadd.f32 0.0, %v2353
    %v2355 = vpop.f32.mrb[0].mxu0
    %2356 = vmatprep.mubr.f32.mxu0 0.0
    %2357 = vmatmul.mubr.f32.gmra.mrb[0].mxu0 %v2217
    %v2358 = vpop.f32.mrb[0].mxu0
    %v2359 = vadd.f32 0.0, %v2358
    %v2360 = vpop.f32.mrb[0].mxu0
    %2361 = vmatprep.mubr.f32.mxu0 0.0
    %2362 = vmatmul.mubr.f32.gmra.mrb[0].mxu0 %v2220
    %v2363 = vpop.f32.mrb[0].mxu0
    %v2364 = vadd.f32 0.0, %v2363
    %v2365 = vpop.f32.mrb[0].mxu0
    %2366 = vdwg.mxu0
    %v2367 = vmul.f32 %v2289, %v1632
    %v2368 = vmul.f32 %v2294, %v1633
    %v2369 = vmul.f32 %v2299, %v1634
    %v2370 = vmul.f32 %v2304, %v1635
    %v2371 = vmul.f32 %v2309, %v1636
    %v2372 = vmul.f32 %v2314, %v1637
    %v2373 = vmul.f32 %v2319, %v1638
    %v2374 = vmul.f32 %v2324, %v1639
    %v2375 = vmul.f32 %v2329, %v1640
    %v2376 = vmul.f32 %v2334, %v1641
    %v2377 = vmul.f32 %v2339, %v1642
    %v2378 = vmul.f32 %v2344, %v1643
    %v2379 = vmul.f32 %v2349, %v1644
    %v2380 = vmul.f32 %v2354, %v1645
    %v2381 = vmul.f32 %v2359, %v1646
    %v2382 = vmul.f32 %v2364, %v1647
    %2383 = vst [vmem:[#allocation5] sm:$0xff] %v2367
    %2384 = vst [vmem:[#allocation5 + $0x8] sm:$0xff] %v2368
    %2385 = vst [vmem:[#allocation5 + $0x10] sm:$0xff] %v2369
    %2386 = vst [vmem:[#allocation5 + $0x18] sm:$0xff] %v2370
    %2387 = vst [vmem:[#allocation5 + $0x20] sm:$0xff] %v2371
    %2388 = vst [vmem:[#allocation5 + $0x28] sm:$0xff] %v2372
    %2389 = vst [vmem:[#allocation5 + $0x30] sm:$0xff] %v2373
    %2390 = vst [vmem:[#allocation5 + $0x38] sm:$0xff] %v2374
    %2391 = vst [vmem:[#allocation5 + $0x40] sm:$0xff] %v2375
    %2392 = vst [vmem:[#allocation5 + $0x48] sm:$0xff] %v2376
    %2393 = vst [vmem:[#allocation5 + $0x50] sm:$0xff] %v2377
    %2394 = vst [vmem:[#allocation5 + $0x58] sm:$0xff] %v2378
    %2395 = vst [vmem:[#allocation5 + $0x60] sm:$0xff] %v2379
    %2396 = vst [vmem:[#allocation5 + $0x68] sm:$0xff] %v2380
    %2397 = vst [vmem:[#allocation5 + $0x70] sm:$0xff] %v2381
    %2398 = vst [vmem:[#allocation5 + $0x78] sm:$0xff] %v2382
    %v2399 = vld [vmem:[%s1019] sm:$0xff]
    %v2400 = vld [vmem:[%s1019 + $0x8] sm:$0xff]
    %v2401 = vld [vmem:[%s1019 + $0x10] sm:$0xff]
    %v2402 = vld [vmem:[%s1019 + $0x18] sm:$0xff]
    %v2403 = vld [vmem:[%s1019 + $0x20] sm:$0xff]
    %v2404 = vld [vmem:[%s1019 + $0x28] sm:$0xff]
    %v2405 = vld [vmem:[%s1019 + $0x30] sm:$0xff]
    %v2406 = vld [vmem:[%s1019 + $0x38] sm:$0xff]
    %v2407 = vld [vmem:[%s1019 + $0x40] sm:$0xff]
    %v2408 = vld [vmem:[%s1019 + $0x48] sm:$0xff]
    %v2409 = vld [vmem:[%s1019 + $0x50] sm:$0xff]
    %v2410 = vld [vmem:[%s1019 + $0x58] sm:$0xff]
    %v2411 = vld [vmem:[%s1019 + $0x60] sm:$0xff]
    %v2412 = vld [vmem:[%s1019 + $0x68] sm:$0xff]
    %v2413 = vld [vmem:[%s1019 + $0x70] sm:$0xff]
    %v2414 = vld [vmem:[%s1019 + $0x78] sm:$0xff]
    %vm2415 = vcmp.eq.f32.partialorder %v1776, 2.0
    %vm2416 = vcmp.eq.f32.partialorder %v1777, 2.0
    %vm2417 = vcmp.eq.f32.partialorder %v1778, 2.0
    %vm2418 = vcmp.eq.f32.partialorder %v1779, 2.0
    %vm2419 = vcmp.eq.f32.partialorder %v1780, 2.0
    %vm2420 = vcmp.eq.f32.partialorder %v1781, 2.0
    %vm2421 = vcmp.eq.f32.partialorder %v1782, 2.0
    %vm2422 = vcmp.eq.f32.partialorder %v1783, 2.0
    %vm2423 = vcmp.eq.f32.partialorder %v1784, 2.0
    %vm2424 = vcmp.eq.f32.partialorder %v1785, 2.0
    %vm2425 = vcmp.eq.f32.partialorder %v1786, 2.0
    %vm2426 = vcmp.eq.f32.partialorder %v1787, 2.0
    %vm2427 = vcmp.eq.f32.partialorder %v1788, 2.0
    %vm2428 = vcmp.eq.f32.partialorder %v1789, 2.0
    %vm2429 = vcmp.eq.f32.partialorder %v1790, 2.0
    %vm2430 = vcmp.eq.f32.partialorder %v1791, 2.0
    %v2431 = vsel %vm2415, 1, 0
    %v2432 = vsel %vm2416, 1, 0
    %v2433 = vsel %vm2417, 1, 0
    %v2434 = vsel %vm2418, 1, 0
    %v2435 = vsel %vm2419, 1, 0
    %v2436 = vsel %vm2420, 1, 0
    %v2437 = vsel %vm2421, 1, 0
    %v2438 = vsel %vm2422, 1, 0
    %v2439 = vsel %vm2423, 1, 0
    %v2440 = vsel %vm2424, 1, 0
    %v2441 = vsel %vm2425, 1, 0
    %v2442 = vsel %vm2426, 1, 0
    %v2443 = vsel %vm2427, 1, 0
    %v2444 = vsel %vm2428, 1, 0
    %v2445 = vsel %vm2429, 1, 0
    %v2446 = vsel %vm2430, 1, 0
    %v2447 = vcvt.s32.f32 %v2431
    %v2448 = vcvt.s32.f32 %v2432
    %v2449 = vcvt.s32.f32 %v2433
    %v2450 = vcvt.s32.f32 %v2434
    %v2451 = vcvt.s32.f32 %v2435
    %v2452 = vcvt.s32.f32 %v2436
    %v2453 = vcvt.s32.f32 %v2437
    %v2454 = vcvt.s32.f32 %v2438
    %v2455 = vcvt.s32.f32 %v2439
    %v2456 = vcvt.s32.f32 %v2440
    %v2457 = vcvt.s32.f32 %v2441
    %v2458 = vcvt.s32.f32 %v2442
    %v2459 = vcvt.s32.f32 %v2443
    %v2460 = vcvt.s32.f32 %v2444
    %v2461 = vcvt.s32.f32 %v2445
    %v2462 = vcvt.s32.f32 %v2446
    %v2463 = vmul.f32 %v2399, %v1744
    %v2464 = vmul.f32 %v2400, %v1745
    %v2465 = vmul.f32 %v2401, %v1746
    %v2466 = vmul.f32 %v2402, %v1747
    %v2467 = vmul.f32 %v2403, %v1748
    %v2468 = vmul.f32 %v2404, %v1749
    %v2469 = vmul.f32 %v2405, %v1750
    %v2470 = vmul.f32 %v2406, %v1751
    %v2471 = vmul.f32 %v2407, %v1752
    %v2472 = vmul.f32 %v2408, %v1753
    %v2473 = vmul.f32 %v2409, %v1754
    %v2474 = vmul.f32 %v2410, %v1755
    %v2475 = vmul.f32 %v2411, %v1756
    %v2476 = vmul.f32 %v2412, %v1757
    %v2477 = vmul.f32 %v2413, %v1758
    %v2478 = vmul.f32 %v2414, %v1759
    %v2479 = vmul.f32 %v2447, %v2463
    %v2480 = vmul.f32 %v2448, %v2464
    %v2481 = vmul.f32 %v2449, %v2465
    %v2482 = vmul.f32 %v2450, %v2466
    %v2483 = vmul.f32 %v2451, %v2467
    %v2484 = vmul.f32 %v2452, %v2468
    %v2485 = vmul.f32 %v2453, %v2469
    %v2486 = vmul.f32 %v2454, %v2470
    %v2487 = vmul.f32 %v2455, %v2471
    %v2488 = vmul.f32 %v2456, %v2472
    %v2489 = vmul.f32 %v2457, %v2473
    %v2490 = vmul.f32 %v2458, %v2474
    %v2491 = vmul.f32 %v2459, %v2475
    %v2492 = vmul.f32 %v2460, %v2476
    %v2493 = vmul.f32 %v2461, %v2477
    %v2494 = vmul.f32 %v2462, %v2478
    %2495 = vmatprep.subr.mxu0 0.0
    %2496 = vmatpush1.xpose.msra.mxu0 %v2479
    %2497 = vmatprep.subr.mxu0 0.0
    %2498 = vmatpush1.xpose.msra.mxu0 %v2480
    %2499 = vmatprep.subr.mxu0 0.0
    %2500 = vmatpush1.xpose.msra.mxu0 %v2481
    %2501 = vmatprep.subr.mxu0 0.0
    %2502 = vmatpush1.xpose.msra.mxu0 %v2482
    %2503 = vmatprep.subr.mxu0 0.0
    %2504 = vmatpush1.xpose.msra.mxu0 %v2483
    %2505 = vmatprep.subr.mxu0 0.0
    %2506 = vmatpush1.xpose.msra.mxu0 %v2484
    %2507 = vmatprep.subr.mxu0 0.0
    %2508 = vmatpush1.xpose.msra.mxu0 %v2485
    %2509 = vmatprep.subr.mxu0 0.0
    %2510 = vmatpush1.xpose.msra.mxu0 %v2486
    %2511 = vmatprep.subr.mxu0 0.0
    %2512 = vmatpush1.xpose.msra.mxu0 %v2487
    %2513 = vmatprep.subr.mxu0 0.0
    %2514 = vmatpush1.xpose.msra.mxu0 %v2488
    %2515 = vmatprep.subr.mxu0 0.0
    %2516 = vmatpush1.xpose.msra.mxu0 %v2489
    %2517 = vmatprep.subr.mxu0 0.0
    %2518 = vmatpush1.xpose.msra.mxu0 %v2490
    %2519 = vmatprep.subr.mxu0 0.0
    %2520 = vmatpush1.xpose.msra.mxu0 %v2491
    %2521 = vmatprep.subr.mxu0 0.0
    %2522 = vmatpush1.xpose.msra.mxu0 %v2492
    %2523 = vmatprep.subr.mxu0 0.0
    %2524 = vmatpush1.xpose.msra.mxu0 %v2493
    %2525 = vmatprep.subr.mxu0 0.0
    %2526 = vmatpush1.xpose.msra.mxu0 %v2494
    %2527 = vmatprep.subr.mxu0 0.0
    %2528 = vmatpush1.xpose.msra.mxu0 0.0
    %2529 = vmatprep.subr.mxu0 0.0
    %2530 = vmatpush1.xpose.msra.mxu0 0.0
    %2531 = vmatprep.subr.mxu0 0.0
    %2532 = vmatpush1.xpose.msra.mxu0 0.0
    %2533 = vmatprep.subr.mxu0 0.0
    %2534 = vmatpush1.xpose.msra.mxu0 0.0
    %2535 = vmatprep.subr.mxu0 0.0
    %2536 = vmatpush1.xpose.msra.mxu0 0.0
    %2537 = vmatprep.subr.mxu0 0.0
    %2538 = vmatpush1.xpose.msra.mxu0 0.0
    %2539 = vmatprep.subr.mxu0 0.0
    %2540 = vmatpush1.xpose.msra.mxu0 0.0
    %2541 = vmatprep.subr.mxu0 0.0
    %2542 = vmatpush1.xpose.msra.mxu0 0.0
    %2543 = vmatprep.subr.mxu0 0.0
    %2544 = vmatpush1.xpose.msra.mxu0 0.0
    %2545 = vmatprep.subr.mxu0 0.0
    %2546 = vmatpush1.xpose.msra.mxu0 0.0
    %2547 = vmatprep.subr.mxu0 0.0
    %2548 = vmatpush1.xpose.msra.mxu0 0.0
    %2549 = vmatprep.subr.mxu0 0.0
    %2550 = vmatpush1.xpose.msra.mxu0 0.0
    %2551 = vmatprep.subr.mxu0 0.0
    %2552 = vmatpush1.xpose.msra.mxu0 0.0
    %2553 = vmatprep.subr.mxu0 0.0
    %2554 = vmatpush1.xpose.msra.mxu0 0.0
    %2555 = vmatprep.subr.mxu0 0.0
    %2556 = vmatpush1.xpose.msra.mxu0 0.0
    %2557 = vmatprep.subr.mxu0 0.0
    %2558 = vmatpush1.xpose.msra.mxu0 0.0
    %2559 = vmatprep.mubr.f32.mxu0 0.0
    %2560 = vmatmul.mubr.f32.gmra.mrb[0].mxu0 1.0
    %v2561 = vpop.f32.mrb[0].mxu0
    %v2562 = vadd.f32 0.0, %v2561
    %v2563 = vpop.f32.mrb[0].mxu0
    %2564 = vdwg.mxu0
    %vm2565 = vcmp.eq.f32.partialorder %v2562, 0.0
    %v2566 = vsel %vm2565, 1.0, %v2562
    %v2567 = vrcp.pop %v2566
    %v2568 = vlaneseq
    %v2569 = vshrl.u32 %v2568, 7
    %v2570 = vsub.s32 0, %v2569
    %v2571 = vrot.slane %v2567, %v2570
    %v2572 = vmul.f32 %v2479, %v2571
    %v2573 = vmul.f32 %v2480, %v2571
    %v2574 = vmul.f32 %v2481, %v2571
    %v2575 = vmul.f32 %v2482, %v2571
    %v2576 = vmul.f32 %v2483, %v2571
    %v2577 = vmul.f32 %v2484, %v2571
    %v2578 = vmul.f32 %v2485, %v2571
    %v2579 = vmul.f32 %v2486, %v2571
    %v2580 = vmul.f32 %v2487, %v2571
    %v2581 = vmul.f32 %v2488, %v2571
    %v2582 = vmul.f32 %v2489, %v2571
    %v2583 = vmul.f32 %v2490, %v2571
    %v2584 = vmul.f32 %v2491, %v2571
    %v2585 = vmul.f32 %v2492, %v2571
    %v2586 = vmul.f32 %v2493, %v2571
    %v2587 = vmul.f32 %v2494, %v2571
    %2604 = vmatprep.subr.mxu0 0.0
    %2605 = vmatpush1.msra.mxu0 %v731
    %2606 = vmatprep.subr.mxu0 0.0
    %2607 = vmatpush1.msra.mxu0 %v733
    %2608 = vmatprep.subr.mxu0 0.0
    %2609 = vmatpush1.msra.mxu0 %v735
    %2610 = vmatprep.subr.mxu0 0.0
    %2611 = vmatpush1.msra.mxu0 %v737
    %2612 = vmatprep.subr.mxu0 0.0
    %2613 = vmatpush1.msra.mxu0 %v739
    %2614 = vmatprep.subr.mxu0 0.0
    %2615 = vmatpush1.msra.mxu0 %v741
    %2616 = vmatprep.subr.mxu0 0.0
    %2617 = vmatpush1.msra.mxu0 %v743
    %2618 = vmatprep.subr.mxu0 0.0
    %2619 = vmatpush1.msra.mxu0 %v745
    %2620 = vmatprep.subr.mxu0 0.0
    %2621 = vmatpush1.msra.mxu0 %v747
    %2622 = vmatprep.subr.mxu0 0.0
    %2623 = vmatpush1.msra.mxu0 %v749
    %2624 = vmatprep.subr.mxu0 0.0
    %2625 = vmatpush1.msra.mxu0 %v751
    %2626 = vmatprep.subr.mxu0 0.0
    %2627 = vmatpush1.msra.mxu0 %v753
    %2628 = vmatprep.subr.mxu0 0.0
    %2629 = vmatpush1.msra.mxu0 %v755
    %2630 = vmatprep.subr.mxu0 0.0
    %2631 = vmatpush1.msra.mxu0 %v757
    %2632 = vmatprep.subr.mxu0 0.0
    %2633 = vmatpush1.msra.mxu0 %v759
    %2634 = vmatprep.subr.mxu0 0.0
    %2635 = vmatpush1.msra.mxu0 %v761
    %2636 = vmatprep.subr.mxu0 0.0
    %2637 = vmatpush1.msra.mxu0 0.0
    %2638 = vmatprep.subr.mxu0 0.0
    %2639 = vmatpush1.msra.mxu0 0.0
    %2640 = vmatprep.subr.mxu0 0.0
    %2641 = vmatpush1.msra.mxu0 0.0
    %2642 = vmatprep.subr.mxu0 0.0
    %2643 = vmatpush1.msra.mxu0 0.0
    %2644 = vmatprep.subr.mxu0 0.0
    %2645 = vmatpush1.msra.mxu0 0.0
    %2646 = vmatprep.subr.mxu0 0.0
    %2647 = vmatpush1.msra.mxu0 0.0
    %2648 = vmatprep.subr.mxu0 0.0
    %2649 = vmatpush1.msra.mxu0 0.0
    %2650 = vmatprep.subr.mxu0 0.0
    %2651 = vmatpush1.msra.mxu0 0.0
    %2652 = vmatprep.subr.mxu0 0.0
    %2653 = vmatpush1.msra.mxu0 0.0
    %2654 = vmatprep.subr.mxu0 0.0
    %2655 = vmatpush1.msra.mxu0 0.0
    %2656 = vmatprep.subr.mxu0 0.0
    %2657 = vmatpush1.msra.mxu0 0.0
    %2658 = vmatprep.subr.mxu0 0.0
    %2659 = vmatpush1.msra.mxu0 0.0
    %2660 = vmatprep.subr.mxu0 0.0
    %2661 = vmatpush1.msra.mxu0 0.0
    %2662 = vmatprep.subr.mxu0 0.0
    %2663 = vmatpush1.msra.mxu0 0.0
    %2664 = vmatprep.subr.mxu0 0.0
    %2665 = vmatpush1.msra.mxu0 0.0
    %2666 = vmatprep.subr.mxu0 0.0
    %2667 = vmatpush1.msra.mxu0 0.0
    %2668 = vmatprep.mubr.f32.mxu0 0.0
    %2669 = vmatmul.mubr.f32.gmra.mrb[0].mxu0 %v2572
    %v2670 = vpop.f32.mrb[0].mxu0
    %v2671 = vadd.f32 0.0, %v2670
    %v2672 = vpop.f32.mrb[0].mxu0
    %2673 = vmatprep.mubr.f32.mxu0 0.0
    %2674 = vmatmul.mubr.f32.gmra.mrb[0].mxu0 %v2573
    %v2675 = vpop.f32.mrb[0].mxu0
    %v2676 = vadd.f32 0.0, %v2675
    %v2677 = vpop.f32.mrb[0].mxu0
    %2678 = vmatprep.mubr.f32.mxu0 0.0
    %2679 = vmatmul.mubr.f32.gmra.mrb[0].mxu0 %v2574
    %v2680 = vpop.f32.mrb[0].mxu0
    %v2681 = vadd.f32 0.0, %v2680
    %v2682 = vpop.f32.mrb[0].mxu0
    %2683 = vmatprep.mubr.f32.mxu0 0.0
    %2684 = vmatmul.mubr.f32.gmra.mrb[0].mxu0 %v2575
    %v2685 = vpop.f32.mrb[0].mxu0
    %v2686 = vadd.f32 0.0, %v2685
    %v2687 = vpop.f32.mrb[0].mxu0
    %2688 = vmatprep.mubr.f32.mxu0 0.0
    %2689 = vmatmul.mubr.f32.gmra.mrb[0].mxu0 %v2576
    %v2690 = vpop.f32.mrb[0].mxu0
    %v2691 = vadd.f32 0.0, %v2690
    %v2692 = vpop.f32.mrb[0].mxu0
    %2693 = vmatprep.mubr.f32.mxu0 0.0
    %2694 = vmatmul.mubr.f32.gmra.mrb[0].mxu0 %v2577
    %v2695 = vpop.f32.mrb[0].mxu0
    %v2696 = vadd.f32 0.0, %v2695
    %v2697 = vpop.f32.mrb[0].mxu0
    %2698 = vmatprep.mubr.f32.mxu0 0.0
    %2699 = vmatmul.mubr.f32.gmra.mrb[0].mxu0 %v2578
    %v2700 = vpop.f32.mrb[0].mxu0
    %v2701 = vadd.f32 0.0, %v2700
    %v2702 = vpop.f32.mrb[0].mxu0
    %2703 = vmatprep.mubr.f32.mxu0 0.0
    %2704 = vmatmul.mubr.f32.gmra.mrb[0].mxu0 %v2579
    %v2705 = vpop.f32.mrb[0].mxu0
    %v2706 = vadd.f32 0.0, %v2705
    %v2707 = vpop.f32.mrb[0].mxu0
    %2708 = vmatprep.mubr.f32.mxu0 0.0
    %2709 = vmatmul.mubr.f32.gmra.mrb[0].mxu0 %v2580
    %v2710 = vpop.f32.mrb[0].mxu0
    %v2711 = vadd.f32 0.0, %v2710
    %v2712 = vpop.f32.mrb[0].mxu0
    %2713 = vmatprep.mubr.f32.mxu0 0.0
    %2714 = vmatmul.mubr.f32.gmra.mrb[0].mxu0 %v2581
    %v2715 = vpop.f32.mrb[0].mxu0
    %v2716 = vadd.f32 0.0, %v2715
    %v2717 = vpop.f32.mrb[0].mxu0
    %2718 = vmatprep.mubr.f32.mxu0 0.0
    %2719 = vmatmul.mubr.f32.gmra.mrb[0].mxu0 %v2582
    %v2720 = vpop.f32.mrb[0].mxu0
    %v2721 = vadd.f32 0.0, %v2720
    %v2722 = vpop.f32.mrb[0].mxu0
    %2723 = vmatprep.mubr.f32.mxu0 0.0
    %2724 = vmatmul.mubr.f32.gmra.mrb[0].mxu0 %v2583
    %v2725 = vpop.f32.mrb[0].mxu0
    %v2726 = vadd.f32 0.0, %v2725
    %v2727 = vpop.f32.mrb[0].mxu0
    %2728 = vmatprep.mubr.f32.mxu0 0.0
    %2729 = vmatmul.mubr.f32.gmra.mrb[0].mxu0 %v2584
    %v2730 = vpop.f32.mrb[0].mxu0
    %v2731 = vadd.f32 0.0, %v2730
    %v2732 = vpop.f32.mrb[0].mxu0
    %2733 = vmatprep.mubr.f32.mxu0 0.0
    %2734 = vmatmul.mubr.f32.gmra.mrb[0].mxu0 %v2585
    %v2735 = vpop.f32.mrb[0].mxu0
    %v2736 = vadd.f32 0.0, %v2735
    %v2737 = vpop.f32.mrb[0].mxu0
    %2738 = vmatprep.mubr.f32.mxu0 0.0
    %2739 = vmatmul.mubr.f32.gmra.mrb[0].mxu0 %v2586
    %v2740 = vpop.f32.mrb[0].mxu0
    %v2741 = vadd.f32 0.0, %v2740
    %v2742 = vpop.f32.mrb[0].mxu0
    %2743 = vmatprep.mubr.f32.mxu0 0.0
    %2744 = vmatmul.mubr.f32.gmra.mrb[0].mxu0 %v2587
    %v2745 = vpop.f32.mrb[0].mxu0
    %v2746 = vadd.f32 0.0, %v2745
    %v2747 = vpop.f32.mrb[0].mxu0
    %2748 = vdwg.mxu0
    %v2749 = vmul.f32 %v2671, 0.7
    %v2750 = vmul.f32 %v2676, 0.7
    %v2751 = vmul.f32 %v2681, 0.7
    %v2752 = vmul.f32 %v2686, 0.7
    %v2753 = vmul.f32 %v2691, 0.7
    %v2754 = vmul.f32 %v2696, 0.7
    %v2755 = vmul.f32 %v2701, 0.7
    %v2756 = vmul.f32 %v2706, 0.7
    %v2757 = vmul.f32 %v2711, 0.7
    %v2758 = vmul.f32 %v2716, 0.7
    %v2759 = vmul.f32 %v2721, 0.7
    %v2760 = vmul.f32 %v2726, 0.7
    %v2761 = vmul.f32 %v2731, 0.7
    %v2762 = vmul.f32 %v2736, 0.7
    %v2763 = vmul.f32 %v2741, 0.7
    %v2764 = vmul.f32 %v2746, 0.7
    %2781 = vrot.lane.b32.xlu0 %v2749, 32
    %v2782 = vpop.permute.xlu0 %2781
    %2783 = vrot.lane.b32.xlu0 %v2750, 32
    %v2784 = vpop.permute.xlu0 %2783
    %2785 = vrot.lane.b32.xlu0 %v2751, 32
    %v2786 = vpop.permute.xlu0 %2785
    %2787 = vrot.lane.b32.xlu0 %v2752, 32
    %v2788 = vpop.permute.xlu0 %2787
    %2789 = vrot.lane.b32.xlu0 %v2753, 32
    %v2790 = vpop.permute.xlu0 %2789
    %2791 = vrot.lane.b32.xlu0 %v2754, 32
    %v2792 = vpop.permute.xlu0 %2791
    %2793 = vrot.lane.b32.xlu0 %v2755, 32
    %v2794 = vpop.permute.xlu0 %2793
    %2795 = vrot.lane.b32.xlu0 %v2756, 32
    %v2796 = vpop.permute.xlu0 %2795
    %2797 = vrot.lane.b32.xlu0 %v2757, 32
    %v2798 = vpop.permute.xlu0 %2797
    %2799 = vrot.lane.b32.xlu0 %v2758, 32
    %v2800 = vpop.permute.xlu0 %2799
    %2801 = vrot.lane.b32.xlu0 %v2759, 32
    %v2802 = vpop.permute.xlu0 %2801
    %2803 = vrot.lane.b32.xlu0 %v2760, 32
    %v2804 = vpop.permute.xlu0 %2803
    %2805 = vrot.lane.b32.xlu0 %v2761, 32
    %v2806 = vpop.permute.xlu0 %2805
    %2807 = vrot.lane.b32.xlu0 %v2762, 32
    %v2808 = vpop.permute.xlu0 %2807
    %2809 = vrot.lane.b32.xlu0 %v2763, 32
    %v2810 = vpop.permute.xlu0 %2809
    %2811 = vrot.lane.b32.xlu0 %v2764, 32
    %v2812 = vpop.permute.xlu0 %2811
    %v2829 = vadd.f32 %v1965, %v2782
    %v2830 = vadd.f32 %v1966, %v2784
    %v2831 = vadd.f32 %v1967, %v2786
    %v2832 = vadd.f32 %v1968, %v2788
    %v2833 = vadd.f32 %v1969, %v2790
    %v2834 = vadd.f32 %v1970, %v2792
    %v2835 = vadd.f32 %v1971, %v2794
    %v2836 = vadd.f32 %v1972, %v2796
    %v2837 = vadd.f32 %v1973, %v2798
    %v2838 = vadd.f32 %v1974, %v2800
    %v2839 = vadd.f32 %v1975, %v2802
    %v2840 = vadd.f32 %v1976, %v2804
    %v2841 = vadd.f32 %v1977, %v2806
    %v2842 = vadd.f32 %v1978, %v2808
    %v2843 = vadd.f32 %v1979, %v2810
    %v2844 = vadd.f32 %v1980, %v2812
    %vm2845 = vcmask 523520
    %2846 = vst.msk [vmem:[#allocation3] sm:$0xff] %vm2845, %v2829
    %2847 = vst.msk [vmem:[#allocation3 + $0x8] sm:$0xff] %vm2845, %v2830
    %2848 = vst.msk [vmem:[#allocation3 + $0x10] sm:$0xff] %vm2845, %v2831
    %2849 = vst.msk [vmem:[#allocation3 + $0x18] sm:$0xff] %vm2845, %v2832
    %2850 = vst.msk [vmem:[#allocation3 + $0x20] sm:$0xff] %vm2845, %v2833
    %2851 = vst.msk [vmem:[#allocation3 + $0x28] sm:$0xff] %vm2845, %v2834
    %2852 = vst.msk [vmem:[#allocation3 + $0x30] sm:$0xff] %vm2845, %v2835
    %2853 = vst.msk [vmem:[#allocation3 + $0x38] sm:$0xff] %vm2845, %v2836
    %2854 = vst.msk [vmem:[#allocation3 + $0x40] sm:$0xff] %vm2845, %v2837
    %2855 = vst.msk [vmem:[#allocation3 + $0x48] sm:$0xff] %vm2845, %v2838
    %2856 = vst.msk [vmem:[#allocation3 + $0x50] sm:$0xff] %vm2845, %v2839
    %2857 = vst.msk [vmem:[#allocation3 + $0x58] sm:$0xff] %vm2845, %v2840
    %2858 = vst.msk [vmem:[#allocation3 + $0x60] sm:$0xff] %vm2845, %v2841
    %2859 = vst.msk [vmem:[#allocation3 + $0x68] sm:$0xff] %vm2845, %v2842
    %2860 = vst.msk [vmem:[#allocation3 + $0x70] sm:$0xff] %vm2845, %v2843
    %2861 = vst.msk [vmem:[#allocation3 + $0x78] sm:$0xff] %vm2845, %v2844
    %2878 = vrot.lane.b32.xlu0 %v2829, 96
    %v2879 = vpop.permute.xlu0 %2878
    %2880 = vrot.lane.b32.xlu0 %v2830, 96
    %v2881 = vpop.permute.xlu0 %2880
    %2882 = vrot.lane.b32.xlu0 %v2831, 96
    %v2883 = vpop.permute.xlu0 %2882
    %2884 = vrot.lane.b32.xlu0 %v2832, 96
    %v2885 = vpop.permute.xlu0 %2884
    %2886 = vrot.lane.b32.xlu0 %v2833, 96
    %v2887 = vpop.permute.xlu0 %2886
    %2888 = vrot.lane.b32.xlu0 %v2834, 96
    %v2889 = vpop.permute.xlu0 %2888
    %2890 = vrot.lane.b32.xlu0 %v2835, 96
    %v2891 = vpop.permute.xlu0 %2890
    %2892 = vrot.lane.b32.xlu0 %v2836, 96
    %v2893 = vpop.permute.xlu0 %2892
    %2894 = vrot.lane.b32.xlu0 %v2837, 96
    %v2895 = vpop.permute.xlu0 %2894
    %2896 = vrot.lane.b32.xlu0 %v2838, 96
    %v2897 = vpop.permute.xlu0 %2896
    %2898 = vrot.lane.b32.xlu0 %v2839, 96
    %v2899 = vpop.permute.xlu0 %2898
    %2900 = vrot.lane.b32.xlu0 %v2840, 96
    %v2901 = vpop.permute.xlu0 %2900
    %2902 = vrot.lane.b32.xlu0 %v2841, 96
    %v2903 = vpop.permute.xlu0 %2902
    %2904 = vrot.lane.b32.xlu0 %v2842, 96
    %v2905 = vpop.permute.xlu0 %2904
    %2906 = vrot.lane.b32.xlu0 %v2843, 96
    %v2907 = vpop.permute.xlu0 %2906
    %2908 = vrot.lane.b32.xlu0 %v2844, 96
    %v2909 = vpop.permute.xlu0 %2908
    %v2910 = vsel %vm54, %v2879, 0
    %v2912 = vsel %vm54, %v2881, 0
    %v2914 = vsel %vm54, %v2883, 0
    %v2916 = vsel %vm54, %v2885, 0
    %v2918 = vsel %vm54, %v2887, 0
    %v2920 = vsel %vm54, %v2889, 0
    %v2922 = vsel %vm54, %v2891, 0
    %v2924 = vsel %vm54, %v2893, 0
    %v2926 = vsel %vm54, %v2895, 0
    %v2928 = vsel %vm54, %v2897, 0
    %v2930 = vsel %vm54, %v2899, 0
    %v2932 = vsel %vm54, %v2901, 0
    %v2934 = vsel %vm54, %v2903, 0
    %v2936 = vsel %vm54, %v2905, 0
    %v2938 = vsel %vm54, %v2907, 0
    %v2940 = vsel %vm54, %v2909, 0
    %2942 = vmatprep.subr.mxu0 0.0
    %2943 = vmatpush1.xpose.msra.mxu0 %v2910
    %2944 = vmatprep.subr.mxu0 0.0
    %2945 = vmatpush1.xpose.msra.mxu0 %v2912
    %2946 = vmatprep.subr.mxu0 0.0
    %2947 = vmatpush1.xpose.msra.mxu0 %v2914
    %2948 = vmatprep.subr.mxu0 0.0
    %2949 = vmatpush1.xpose.msra.mxu0 %v2916
    %2950 = vmatprep.subr.mxu0 0.0
    %2951 = vmatpush1.xpose.msra.mxu0 %v2918
    %2952 = vmatprep.subr.mxu0 0.0
    %2953 = vmatpush1.xpose.msra.mxu0 %v2920
    %2954 = vmatprep.subr.mxu0 0.0
    %2955 = vmatpush1.xpose.msra.mxu0 %v2922
    %2956 = vmatprep.subr.mxu0 0.0
    %2957 = vmatpush1.xpose.msra.mxu0 %v2924
    %2958 = vmatprep.subr.mxu0 0.0
    %2959 = vmatpush1.xpose.msra.mxu0 %v2926
    %2960 = vmatprep.subr.mxu0 0.0
    %2961 = vmatpush1.xpose.msra.mxu0 %v2928
    %2962 = vmatprep.subr.mxu0 0.0
    %2963 = vmatpush1.xpose.msra.mxu0 %v2930
    %2964 = vmatprep.subr.mxu0 0.0
    %2965 = vmatpush1.xpose.msra.mxu0 %v2932
    %2966 = vmatprep.subr.mxu0 0.0
    %2967 = vmatpush1.xpose.msra.mxu0 %v2934
    %2968 = vmatprep.subr.mxu0 0.0
    %2969 = vmatpush1.xpose.msra.mxu0 %v2936
    %2970 = vmatprep.subr.mxu0 0.0
    %2971 = vmatpush1.xpose.msra.mxu0 %v2938
    %2972 = vmatprep.subr.mxu0 0.0
    %2973 = vmatpush1.xpose.msra.mxu0 %v2940
    %2974 = vmatprep.subr.mxu0 0.0
    %2975 = vmatpush1.xpose.msra.mxu0 0.0
    %2976 = vmatprep.subr.mxu0 0.0
    %2977 = vmatpush1.xpose.msra.mxu0 0.0
    %2978 = vmatprep.subr.mxu0 0.0
    %2979 = vmatpush1.xpose.msra.mxu0 0.0
    %2980 = vmatprep.subr.mxu0 0.0
    %2981 = vmatpush1.xpose.msra.mxu0 0.0
    %2982 = vmatprep.subr.mxu0 0.0
    %2983 = vmatpush1.xpose.msra.mxu0 0.0
    %2984 = vmatprep.subr.mxu0 0.0
    %2985 = vmatpush1.xpose.msra.mxu0 0.0
    %2986 = vmatprep.subr.mxu0 0.0
    %2987 = vmatpush1.xpose.msra.mxu0 0.0
    %2988 = vmatprep.subr.mxu0 0.0
    %2989 = vmatpush1.xpose.msra.mxu0 0.0
    %2990 = vmatprep.subr.mxu0 0.0
    %2991 = vmatpush1.xpose.msra.mxu0 0.0
    %2992 = vmatprep.subr.mxu0 0.0
    %2993 = vmatpush1.xpose.msra.mxu0 0.0
    %2994 = vmatprep.subr.mxu0 0.0
    %2995 = vmatpush1.xpose.msra.mxu0 0.0
    %2996 = vmatprep.subr.mxu0 0.0
    %2997 = vmatpush1.xpose.msra.mxu0 0.0
    %2998 = vmatprep.subr.mxu0 0.0
    %2999 = vmatpush1.xpose.msra.mxu0 0.0
    %3000 = vmatprep.subr.mxu0 0.0
    %3001 = vmatpush1.xpose.msra.mxu0 0.0
    %3002 = vmatprep.subr.mxu0 0.0
    %3003 = vmatpush1.xpose.msra.mxu0 0.0
    %3004 = vmatprep.subr.mxu0 0.0
    %3005 = vmatpush1.xpose.msra.mxu0 0.0
    %3006 = vmatprep.mubr.f32.mxu0 0.0
    %3007 = vmatmul.mubr.f32.gmra.mrb[0].mxu0 %v2910
    %v3008 = vpop.f32.mrb[0].mxu0
    %v3009 = vadd.f32 0.0, %v3008
    %v3010 = vpop.f32.mrb[0].mxu0
    %3011 = vmatprep.mubr.f32.mxu0 0.0
    %3012 = vmatmul.mubr.f32.gmra.mrb[0].mxu0 %v2912
    %v3013 = vpop.f32.mrb[0].mxu0
    %v3014 = vadd.f32 0.0, %v3013
    %v3015 = vpop.f32.mrb[0].mxu0
    %3016 = vmatprep.mubr.f32.mxu0 0.0
    %3017 = vmatmul.mubr.f32.gmra.mrb[0].mxu0 %v2914
    %v3018 = vpop.f32.mrb[0].mxu0
    %v3019 = vadd.f32 0.0, %v3018
    %v3020 = vpop.f32.mrb[0].mxu0
    %3021 = vmatprep.mubr.f32.mxu0 0.0
    %3022 = vmatmul.mubr.f32.gmra.mrb[0].mxu0 %v2916
    %v3023 = vpop.f32.mrb[0].mxu0
    %v3024 = vadd.f32 0.0, %v3023
    %v3025 = vpop.f32.mrb[0].mxu0
    %3026 = vmatprep.mubr.f32.mxu0 0.0
    %3027 = vmatmul.mubr.f32.gmra.mrb[0].mxu0 %v2918
    %v3028 = vpop.f32.mrb[0].mxu0
    %v3029 = vadd.f32 0.0, %v3028
    %v3030 = vpop.f32.mrb[0].mxu0
    %3031 = vmatprep.mubr.f32.mxu0 0.0
    %3032 = vmatmul.mubr.f32.gmra.mrb[0].mxu0 %v2920
    %v3033 = vpop.f32.mrb[0].mxu0
    %v3034 = vadd.f32 0.0, %v3033
    %v3035 = vpop.f32.mrb[0].mxu0
    %3036 = vmatprep.mubr.f32.mxu0 0.0
    %3037 = vmatmul.mubr.f32.gmra.mrb[0].mxu0 %v2922
    %v3038 = vpop.f32.mrb[0].mxu0
    %v3039 = vadd.f32 0.0, %v3038
    %v3040 = vpop.f32.mrb[0].mxu0
    %3041 = vmatprep.mubr.f32.mxu0 0.0
    %3042 = vmatmul.mubr.f32.gmra.mrb[0].mxu0 %v2924
    %v3043 = vpop.f32.mrb[0].mxu0
    %v3044 = vadd.f32 0.0, %v3043
    %v3045 = vpop.f32.mrb[0].mxu0
    %3046 = vmatprep.mubr.f32.mxu0 0.0
    %3047 = vmatmul.mubr.f32.gmra.mrb[0].mxu0 %v2926
    %v3048 = vpop.f32.mrb[0].mxu0
    %v3049 = vadd.f32 0.0, %v3048
    %v3050 = vpop.f32.mrb[0].mxu0
    %3051 = vmatprep.mubr.f32.mxu0 0.0
    %3052 = vmatmul.mubr.f32.gmra.mrb[0].mxu0 %v2928
    %v3053 = vpop.f32.mrb[0].mxu0
    %v3054 = vadd.f32 0.0, %v3053
    %v3055 = vpop.f32.mrb[0].mxu0
    %3056 = vmatprep.mubr.f32.mxu0 0.0
    %3057 = vmatmul.mubr.f32.gmra.mrb[0].mxu0 %v2930
    %v3058 = vpop.f32.mrb[0].mxu0
    %v3059 = vadd.f32 0.0, %v3058
    %v3060 = vpop.f32.mrb[0].mxu0
    %3061 = vmatprep.mubr.f32.mxu0 0.0
    %3062 = vmatmul.mubr.f32.gmra.mrb[0].mxu0 %v2932
    %v3063 = vpop.f32.mrb[0].mxu0
    %v3064 = vadd.f32 0.0, %v3063
    %v3065 = vpop.f32.mrb[0].mxu0
    %3066 = vmatprep.mubr.f32.mxu0 0.0
    %3067 = vmatmul.mubr.f32.gmra.mrb[0].mxu0 %v2934
    %v3068 = vpop.f32.mrb[0].mxu0
    %v3069 = vadd.f32 0.0, %v3068
    %v3070 = vpop.f32.mrb[0].mxu0
    %3071 = vmatprep.mubr.f32.mxu0 0.0
    %3072 = vmatmul.mubr.f32.gmra.mrb[0].mxu0 %v2936
    %v3073 = vpop.f32.mrb[0].mxu0
    %v3074 = vadd.f32 0.0, %v3073
    %v3075 = vpop.f32.mrb[0].mxu0
    %3076 = vmatprep.mubr.f32.mxu0 0.0
    %3077 = vmatmul.mubr.f32.gmra.mrb[0].mxu0 %v2938
    %v3078 = vpop.f32.mrb[0].mxu0
    %v3079 = vadd.f32 0.0, %v3078
    %v3080 = vpop.f32.mrb[0].mxu0
    %3081 = vmatprep.mubr.f32.mxu0 0.0
    %3082 = vmatmul.mubr.f32.gmra.mrb[0].mxu0 %v2940
    %v3083 = vpop.f32.mrb[0].mxu0
    %v3084 = vadd.f32 0.0, %v3083
    %v3085 = vpop.f32.mrb[0].mxu0
    %3086 = vdwg.mxu0
    %v3087 = vmul.f32 %v3009, %v2399
    %v3088 = vmul.f32 %v3014, %v2400
    %v3089 = vmul.f32 %v3019, %v2401
    %v3090 = vmul.f32 %v3024, %v2402
    %v3091 = vmul.f32 %v3029, %v2403
    %v3092 = vmul.f32 %v3034, %v2404
    %v3093 = vmul.f32 %v3039, %v2405
    %v3094 = vmul.f32 %v3044, %v2406
    %v3095 = vmul.f32 %v3049, %v2407
    %v3096 = vmul.f32 %v3054, %v2408
    %v3097 = vmul.f32 %v3059, %v2409
    %v3098 = vmul.f32 %v3064, %v2410
    %v3099 = vmul.f32 %v3069, %v2411
    %v3100 = vmul.f32 %v3074, %v2412
    %v3101 = vmul.f32 %v3079, %v2413
    %v3102 = vmul.f32 %v3084, %v2414
    %v3103 = vld [vmem:[#allocation5] sm:$0xff]
    %v3104 = vld [vmem:[#allocation5 + $0x8] sm:$0xff]
    %v3105 = vld [vmem:[#allocation5 + $0x10] sm:$0xff]
    %v3106 = vld [vmem:[#allocation5 + $0x18] sm:$0xff]
    %v3107 = vld [vmem:[#allocation5 + $0x20] sm:$0xff]
    %v3108 = vld [vmem:[#allocation5 + $0x28] sm:$0xff]
    %v3109 = vld [vmem:[#allocation5 + $0x30] sm:$0xff]
    %v3110 = vld [vmem:[#allocation5 + $0x38] sm:$0xff]
    %v3111 = vld [vmem:[#allocation5 + $0x40] sm:$0xff]
    %v3112 = vld [vmem:[#allocation5 + $0x48] sm:$0xff]
    %v3113 = vld [vmem:[#allocation5 + $0x50] sm:$0xff]
    %v3114 = vld [vmem:[#allocation5 + $0x58] sm:$0xff]
    %v3115 = vld [vmem:[#allocation5 + $0x60] sm:$0xff]
    %v3116 = vld [vmem:[#allocation5 + $0x68] sm:$0xff]
    %v3117 = vld [vmem:[#allocation5 + $0x70] sm:$0xff]
    %v3118 = vld [vmem:[#allocation5 + $0x78] sm:$0xff]
    %v3119 = vadd.f32 %v3103, %v3087
    %v3120 = vadd.f32 %v3104, %v3088
    %v3121 = vadd.f32 %v3105, %v3089
    %v3122 = vadd.f32 %v3106, %v3090
    %v3123 = vadd.f32 %v3107, %v3091
    %v3124 = vadd.f32 %v3108, %v3092
    %v3125 = vadd.f32 %v3109, %v3093
    %v3126 = vadd.f32 %v3110, %v3094
    %v3127 = vadd.f32 %v3111, %v3095
    %v3128 = vadd.f32 %v3112, %v3096
    %v3129 = vadd.f32 %v3113, %v3097
    %v3130 = vadd.f32 %v3114, %v3098
    %v3131 = vadd.f32 %v3115, %v3099
    %v3132 = vadd.f32 %v3116, %v3100
    %v3133 = vadd.f32 %v3117, %v3101
    %v3134 = vadd.f32 %v3118, %v3102
    %3135 = vst [vmem:[#allocation5] sm:$0xff] %v3119
    %3136 = vst [vmem:[#allocation5 + $0x8] sm:$0xff] %v3120
    %3137 = vst [vmem:[#allocation5 + $0x10] sm:$0xff] %v3121
    %3138 = vst [vmem:[#allocation5 + $0x18] sm:$0xff] %v3122
    %3139 = vst [vmem:[#allocation5 + $0x20] sm:$0xff] %v3123
    %3140 = vst [vmem:[#allocation5 + $0x28] sm:$0xff] %v3124
    %3141 = vst [vmem:[#allocation5 + $0x30] sm:$0xff] %v3125
    %3142 = vst [vmem:[#allocation5 + $0x38] sm:$0xff] %v3126
    %3143 = vst [vmem:[#allocation5 + $0x40] sm:$0xff] %v3127
    %3144 = vst [vmem:[#allocation5 + $0x48] sm:$0xff] %v3128
    %3145 = vst [vmem:[#allocation5 + $0x50] sm:$0xff] %v3129
    %3146 = vst [vmem:[#allocation5 + $0x58] sm:$0xff] %v3130
    %3147 = vst [vmem:[#allocation5 + $0x60] sm:$0xff] %v3131
    %3148 = vst [vmem:[#allocation5 + $0x68] sm:$0xff] %v3132
    %3149 = vst [vmem:[#allocation5 + $0x70] sm:$0xff] %v3133
    %3150 = vst [vmem:[#allocation5 + $0x78] sm:$0xff] %v3134
    %v3151 = vld [vmem:[%s1325] sm:$0xff]
    %v3152 = vld [vmem:[%s1325 + $0x8] sm:$0xff]
    %v3153 = vld [vmem:[%s1325 + $0x10] sm:$0xff]
    %v3154 = vld [vmem:[%s1325 + $0x18] sm:$0xff]
    %v3155 = vld [vmem:[%s1325 + $0x20] sm:$0xff]
    %v3156 = vld [vmem:[%s1325 + $0x28] sm:$0xff]
    %v3157 = vld [vmem:[%s1325 + $0x30] sm:$0xff]
    %v3158 = vld [vmem:[%s1325 + $0x38] sm:$0xff]
    %v3159 = vld [vmem:[%s1325 + $0x40] sm:$0xff]
    %v3160 = vld [vmem:[%s1325 + $0x48] sm:$0xff]
    %v3161 = vld [vmem:[%s1325 + $0x50] sm:$0xff]
    %v3162 = vld [vmem:[%s1325 + $0x58] sm:$0xff]
    %v3163 = vld [vmem:[%s1325 + $0x60] sm:$0xff]
    %v3164 = vld [vmem:[%s1325 + $0x68] sm:$0xff]
    %v3165 = vld [vmem:[%s1325 + $0x70] sm:$0xff]
    %v3166 = vld [vmem:[%s1325 + $0x78] sm:$0xff]
    %vm3167 = vcmp.eq.f32.partialorder %v1776, 3.0
    %vm3168 = vcmp.eq.f32.partialorder %v1777, 3.0
    %vm3169 = vcmp.eq.f32.partialorder %v1778, 3.0
    %vm3170 = vcmp.eq.f32.partialorder %v1779, 3.0
    %vm3171 = vcmp.eq.f32.partialorder %v1780, 3.0
    %vm3172 = vcmp.eq.f32.partialorder %v1781, 3.0
    %vm3173 = vcmp.eq.f32.partialorder %v1782, 3.0
    %vm3174 = vcmp.eq.f32.partialorder %v1783, 3.0
    %vm3175 = vcmp.eq.f32.partialorder %v1784, 3.0
    %vm3176 = vcmp.eq.f32.partialorder %v1785, 3.0
    %vm3177 = vcmp.eq.f32.partialorder %v1786, 3.0
    %vm3178 = vcmp.eq.f32.partialorder %v1787, 3.0
    %vm3179 = vcmp.eq.f32.partialorder %v1788, 3.0
    %vm3180 = vcmp.eq.f32.partialorder %v1789, 3.0
    %vm3181 = vcmp.eq.f32.partialorder %v1790, 3.0
    %vm3182 = vcmp.eq.f32.partialorder %v1791, 3.0
    %v3183 = vsel %vm3167, 1, 0
    %v3184 = vsel %vm3168, 1, 0
    %v3185 = vsel %vm3169, 1, 0
    %v3186 = vsel %vm3170, 1, 0
    %v3187 = vsel %vm3171, 1, 0
    %v3188 = vsel %vm3172, 1, 0
    %v3189 = vsel %vm3173, 1, 0
    %v3190 = vsel %vm3174, 1, 0
    %v3191 = vsel %vm3175, 1, 0
    %v3192 = vsel %vm3176, 1, 0
    %v3193 = vsel %vm3177, 1, 0
    %v3194 = vsel %vm3178, 1, 0
    %v3195 = vsel %vm3179, 1, 0
    %v3196 = vsel %vm3180, 1, 0
    %v3197 = vsel %vm3181, 1, 0
    %v3198 = vsel %vm3182, 1, 0
    %v3199 = vcvt.s32.f32 %v3183
    %v3200 = vcvt.s32.f32 %v3184
    %v3201 = vcvt.s32.f32 %v3185
    %v3202 = vcvt.s32.f32 %v3186
    %v3203 = vcvt.s32.f32 %v3187
    %v3204 = vcvt.s32.f32 %v3188
    %v3205 = vcvt.s32.f32 %v3189
    %v3206 = vcvt.s32.f32 %v3190
    %v3207 = vcvt.s32.f32 %v3191
    %v3208 = vcvt.s32.f32 %v3192
    %v3209 = vcvt.s32.f32 %v3193
    %v3210 = vcvt.s32.f32 %v3194
    %v3211 = vcvt.s32.f32 %v3195
    %v3212 = vcvt.s32.f32 %v3196
    %v3213 = vcvt.s32.f32 %v3197
    %v3214 = vcvt.s32.f32 %v3198
    %v3215 = vmul.f32 %v3151, %v1744
    %v3216 = vmul.f32 %v3152, %v1745
    %v3217 = vmul.f32 %v3153, %v1746
    %v3218 = vmul.f32 %v3154, %v1747
    %v3219 = vmul.f32 %v3155, %v1748
    %v3220 = vmul.f32 %v3156, %v1749
    %v3221 = vmul.f32 %v3157, %v1750
    %v3222 = vmul.f32 %v3158, %v1751
    %v3223 = vmul.f32 %v3159, %v1752
    %v3224 = vmul.f32 %v3160, %v1753
    %v3225 = vmul.f32 %v3161, %v1754
    %v3226 = vmul.f32 %v3162, %v1755
    %v3227 = vmul.f32 %v3163, %v1756
    %v3228 = vmul.f32 %v3164, %v1757
    %v3229 = vmul.f32 %v3165, %v1758
    %v3230 = vmul.f32 %v3166, %v1759
    %v3231 = vmul.f32 %v3199, %v3215
    %v3232 = vmul.f32 %v3200, %v3216
    %v3233 = vmul.f32 %v3201, %v3217
    %v3234 = vmul.f32 %v3202, %v3218
    %v3235 = vmul.f32 %v3203, %v3219
    %v3236 = vmul.f32 %v3204, %v3220
    %v3237 = vmul.f32 %v3205, %v3221
    %v3238 = vmul.f32 %v3206, %v3222
    %v3239 = vmul.f32 %v3207, %v3223
    %v3240 = vmul.f32 %v3208, %v3224
    %v3241 = vmul.f32 %v3209, %v3225
    %v3242 = vmul.f32 %v3210, %v3226
    %v3243 = vmul.f32 %v3211, %v3227
    %v3244 = vmul.f32 %v3212, %v3228
    %v3245 = vmul.f32 %v3213, %v3229
    %v3246 = vmul.f32 %v3214, %v3230
    %3247 = vmatprep.subr.mxu0 0.0
    %3248 = vmatpush1.xpose.msra.mxu0 %v3231
    %3249 = vmatprep.subr.mxu0 0.0
    %3250 = vmatpush1.xpose.msra.mxu0 %v3232
    %3251 = vmatprep.subr.mxu0 0.0
    %3252 = vmatpush1.xpose.msra.mxu0 %v3233
    %3253 = vmatprep.subr.mxu0 0.0
    %3254 = vmatpush1.xpose.msra.mxu0 %v3234
    %3255 = vmatprep.subr.mxu0 0.0
    %3256 = vmatpush1.xpose.msra.mxu0 %v3235
    %3257 = vmatprep.subr.mxu0 0.0
    %3258 = vmatpush1.xpose.msra.mxu0 %v3236
    %3259 = vmatprep.subr.mxu0 0.0
    %3260 = vmatpush1.xpose.msra.mxu0 %v3237
    %3261 = vmatprep.subr.mxu0 0.0
    %3262 = vmatpush1.xpose.msra.mxu0 %v3238
    %3263 = vmatprep.subr.mxu0 0.0
    %3264 = vmatpush1.xpose.msra.mxu0 %v3239
    %3265 = vmatprep.subr.mxu0 0.0
    %3266 = vmatpush1.xpose.msra.mxu0 %v3240
    %3267 = vmatprep.subr.mxu0 0.0
    %3268 = vmatpush1.xpose.msra.mxu0 %v3241
    %3269 = vmatprep.subr.mxu0 0.0
    %3270 = vmatpush1.xpose.msra.mxu0 %v3242
    %3271 = vmatprep.subr.mxu0 0.0
    %3272 = vmatpush1.xpose.msra.mxu0 %v3243
    %3273 = vmatprep.subr.mxu0 0.0
    %3274 = vmatpush1.xpose.msra.mxu0 %v3244
    %3275 = vmatprep.subr.mxu0 0.0
    %3276 = vmatpush1.xpose.msra.mxu0 %v3245
    %3277 = vmatprep.subr.mxu0 0.0
    %3278 = vmatpush1.xpose.msra.mxu0 %v3246
    %3279 = vmatprep.subr.mxu0 0.0
    %3280 = vmatpush1.xpose.msra.mxu0 0.0
    %3281 = vmatprep.subr.mxu0 0.0
    %3282 = vmatpush1.xpose.msra.mxu0 0.0
    %3283 = vmatprep.subr.mxu0 0.0
    %3284 = vmatpush1.xpose.msra.mxu0 0.0
    %3285 = vmatprep.subr.mxu0 0.0
    %3286 = vmatpush1.xpose.msra.mxu0 0.0
    %3287 = vmatprep.subr.mxu0 0.0
    %3288 = vmatpush1.xpose.msra.mxu0 0.0
    %3289 = vmatprep.subr.mxu0 0.0
    %3290 = vmatpush1.xpose.msra.mxu0 0.0
    %3291 = vmatprep.subr.mxu0 0.0
    %3292 = vmatpush1.xpose.msra.mxu0 0.0
    %3293 = vmatprep.subr.mxu0 0.0
    %3294 = vmatpush1.xpose.msra.mxu0 0.0
    %3295 = vmatprep.subr.mxu0 0.0
    %3296 = vmatpush1.xpose.msra.mxu0 0.0
    %3297 = vmatprep.subr.mxu0 0.0
    %3298 = vmatpush1.xpose.msra.mxu0 0.0
    %3299 = vmatprep.subr.mxu0 0.0
    %3300 = vmatpush1.xpose.msra.mxu0 0.0
    %3301 = vmatprep.subr.mxu0 0.0
    %3302 = vmatpush1.xpose.msra.mxu0 0.0
    %3303 = vmatprep.subr.mxu0 0.0
    %3304 = vmatpush1.xpose.msra.mxu0 0.0
    %3305 = vmatprep.subr.mxu0 0.0
    %3306 = vmatpush1.xpose.msra.mxu0 0.0
    %3307 = vmatprep.subr.mxu0 0.0
    %3308 = vmatpush1.xpose.msra.mxu0 0.0
    %3309 = vmatprep.subr.mxu0 0.0
    %3310 = vmatpush1.xpose.msra.mxu0 0.0
    %3311 = vmatprep.mubr.f32.mxu0 0.0
    %3312 = vmatmul.mubr.f32.gmra.mrb[0].mxu0 1.0
    %v3313 = vpop.f32.mrb[0].mxu0
    %v3314 = vadd.f32 0.0, %v3313
    %v3315 = vpop.f32.mrb[0].mxu0
    %3316 = vdwg.mxu0
    %vm3317 = vcmp.eq.f32.partialorder %v3314, 0.0
    %v3318 = vsel %vm3317, 1.0, %v3314
    %v3319 = vrcp.pop %v3318
    %v3320 = vlaneseq
    %v3321 = vshrl.u32 %v3320, 7
    %v3322 = vsub.s32 0, %v3321
    %v3323 = vrot.slane %v3319, %v3322
    %v3324 = vmul.f32 %v3231, %v3323
    %v3325 = vmul.f32 %v3232, %v3323
    %v3326 = vmul.f32 %v3233, %v3323
    %v3327 = vmul.f32 %v3234, %v3323
    %v3328 = vmul.f32 %v3235, %v3323
    %v3329 = vmul.f32 %v3236, %v3323
    %v3330 = vmul.f32 %v3237, %v3323
    %v3331 = vmul.f32 %v3238, %v3323
    %v3332 = vmul.f32 %v3239, %v3323
    %v3333 = vmul.f32 %v3240, %v3323
    %v3334 = vmul.f32 %v3241, %v3323
    %v3335 = vmul.f32 %v3242, %v3323
    %v3336 = vmul.f32 %v3243, %v3323
    %v3337 = vmul.f32 %v3244, %v3323
    %v3338 = vmul.f32 %v3245, %v3323
    %v3339 = vmul.f32 %v3246, %v3323
    %3356 = vmatprep.subr.mxu0 0.0
    %3357 = vmatpush1.msra.mxu0 %v1037
    %3358 = vmatprep.subr.mxu0 0.0
    %3359 = vmatpush1.msra.mxu0 %v1039
    %3360 = vmatprep.subr.mxu0 0.0
    %3361 = vmatpush1.msra.mxu0 %v1041
    %3362 = vmatprep.subr.mxu0 0.0
    %3363 = vmatpush1.msra.mxu0 %v1043
    %3364 = vmatprep.subr.mxu0 0.0
    %3365 = vmatpush1.msra.mxu0 %v1045
    %3366 = vmatprep.subr.mxu0 0.0
    %3367 = vmatpush1.msra.mxu0 %v1047
    %3368 = vmatprep.subr.mxu0 0.0
    %3369 = vmatpush1.msra.mxu0 %v1049
    %3370 = vmatprep.subr.mxu0 0.0
    %3371 = vmatpush1.msra.mxu0 %v1051
    %3372 = vmatprep.subr.mxu0 0.0
    %3373 = vmatpush1.msra.mxu0 %v1053
    %3374 = vmatprep.subr.mxu0 0.0
    %3375 = vmatpush1.msra.mxu0 %v1055
    %3376 = vmatprep.subr.mxu0 0.0
    %3377 = vmatpush1.msra.mxu0 %v1057
    %3378 = vmatprep.subr.mxu0 0.0
    %3379 = vmatpush1.msra.mxu0 %v1059
    %3380 = vmatprep.subr.mxu0 0.0
    %3381 = vmatpush1.msra.mxu0 %v1061
    %3382 = vmatprep.subr.mxu0 0.0
    %3383 = vmatpush1.msra.mxu0 %v1063
    %3384 = vmatprep.subr.mxu0 0.0
    %3385 = vmatpush1.msra.mxu0 %v1065
    %3386 = vmatprep.subr.mxu0 0.0
    %3387 = vmatpush1.msra.mxu0 %v1067
    %3388 = vmatprep.subr.mxu0 0.0
    %3389 = vmatpush1.msra.mxu0 0.0
    %3390 = vmatprep.subr.mxu0 0.0
    %3391 = vmatpush1.msra.mxu0 0.0
    %3392 = vmatprep.subr.mxu0 0.0
    %3393 = vmatpush1.msra.mxu0 0.0
    %3394 = vmatprep.subr.mxu0 0.0
    %3395 = vmatpush1.msra.mxu0 0.0
    %3396 = vmatprep.subr.mxu0 0.0
    %3397 = vmatpush1.msra.mxu0 0.0
    %3398 = vmatprep.subr.mxu0 0.0
    %3399 = vmatpush1.msra.mxu0 0.0
    %3400 = vmatprep.subr.mxu0 0.0
    %3401 = vmatpush1.msra.mxu0 0.0
    %3402 = vmatprep.subr.mxu0 0.0
    %3403 = vmatpush1.msra.mxu0 0.0
    %3404 = vmatprep.subr.mxu0 0.0
    %3405 = vmatpush1.msra.mxu0 0.0
    %3406 = vmatprep.subr.mxu0 0.0
    %3407 = vmatpush1.msra.mxu0 0.0
    %3408 = vmatprep.subr.mxu0 0.0
    %3409 = vmatpush1.msra.mxu0 0.0
    %3410 = vmatprep.subr.mxu0 0.0
    %3411 = vmatpush1.msra.mxu0 0.0
    %3412 = vmatprep.subr.mxu0 0.0
    %3413 = vmatpush1.msra.mxu0 0.0
    %3414 = vmatprep.subr.mxu0 0.0
    %3415 = vmatpush1.msra.mxu0 0.0
    %3416 = vmatprep.subr.mxu0 0.0
    %3417 = vmatpush1.msra.mxu0 0.0
    %3418 = vmatprep.subr.mxu0 0.0
    %3419 = vmatpush1.msra.mxu0 0.0
    %3420 = vmatprep.mubr.f32.mxu0 0.0
    %3421 = vmatmul.mubr.f32.gmra.mrb[0].mxu0 %v3324
    %v3422 = vpop.f32.mrb[0].mxu0
    %v3423 = vadd.f32 0.0, %v3422
    %v3424 = vpop.f32.mrb[0].mxu0
    %3425 = vmatprep.mubr.f32.mxu0 0.0
    %3426 = vmatmul.mubr.f32.gmra.mrb[0].mxu0 %v3325
    %v3427 = vpop.f32.mrb[0].mxu0
    %v3428 = vadd.f32 0.0, %v3427
    %v3429 = vpop.f32.mrb[0].mxu0
    %3430 = vmatprep.mubr.f32.mxu0 0.0
    %3431 = vmatmul.mubr.f32.gmra.mrb[0].mxu0 %v3326
    %v3432 = vpop.f32.mrb[0].mxu0
    %v3433 = vadd.f32 0.0, %v3432
    %v3434 = vpop.f32.mrb[0].mxu0
    %3435 = vmatprep.mubr.f32.mxu0 0.0
    %3436 = vmatmul.mubr.f32.gmra.mrb[0].mxu0 %v3327
    %v3437 = vpop.f32.mrb[0].mxu0
    %v3438 = vadd.f32 0.0, %v3437
    %v3439 = vpop.f32.mrb[0].mxu0
    %3440 = vmatprep.mubr.f32.mxu0 0.0
    %3441 = vmatmul.mubr.f32.gmra.mrb[0].mxu0 %v3328
    %v3442 = vpop.f32.mrb[0].mxu0
    %v3443 = vadd.f32 0.0, %v3442
    %v3444 = vpop.f32.mrb[0].mxu0
    %3445 = vmatprep.mubr.f32.mxu0 0.0
    %3446 = vmatmul.mubr.f32.gmra.mrb[0].mxu0 %v3329
    %v3447 = vpop.f32.mrb[0].mxu0
    %v3448 = vadd.f32 0.0, %v3447
    %v3449 = vpop.f32.mrb[0].mxu0
    %3450 = vmatprep.mubr.f32.mxu0 0.0
    %3451 = vmatmul.mubr.f32.gmra.mrb[0].mxu0 %v3330
    %v3452 = vpop.f32.mrb[0].mxu0
    %v3453 = vadd.f32 0.0, %v3452
    %v3454 = vpop.f32.mrb[0].mxu0
    %3455 = vmatprep.mubr.f32.mxu0 0.0
    %3456 = vmatmul.mubr.f32.gmra.mrb[0].mxu0 %v3331
    %v3457 = vpop.f32.mrb[0].mxu0
    %v3458 = vadd.f32 0.0, %v3457
    %v3459 = vpop.f32.mrb[0].mxu0
    %3460 = vmatprep.mubr.f32.mxu0 0.0
    %3461 = vmatmul.mubr.f32.gmra.mrb[0].mxu0 %v3332
    %v3462 = vpop.f32.mrb[0].mxu0
    %v3463 = vadd.f32 0.0, %v3462
    %v3464 = vpop.f32.mrb[0].mxu0
    %3465 = vmatprep.mubr.f32.mxu0 0.0
    %3466 = vmatmul.mubr.f32.gmra.mrb[0].mxu0 %v3333
    %v3467 = vpop.f32.mrb[0].mxu0
    %v3468 = vadd.f32 0.0, %v3467
    %v3469 = vpop.f32.mrb[0].mxu0
    %3470 = vmatprep.mubr.f32.mxu0 0.0
    %3471 = vmatmul.mubr.f32.gmra.mrb[0].mxu0 %v3334
    %v3472 = vpop.f32.mrb[0].mxu0
    %v3473 = vadd.f32 0.0, %v3472
    %v3474 = vpop.f32.mrb[0].mxu0
    %3475 = vmatprep.mubr.f32.mxu0 0.0
    %3476 = vmatmul.mubr.f32.gmra.mrb[0].mxu0 %v3335
    %v3477 = vpop.f32.mrb[0].mxu0
    %v3478 = vadd.f32 0.0, %v3477
    %v3479 = vpop.f32.mrb[0].mxu0
    %3480 = vmatprep.mubr.f32.mxu0 0.0
    %3481 = vmatmul.mubr.f32.gmra.mrb[0].mxu0 %v3336
    %v3482 = vpop.f32.mrb[0].mxu0
    %v3483 = vadd.f32 0.0, %v3482
    %v3484 = vpop.f32.mrb[0].mxu0
    %3485 = vmatprep.mubr.f32.mxu0 0.0
    %3486 = vmatmul.mubr.f32.gmra.mrb[0].mxu0 %v3337
    %v3487 = vpop.f32.mrb[0].mxu0
    %v3488 = vadd.f32 0.0, %v3487
    %v3489 = vpop.f32.mrb[0].mxu0
    %3490 = vmatprep.mubr.f32.mxu0 0.0
    %3491 = vmatmul.mubr.f32.gmra.mrb[0].mxu0 %v3338
    %v3492 = vpop.f32.mrb[0].mxu0
    %v3493 = vadd.f32 0.0, %v3492
    %v3494 = vpop.f32.mrb[0].mxu0
    %3495 = vmatprep.mubr.f32.mxu0 0.0
    %3496 = vmatmul.mubr.f32.gmra.mrb[0].mxu0 %v3339
    %v3497 = vpop.f32.mrb[0].mxu0
    %v3498 = vadd.f32 0.0, %v3497
    %v3499 = vpop.f32.mrb[0].mxu0
    %3500 = vdwg.mxu0
    %v3501 = vmul.f32 %v3423, 0.7
    %v3502 = vmul.f32 %v3428, 0.7
    %v3503 = vmul.f32 %v3433, 0.7
    %v3504 = vmul.f32 %v3438, 0.7
    %v3505 = vmul.f32 %v3443, 0.7
    %v3506 = vmul.f32 %v3448, 0.7
    %v3507 = vmul.f32 %v3453, 0.7
    %v3508 = vmul.f32 %v3458, 0.7
    %v3509 = vmul.f32 %v3463, 0.7
    %v3510 = vmul.f32 %v3468, 0.7
    %v3511 = vmul.f32 %v3473, 0.7
    %v3512 = vmul.f32 %v3478, 0.7
    %v3513 = vmul.f32 %v3483, 0.7
    %v3514 = vmul.f32 %v3488, 0.7
    %v3515 = vmul.f32 %v3493, 0.7
    %v3516 = vmul.f32 %v3498, 0.7
    %3533 = vrot.lane.b32.xlu0 %v3501, 64
    %v3534 = vpop.permute.xlu0 %3533
    %3535 = vrot.lane.b32.xlu0 %v3502, 64
    %v3536 = vpop.permute.xlu0 %3535
    %3537 = vrot.lane.b32.xlu0 %v3503, 64
    %v3538 = vpop.permute.xlu0 %3537
    %3539 = vrot.lane.b32.xlu0 %v3504, 64
    %v3540 = vpop.permute.xlu0 %3539
    %3541 = vrot.lane.b32.xlu0 %v3505, 64
    %v3542 = vpop.permute.xlu0 %3541
    %3543 = vrot.lane.b32.xlu0 %v3506, 64
    %v3544 = vpop.permute.xlu0 %3543
    %3545 = vrot.lane.b32.xlu0 %v3507, 64
    %v3546 = vpop.permute.xlu0 %3545
    %3547 = vrot.lane.b32.xlu0 %v3508, 64
    %v3548 = vpop.permute.xlu0 %3547
    %3549 = vrot.lane.b32.xlu0 %v3509, 64
    %v3550 = vpop.permute.xlu0 %3549
    %3551 = vrot.lane.b32.xlu0 %v3510, 64
    %v3552 = vpop.permute.xlu0 %3551
    %3553 = vrot.lane.b32.xlu0 %v3511, 64
    %v3554 = vpop.permute.xlu0 %3553
    %3555 = vrot.lane.b32.xlu0 %v3512, 64
    %v3556 = vpop.permute.xlu0 %3555
    %3557 = vrot.lane.b32.xlu0 %v3513, 64
    %v3558 = vpop.permute.xlu0 %3557
    %3559 = vrot.lane.b32.xlu0 %v3514, 64
    %v3560 = vpop.permute.xlu0 %3559
    %3561 = vrot.lane.b32.xlu0 %v3515, 64
    %v3562 = vpop.permute.xlu0 %3561
    %3563 = vrot.lane.b32.xlu0 %v3516, 64
    %v3564 = vpop.permute.xlu0 %3563
    %v3581 = vadd.f32 %v1965, %v3534
    %v3582 = vadd.f32 %v1966, %v3536
    %v3583 = vadd.f32 %v1967, %v3538
    %v3584 = vadd.f32 %v1968, %v3540
    %v3585 = vadd.f32 %v1969, %v3542
    %v3586 = vadd.f32 %v1970, %v3544
    %v3587 = vadd.f32 %v1971, %v3546
    %v3588 = vadd.f32 %v1972, %v3548
    %v3589 = vadd.f32 %v1973, %v3550
    %v3590 = vadd.f32 %v1974, %v3552
    %v3591 = vadd.f32 %v1975, %v3554
    %v3592 = vadd.f32 %v1976, %v3556
    %v3593 = vadd.f32 %v1977, %v3558
    %v3594 = vadd.f32 %v1978, %v3560
    %v3595 = vadd.f32 %v1979, %v3562
    %v3596 = vadd.f32 %v1980, %v3564
    %vm3597 = vcmask 785920
    %3598 = vst.msk [vmem:[#allocation3] sm:$0xff] %vm3597, %v3581
    %3599 = vst.msk [vmem:[#allocation3 + $0x8] sm:$0xff] %vm3597, %v3582
    %3600 = vst.msk [vmem:[#allocation3 + $0x10] sm:$0xff] %vm3597, %v3583
    %3601 = vst.msk [vmem:[#allocation3 + $0x18] sm:$0xff] %vm3597, %v3584
    %3602 = vst.msk [vmem:[#allocation3 + $0x20] sm:$0xff] %vm3597, %v3585
    %3603 = vst.msk [vmem:[#allocation3 + $0x28] sm:$0xff] %vm3597, %v3586
    %3604 = vst.msk [vmem:[#allocation3 + $0x30] sm:$0xff] %vm3597, %v3587
    %3605 = vst.msk [vmem:[#allocation3 + $0x38] sm:$0xff] %vm3597, %v3588
    %3606 = vst.msk [vmem:[#allocation3 + $0x40] sm:$0xff] %vm3597, %v3589
    %3607 = vst.msk [vmem:[#allocation3 + $0x48] sm:$0xff] %vm3597, %v3590
    %3608 = vst.msk [vmem:[#allocation3 + $0x50] sm:$0xff] %vm3597, %v3591
    %3609 = vst.msk [vmem:[#allocation3 + $0x58] sm:$0xff] %vm3597, %v3592
    %3610 = vst.msk [vmem:[#allocation3 + $0x60] sm:$0xff] %vm3597, %v3593
    %3611 = vst.msk [vmem:[#allocation3 + $0x68] sm:$0xff] %vm3597, %v3594
    %3612 = vst.msk [vmem:[#allocation3 + $0x70] sm:$0xff] %vm3597, %v3595
    %3613 = vst.msk [vmem:[#allocation3 + $0x78] sm:$0xff] %vm3597, %v3596
    %3630 = vrot.lane.b32.xlu0 %v3581, 64
    %v3631 = vpop.permute.xlu0 %3630
    %3632 = vrot.lane.b32.xlu0 %v3582, 64
    %v3633 = vpop.permute.xlu0 %3632
    %3634 = vrot.lane.b32.xlu0 %v3583, 64
    %v3635 = vpop.permute.xlu0 %3634
    %3636 = vrot.lane.b32.xlu0 %v3584, 64
    %v3637 = vpop.permute.xlu0 %3636
    %3638 = vrot.lane.b32.xlu0 %v3585, 64
    %v3639 = vpop.permute.xlu0 %3638
    %3640 = vrot.lane.b32.xlu0 %v3586, 64
    %v3641 = vpop.permute.xlu0 %3640
    %3642 = vrot.lane.b32.xlu0 %v3587, 64
    %v3643 = vpop.permute.xlu0 %3642
    %3644 = vrot.lane.b32.xlu0 %v3588, 64
    %v3645 = vpop.permute.xlu0 %3644
    %3646 = vrot.lane.b32.xlu0 %v3589, 64
    %v3647 = vpop.permute.xlu0 %3646
    %3648 = vrot.lane.b32.xlu0 %v3590, 64
    %v3649 = vpop.permute.xlu0 %3648
    %3650 = vrot.lane.b32.xlu0 %v3591, 64
    %v3651 = vpop.permute.xlu0 %3650
    %3652 = vrot.lane.b32.xlu0 %v3592, 64
    %v3653 = vpop.permute.xlu0 %3652
    %3654 = vrot.lane.b32.xlu0 %v3593, 64
    %v3655 = vpop.permute.xlu0 %3654
    %3656 = vrot.lane.b32.xlu0 %v3594, 64
    %v3657 = vpop.permute.xlu0 %3656
    %3658 = vrot.lane.b32.xlu0 %v3595, 64
    %v3659 = vpop.permute.xlu0 %3658
    %3660 = vrot.lane.b32.xlu0 %v3596, 64
    %v3661 = vpop.permute.xlu0 %3660
    %v3662 = vsel %vm54, %v3631, 0
    %v3664 = vsel %vm54, %v3633, 0
    %v3666 = vsel %vm54, %v3635, 0
    %v3668 = vsel %vm54, %v3637, 0
    %v3670 = vsel %vm54, %v3639, 0
    %v3672 = vsel %vm54, %v3641, 0
    %v3674 = vsel %vm54, %v3643, 0
    %v3676 = vsel %vm54, %v3645, 0
    %v3678 = vsel %vm54, %v3647, 0
    %v3680 = vsel %vm54, %v3649, 0
    %v3682 = vsel %vm54, %v3651, 0
    %v3684 = vsel %vm54, %v3653, 0
    %v3686 = vsel %vm54, %v3655, 0
    %v3688 = vsel %vm54, %v3657, 0
    %v3690 = vsel %vm54, %v3659, 0
    %v3692 = vsel %vm54, %v3661, 0
    %3694 = vmatprep.subr.mxu0 0.0
    %3695 = vmatpush1.xpose.msra.mxu0 %v3662
    %3696 = vmatprep.subr.mxu0 0.0
    %3697 = vmatpush1.xpose.msra.mxu0 %v3664
    %3698 = vmatprep.subr.mxu0 0.0
    %3699 = vmatpush1.xpose.msra.mxu0 %v3666
    %3700 = vmatprep.subr.mxu0 0.0
    %3701 = vmatpush1.xpose.msra.mxu0 %v3668
    %3702 = vmatprep.subr.mxu0 0.0
    %3703 = vmatpush1.xpose.msra.mxu0 %v3670
    %3704 = vmatprep.subr.mxu0 0.0
    %3705 = vmatpush1.xpose.msra.mxu0 %v3672
    %3706 = vmatprep.subr.mxu0 0.0
    %3707 = vmatpush1.xpose.msra.mxu0 %v3674
    %3708 = vmatprep.subr.mxu0 0.0
    %3709 = vmatpush1.xpose.msra.mxu0 %v3676
    %3710 = vmatprep.subr.mxu0 0.0
    %3711 = vmatpush1.xpose.msra.mxu0 %v3678
    %3712 = vmatprep.subr.mxu0 0.0
    %3713 = vmatpush1.xpose.msra.mxu0 %v3680
    %3714 = vmatprep.subr.mxu0 0.0
    %3715 = vmatpush1.xpose.msra.mxu0 %v3682
    %3716 = vmatprep.subr.mxu0 0.0
    %3717 = vmatpush1.xpose.msra.mxu0 %v3684
    %3718 = vmatprep.subr.mxu0 0.0
    %3719 = vmatpush1.xpose.msra.mxu0 %v3686
    %3720 = vmatprep.subr.mxu0 0.0
    %3721 = vmatpush1.xpose.msra.mxu0 %v3688
    %3722 = vmatprep.subr.mxu0 0.0
    %3723 = vmatpush1.xpose.msra.mxu0 %v3690
    %3724 = vmatprep.subr.mxu0 0.0
    %3725 = vmatpush1.xpose.msra.mxu0 %v3692
    %3726 = vmatprep.subr.mxu0 0.0
    %3727 = vmatpush1.xpose.msra.mxu0 0.0
    %3728 = vmatprep.subr.mxu0 0.0
    %3729 = vmatpush1.xpose.msra.mxu0 0.0
    %3730 = vmatprep.subr.mxu0 0.0
    %3731 = vmatpush1.xpose.msra.mxu0 0.0
    %3732 = vmatprep.subr.mxu0 0.0
    %3733 = vmatpush1.xpose.msra.mxu0 0.0
    %3734 = vmatprep.subr.mxu0 0.0
    %3735 = vmatpush1.xpose.msra.mxu0 0.0
    %3736 = vmatprep.subr.mxu0 0.0
    %3737 = vmatpush1.xpose.msra.mxu0 0.0
    %3738 = vmatprep.subr.mxu0 0.0
    %3739 = vmatpush1.xpose.msra.mxu0 0.0
    %3740 = vmatprep.subr.mxu0 0.0
    %3741 = vmatpush1.xpose.msra.mxu0 0.0
    %3742 = vmatprep.subr.mxu0 0.0
    %3743 = vmatpush1.xpose.msra.mxu0 0.0
    %3744 = vmatprep.subr.mxu0 0.0
    %3745 = vmatpush1.xpose.msra.mxu0 0.0
    %3746 = vmatprep.subr.mxu0 0.0
    %3747 = vmatpush1.xpose.msra.mxu0 0.0
    %3748 = vmatprep.subr.mxu0 0.0
    %3749 = vmatpush1.xpose.msra.mxu0 0.0
    %3750 = vmatprep.subr.mxu0 0.0
    %3751 = vmatpush1.xpose.msra.mxu0 0.0
    %3752 = vmatprep.subr.mxu0 0.0
    %3753 = vmatpush1.xpose.msra.mxu0 0.0
    %3754 = vmatprep.subr.mxu0 0.0
    %3755 = vmatpush1.xpose.msra.mxu0 0.0
    %3756 = vmatprep.subr.mxu0 0.0
    %3757 = vmatpush1.xpose.msra.mxu0 0.0
    %3758 = vmatprep.mubr.f32.mxu0 0.0
    %3759 = vmatmul.mubr.f32.gmra.mrb[0].mxu0 %v3662
    %v3760 = vpop.f32.mrb[0].mxu0
    %v3761 = vadd.f32 0.0, %v3760
    %v3762 = vpop.f32.mrb[0].mxu0
    %3763 = vmatprep.mubr.f32.mxu0 0.0
    %3764 = vmatmul.mubr.f32.gmra.mrb[0].mxu0 %v3664
    %v3765 = vpop.f32.mrb[0].mxu0
    %v3766 = vadd.f32 0.0, %v3765
    %v3767 = vpop.f32.mrb[0].mxu0
    %3768 = vmatprep.mubr.f32.mxu0 0.0
    %3769 = vmatmul.mubr.f32.gmra.mrb[0].mxu0 %v3666
    %v3770 = vpop.f32.mrb[0].mxu0
    %v3771 = vadd.f32 0.0, %v3770
    %v3772 = vpop.f32.mrb[0].mxu0
    %3773 = vmatprep.mubr.f32.mxu0 0.0
    %3774 = vmatmul.mubr.f32.gmra.mrb[0].mxu0 %v3668
    %v3775 = vpop.f32.mrb[0].mxu0
    %v3776 = vadd.f32 0.0, %v3775
    %v3777 = vpop.f32.mrb[0].mxu0
    %3778 = vmatprep.mubr.f32.mxu0 0.0
    %3779 = vmatmul.mubr.f32.gmra.mrb[0].mxu0 %v3670
    %v3780 = vpop.f32.mrb[0].mxu0
    %v3781 = vadd.f32 0.0, %v3780
    %v3782 = vpop.f32.mrb[0].mxu0
    %3783 = vmatprep.mubr.f32.mxu0 0.0
    %3784 = vmatmul.mubr.f32.gmra.mrb[0].mxu0 %v3672
    %v3785 = vpop.f32.mrb[0].mxu0
    %v3786 = vadd.f32 0.0, %v3785
    %v3787 = vpop.f32.mrb[0].mxu0
    %3788 = vmatprep.mubr.f32.mxu0 0.0
    %3789 = vmatmul.mubr.f32.gmra.mrb[0].mxu0 %v3674
    %v3790 = vpop.f32.mrb[0].mxu0
    %v3791 = vadd.f32 0.0, %v3790
    %v3792 = vpop.f32.mrb[0].mxu0
    %3793 = vmatprep.mubr.f32.mxu0 0.0
    %3794 = vmatmul.mubr.f32.gmra.mrb[0].mxu0 %v3676
    %v3795 = vpop.f32.mrb[0].mxu0
    %v3796 = vadd.f32 0.0, %v3795
    %v3797 = vpop.f32.mrb[0].mxu0
    %3798 = vmatprep.mubr.f32.mxu0 0.0
    %3799 = vmatmul.mubr.f32.gmra.mrb[0].mxu0 %v3678
    %v3800 = vpop.f32.mrb[0].mxu0
    %v3801 = vadd.f32 0.0, %v3800
    %v3802 = vpop.f32.mrb[0].mxu0
    %3803 = vmatprep.mubr.f32.mxu0 0.0
    %3804 = vmatmul.mubr.f32.gmra.mrb[0].mxu0 %v3680
    %v3805 = vpop.f32.mrb[0].mxu0
    %v3806 = vadd.f32 0.0, %v3805
    %v3807 = vpop.f32.mrb[0].mxu0
    %3808 = vmatprep.mubr.f32.mxu0 0.0
    %3809 = vmatmul.mubr.f32.gmra.mrb[0].mxu0 %v3682
    %v3810 = vpop.f32.mrb[0].mxu0
    %v3811 = vadd.f32 0.0, %v3810
    %v3812 = vpop.f32.mrb[0].mxu0
    %3813 = vmatprep.mubr.f32.mxu0 0.0
    %3814 = vmatmul.mubr.f32.gmra.mrb[0].mxu0 %v3684
    %v3815 = vpop.f32.mrb[0].mxu0
    %v3816 = vadd.f32 0.0, %v3815
    %v3817 = vpop.f32.mrb[0].mxu0
    %3818 = vmatprep.mubr.f32.mxu0 0.0
    %3819 = vmatmul.mubr.f32.gmra.mrb[0].mxu0 %v3686
    %v3820 = vpop.f32.mrb[0].mxu0
    %v3821 = vadd.f32 0.0, %v3820
    %v3822 = vpop.f32.mrb[0].mxu0
    %3823 = vmatprep.mubr.f32.mxu0 0.0
    %3824 = vmatmul.mubr.f32.gmra.mrb[0].mxu0 %v3688
    %v3825 = vpop.f32.mrb[0].mxu0
    %v3826 = vadd.f32 0.0, %v3825
    %v3827 = vpop.f32.mrb[0].mxu0
    %3828 = vmatprep.mubr.f32.mxu0 0.0
    %3829 = vmatmul.mubr.f32.gmra.mrb[0].mxu0 %v3690
    %v3830 = vpop.f32.mrb[0].mxu0
    %v3831 = vadd.f32 0.0, %v3830
    %v3832 = vpop.f32.mrb[0].mxu0
    %3833 = vmatprep.mubr.f32.mxu0 0.0
    %3834 = vmatmul.mubr.f32.gmra.mrb[0].mxu0 %v3692
    %v3835 = vpop.f32.mrb[0].mxu0
    %v3836 = vadd.f32 0.0, %v3835
    %v3837 = vpop.f32.mrb[0].mxu0
    %3838 = vdwg.mxu0
    %v3839 = vmul.f32 %v3761, %v3151
    %v3840 = vmul.f32 %v3766, %v3152
    %v3841 = vmul.f32 %v3771, %v3153
    %v3842 = vmul.f32 %v3776, %v3154
    %v3843 = vmul.f32 %v3781, %v3155
    %v3844 = vmul.f32 %v3786, %v3156
    %v3845 = vmul.f32 %v3791, %v3157
    %v3846 = vmul.f32 %v3796, %v3158
    %v3847 = vmul.f32 %v3801, %v3159
    %v3848 = vmul.f32 %v3806, %v3160
    %v3849 = vmul.f32 %v3811, %v3161
    %v3850 = vmul.f32 %v3816, %v3162
    %v3851 = vmul.f32 %v3821, %v3163
    %v3852 = vmul.f32 %v3826, %v3164
    %v3853 = vmul.f32 %v3831, %v3165
    %v3854 = vmul.f32 %v3836, %v3166
    %v3855 = vld [vmem:[#allocation5] sm:$0xff]
    %v3856 = vld [vmem:[#allocation5 + $0x8] sm:$0xff]
    %v3857 = vld [vmem:[#allocation5 + $0x10] sm:$0xff]
    %v3858 = vld [vmem:[#allocation5 + $0x18] sm:$0xff]
    %v3859 = vld [vmem:[#allocation5 + $0x20] sm:$0xff]
    %v3860 = vld [vmem:[#allocation5 + $0x28] sm:$0xff]
    %v3861 = vld [vmem:[#allocation5 + $0x30] sm:$0xff]
    %v3862 = vld [vmem:[#allocation5 + $0x38] sm:$0xff]
    %v3863 = vld [vmem:[#allocation5 + $0x40] sm:$0xff]
    %v3864 = vld [vmem:[#allocation5 + $0x48] sm:$0xff]
    %v3865 = vld [vmem:[#allocation5 + $0x50] sm:$0xff]
    %v3866 = vld [vmem:[#allocation5 + $0x58] sm:$0xff]
    %v3867 = vld [vmem:[#allocation5 + $0x60] sm:$0xff]
    %v3868 = vld [vmem:[#allocation5 + $0x68] sm:$0xff]
    %v3869 = vld [vmem:[#allocation5 + $0x70] sm:$0xff]
    %v3870 = vld [vmem:[#allocation5 + $0x78] sm:$0xff]
    %v3871 = vadd.f32 %v3855, %v3839
    %v3872 = vadd.f32 %v3856, %v3840
    %v3873 = vadd.f32 %v3857, %v3841
    %v3874 = vadd.f32 %v3858, %v3842
    %v3875 = vadd.f32 %v3859, %v3843
    %v3876 = vadd.f32 %v3860, %v3844
    %v3877 = vadd.f32 %v3861, %v3845
    %v3878 = vadd.f32 %v3862, %v3846
    %v3879 = vadd.f32 %v3863, %v3847
    %v3880 = vadd.f32 %v3864, %v3848
    %v3881 = vadd.f32 %v3865, %v3849
    %v3882 = vadd.f32 %v3866, %v3850
    %v3883 = vadd.f32 %v3867, %v3851
    %v3884 = vadd.f32 %v3868, %v3852
    %v3885 = vadd.f32 %v3869, %v3853
    %v3886 = vadd.f32 %v3870, %v3854
    %3887 = vst [vmem:[#allocation5] sm:$0xff] %v3871
    %3888 = vst [vmem:[#allocation5 + $0x8] sm:$0xff] %v3872
    %3889 = vst [vmem:[#allocation5 + $0x10] sm:$0xff] %v3873
    %3890 = vst [vmem:[#allocation5 + $0x18] sm:$0xff] %v3874
    %3891 = vst [vmem:[#allocation5 + $0x20] sm:$0xff] %v3875
    %3892 = vst [vmem:[#allocation5 + $0x28] sm:$0xff] %v3876
    %3893 = vst [vmem:[#allocation5 + $0x30] sm:$0xff] %v3877
    %3894 = vst [vmem:[#allocation5 + $0x38] sm:$0xff] %v3878
    %3895 = vst [vmem:[#allocation5 + $0x40] sm:$0xff] %v3879
    %3896 = vst [vmem:[#allocation5 + $0x48] sm:$0xff] %v3880
    %3897 = vst [vmem:[#allocation5 + $0x50] sm:$0xff] %v3881
    %3898 = vst [vmem:[#allocation5 + $0x58] sm:$0xff] %v3882
    %3899 = vst [vmem:[#allocation5 + $0x60] sm:$0xff] %v3883
    %3900 = vst [vmem:[#allocation5 + $0x68] sm:$0xff] %v3884
    %3901 = vst [vmem:[#allocation5 + $0x70] sm:$0xff] %v3885
    %3902 = vst [vmem:[#allocation5 + $0x78] sm:$0xff] %v3886
    %v3903 = vld [vmem:[%s1615] sm:$0xff]
    %v3904 = vld [vmem:[%s1615 + $0x8] sm:$0xff]
    %v3905 = vld [vmem:[%s1615 + $0x10] sm:$0xff]
    %v3906 = vld [vmem:[%s1615 + $0x18] sm:$0xff]
    %v3907 = vld [vmem:[%s1615 + $0x20] sm:$0xff]
    %v3908 = vld [vmem:[%s1615 + $0x28] sm:$0xff]
    %v3909 = vld [vmem:[%s1615 + $0x30] sm:$0xff]
    %v3910 = vld [vmem:[%s1615 + $0x38] sm:$0xff]
    %v3911 = vld [vmem:[%s1615 + $0x40] sm:$0xff]
    %v3912 = vld [vmem:[%s1615 + $0x48] sm:$0xff]
    %v3913 = vld [vmem:[%s1615 + $0x50] sm:$0xff]
    %v3914 = vld [vmem:[%s1615 + $0x58] sm:$0xff]
    %v3915 = vld [vmem:[%s1615 + $0x60] sm:$0xff]
    %v3916 = vld [vmem:[%s1615 + $0x68] sm:$0xff]
    %v3917 = vld [vmem:[%s1615 + $0x70] sm:$0xff]
    %v3918 = vld [vmem:[%s1615 + $0x78] sm:$0xff]
    %vm3919 = vcmp.eq.f32.partialorder %v1776, 4.0
    %vm3920 = vcmp.eq.f32.partialorder %v1777, 4.0
    %vm3921 = vcmp.eq.f32.partialorder %v1778, 4.0
    %vm3922 = vcmp.eq.f32.partialorder %v1779, 4.0
    %vm3923 = vcmp.eq.f32.partialorder %v1780, 4.0
    %vm3924 = vcmp.eq.f32.partialorder %v1781, 4.0
    %vm3925 = vcmp.eq.f32.partialorder %v1782, 4.0
    %vm3926 = vcmp.eq.f32.partialorder %v1783, 4.0
    %vm3927 = vcmp.eq.f32.partialorder %v1784, 4.0
    %vm3928 = vcmp.eq.f32.partialorder %v1785, 4.0
    %vm3929 = vcmp.eq.f32.partialorder %v1786, 4.0
    %vm3930 = vcmp.eq.f32.partialorder %v1787, 4.0
    %vm3931 = vcmp.eq.f32.partialorder %v1788, 4.0
    %vm3932 = vcmp.eq.f32.partialorder %v1789, 4.0
    %vm3933 = vcmp.eq.f32.partialorder %v1790, 4.0
    %vm3934 = vcmp.eq.f32.partialorder %v1791, 4.0
    %v3935 = vsel %vm3919, 1, 0
    %v3936 = vsel %vm3920, 1, 0
    %v3937 = vsel %vm3921, 1, 0
    %v3938 = vsel %vm3922, 1, 0
    %v3939 = vsel %vm3923, 1, 0
    %v3940 = vsel %vm3924, 1, 0
    %v3941 = vsel %vm3925, 1, 0
    %v3942 = vsel %vm3926, 1, 0
    %v3943 = vsel %vm3927, 1, 0
    %v3944 = vsel %vm3928, 1, 0
    %v3945 = vsel %vm3929, 1, 0
    %v3946 = vsel %vm3930, 1, 0
    %v3947 = vsel %vm3931, 1, 0
    %v3948 = vsel %vm3932, 1, 0
    %v3949 = vsel %vm3933, 1, 0
    %v3950 = vsel %vm3934, 1, 0
    %v3951 = vcvt.s32.f32 %v3935
    %v3952 = vcvt.s32.f32 %v3936
    %v3953 = vcvt.s32.f32 %v3937
    %v3954 = vcvt.s32.f32 %v3938
    %v3955 = vcvt.s32.f32 %v3939
    %v3956 = vcvt.s32.f32 %v3940
    %v3957 = vcvt.s32.f32 %v3941
    %v3958 = vcvt.s32.f32 %v3942
    %v3959 = vcvt.s32.f32 %v3943
    %v3960 = vcvt.s32.f32 %v3944
    %v3961 = vcvt.s32.f32 %v3945
    %v3962 = vcvt.s32.f32 %v3946
    %v3963 = vcvt.s32.f32 %v3947
    %v3964 = vcvt.s32.f32 %v3948
    %v3965 = vcvt.s32.f32 %v3949
    %v3966 = vcvt.s32.f32 %v3950
    %v3967 = vmul.f32 %v3903, %v1744
    %v3968 = vmul.f32 %v3904, %v1745
    %v3969 = vmul.f32 %v3905, %v1746
    %v3970 = vmul.f32 %v3906, %v1747
    %v3971 = vmul.f32 %v3907, %v1748
    %v3972 = vmul.f32 %v3908, %v1749
    %v3973 = vmul.f32 %v3909, %v1750
    %v3974 = vmul.f32 %v3910, %v1751
    %v3975 = vmul.f32 %v3911, %v1752
    %v3976 = vmul.f32 %v3912, %v1753
    %v3977 = vmul.f32 %v3913, %v1754
    %v3978 = vmul.f32 %v3914, %v1755
    %v3979 = vmul.f32 %v3915, %v1756
    %v3980 = vmul.f32 %v3916, %v1757
    %v3981 = vmul.f32 %v3917, %v1758
    %v3982 = vmul.f32 %v3918, %v1759
    %v3983 = vmul.f32 %v3951, %v3967
    %v3984 = vmul.f32 %v3952, %v3968
    %v3985 = vmul.f32 %v3953, %v3969
    %v3986 = vmul.f32 %v3954, %v3970
    %v3987 = vmul.f32 %v3955, %v3971
    %v3988 = vmul.f32 %v3956, %v3972
    %v3989 = vmul.f32 %v3957, %v3973
    %v3990 = vmul.f32 %v3958, %v3974
    %v3991 = vmul.f32 %v3959, %v3975
    %v3992 = vmul.f32 %v3960, %v3976
    %v3993 = vmul.f32 %v3961, %v3977
    %v3994 = vmul.f32 %v3962, %v3978
    %v3995 = vmul.f32 %v3963, %v3979
    %v3996 = vmul.f32 %v3964, %v3980
    %v3997 = vmul.f32 %v3965, %v3981
    %v3998 = vmul.f32 %v3966, %v3982
    %3999 = vmatprep.subr.mxu0 0.0
    %4000 = vmatpush1.xpose.msra.mxu0 %v3983
    %4001 = vmatprep.subr.mxu0 0.0
    %4002 = vmatpush1.xpose.msra.mxu0 %v3984
    %4003 = vmatprep.subr.mxu0 0.0
    %4004 = vmatpush1.xpose.msra.mxu0 %v3985
    %4005 = vmatprep.subr.mxu0 0.0
    %4006 = vmatpush1.xpose.msra.mxu0 %v3986
    %4007 = vmatprep.subr.mxu0 0.0
    %4008 = vmatpush1.xpose.msra.mxu0 %v3987
    %4009 = vmatprep.subr.mxu0 0.0
    %4010 = vmatpush1.xpose.msra.mxu0 %v3988
    %4011 = vmatprep.subr.mxu0 0.0
    %4012 = vmatpush1.xpose.msra.mxu0 %v3989
    %4013 = vmatprep.subr.mxu0 0.0
    %4014 = vmatpush1.xpose.msra.mxu0 %v3990
    %4015 = vmatprep.subr.mxu0 0.0
    %4016 = vmatpush1.xpose.msra.mxu0 %v3991
    %4017 = vmatprep.subr.mxu0 0.0
    %4018 = vmatpush1.xpose.msra.mxu0 %v3992
    %4019 = vmatprep.subr.mxu0 0.0
    %4020 = vmatpush1.xpose.msra.mxu0 %v3993
    %4021 = vmatprep.subr.mxu0 0.0
    %4022 = vmatpush1.xpose.msra.mxu0 %v3994
    %4023 = vmatprep.subr.mxu0 0.0
    %4024 = vmatpush1.xpose.msra.mxu0 %v3995
    %4025 = vmatprep.subr.mxu0 0.0
    %4026 = vmatpush1.xpose.msra.mxu0 %v3996
    %4027 = vmatprep.subr.mxu0 0.0
    %4028 = vmatpush1.xpose.msra.mxu0 %v3997
    %4029 = vmatprep.subr.mxu0 0.0
    %4030 = vmatpush1.xpose.msra.mxu0 %v3998
    %4031 = vmatprep.subr.mxu0 0.0
    %4032 = vmatpush1.xpose.msra.mxu0 0.0
    %4033 = vmatprep.subr.mxu0 0.0
    %4034 = vmatpush1.xpose.msra.mxu0 0.0
    %4035 = vmatprep.subr.mxu0 0.0
    %4036 = vmatpush1.xpose.msra.mxu0 0.0
    %4037 = vmatprep.subr.mxu0 0.0
    %4038 = vmatpush1.xpose.msra.mxu0 0.0
    %4039 = vmatprep.subr.mxu0 0.0
    %4040 = vmatpush1.xpose.msra.mxu0 0.0
    %4041 = vmatprep.subr.mxu0 0.0
    %4042 = vmatpush1.xpose.msra.mxu0 0.0
    %4043 = vmatprep.subr.mxu0 0.0
    %4044 = vmatpush1.xpose.msra.mxu0 0.0
    %4045 = vmatprep.subr.mxu0 0.0
    %4046 = vmatpush1.xpose.msra.mxu0 0.0
    %4047 = vmatprep.subr.mxu0 0.0
    %4048 = vmatpush1.xpose.msra.mxu0 0.0
    %4049 = vmatprep.subr.mxu0 0.0
    %4050 = vmatpush1.xpose.msra.mxu0 0.0
    %4051 = vmatprep.subr.mxu0 0.0
    %4052 = vmatpush1.xpose.msra.mxu0 0.0
    %4053 = vmatprep.subr.mxu0 0.0
    %4054 = vmatpush1.xpose.msra.mxu0 0.0
    %4055 = vmatprep.subr.mxu0 0.0
    %4056 = vmatpush1.xpose.msra.mxu0 0.0
    %4057 = vmatprep.subr.mxu0 0.0
    %4058 = vmatpush1.xpose.msra.mxu0 0.0
    %4059 = vmatprep.subr.mxu0 0.0
    %4060 = vmatpush1.xpose.msra.mxu0 0.0
    %4061 = vmatprep.subr.mxu0 0.0
    %4062 = vmatpush1.xpose.msra.mxu0 0.0
    %4063 = vmatprep.mubr.f32.mxu0 0.0
    %4064 = vmatmul.mubr.f32.gmra.mrb[0].mxu0 1.0
    %v4065 = vpop.f32.mrb[0].mxu0
    %v4066 = vadd.f32 0.0, %v4065
    %v4067 = vpop.f32.mrb[0].mxu0
    %4068 = vdwg.mxu0
    %vm4069 = vcmp.eq.f32.partialorder %v4066, 0.0
    %v4070 = vsel %vm4069, 1.0, %v4066
    %v4071 = vrcp.pop %v4070
    %v4072 = vlaneseq
    %v4073 = vshrl.u32 %v4072, 7
    %v4074 = vsub.s32 0, %v4073
    %v4075 = vrot.slane %v4071, %v4074
    %v4076 = vmul.f32 %v3983, %v4075
    %v4077 = vmul.f32 %v3984, %v4075
    %v4078 = vmul.f32 %v3985, %v4075
    %v4079 = vmul.f32 %v3986, %v4075
    %v4080 = vmul.f32 %v3987, %v4075
    %v4081 = vmul.f32 %v3988, %v4075
    %v4082 = vmul.f32 %v3989, %v4075
    %v4083 = vmul.f32 %v3990, %v4075
    %v4084 = vmul.f32 %v3991, %v4075
    %v4085 = vmul.f32 %v3992, %v4075
    %v4086 = vmul.f32 %v3993, %v4075
    %v4087 = vmul.f32 %v3994, %v4075
    %v4088 = vmul.f32 %v3995, %v4075
    %v4089 = vmul.f32 %v3996, %v4075
    %v4090 = vmul.f32 %v3997, %v4075
    %v4091 = vmul.f32 %v3998, %v4075
    %4108 = vmatprep.subr.mxu0 0.0
    %4109 = vmatpush1.msra.mxu0 %v1343
    %4110 = vmatprep.subr.mxu0 0.0
    %4111 = vmatpush1.msra.mxu0 %v1345
    %4112 = vmatprep.subr.mxu0 0.0
    %4113 = vmatpush1.msra.mxu0 %v1347
    %4114 = vmatprep.subr.mxu0 0.0
    %4115 = vmatpush1.msra.mxu0 %v1349
    %4116 = vmatprep.subr.mxu0 0.0
    %4117 = vmatpush1.msra.mxu0 %v1351
    %4118 = vmatprep.subr.mxu0 0.0
    %4119 = vmatpush1.msra.mxu0 %v1353
    %4120 = vmatprep.subr.mxu0 0.0
    %4121 = vmatpush1.msra.mxu0 %v1355
    %4122 = vmatprep.subr.mxu0 0.0
    %4123 = vmatpush1.msra.mxu0 %v1357
    %4124 = vmatprep.subr.mxu0 0.0
    %4125 = vmatpush1.msra.mxu0 %v1359
    %4126 = vmatprep.subr.mxu0 0.0
    %4127 = vmatpush1.msra.mxu0 %v1361
    %4128 = vmatprep.subr.mxu0 0.0
    %4129 = vmatpush1.msra.mxu0 %v1363
    %4130 = vmatprep.subr.mxu0 0.0
    %4131 = vmatpush1.msra.mxu0 %v1365
    %4132 = vmatprep.subr.mxu0 0.0
    %4133 = vmatpush1.msra.mxu0 %v1367
    %4134 = vmatprep.subr.mxu0 0.0
    %4135 = vmatpush1.msra.mxu0 %v1369
    %4136 = vmatprep.subr.mxu0 0.0
    %4137 = vmatpush1.msra.mxu0 %v1371
    %4138 = vmatprep.subr.mxu0 0.0
    %4139 = vmatpush1.msra.mxu0 %v1373
    %4140 = vmatprep.subr.mxu0 0.0
    %4141 = vmatpush1.msra.mxu0 0.0
    %4142 = vmatprep.subr.mxu0 0.0
    %4143 = vmatpush1.msra.mxu0 0.0
    %4144 = vmatprep.subr.mxu0 0.0
    %4145 = vmatpush1.msra.mxu0 0.0
    %4146 = vmatprep.subr.mxu0 0.0
    %4147 = vmatpush1.msra.mxu0 0.0
    %4148 = vmatprep.subr.mxu0 0.0
    %4149 = vmatpush1.msra.mxu0 0.0
    %4150 = vmatprep.subr.mxu0 0.0
    %4151 = vmatpush1.msra.mxu0 0.0
    %4152 = vmatprep.subr.mxu0 0.0
    %4153 = vmatpush1.msra.mxu0 0.0
    %4154 = vmatprep.subr.mxu0 0.0
    %4155 = vmatpush1.msra.mxu0 0.0
    %4156 = vmatprep.subr.mxu0 0.0
    %4157 = vmatpush1.msra.mxu0 0.0
    %4158 = vmatprep.subr.mxu0 0.0
    %4159 = vmatpush1.msra.mxu0 0.0
    %4160 = vmatprep.subr.mxu0 0.0
    %4161 = vmatpush1.msra.mxu0 0.0
    %4162 = vmatprep.subr.mxu0 0.0
    %4163 = vmatpush1.msra.mxu0 0.0
    %4164 = vmatprep.subr.mxu0 0.0
    %4165 = vmatpush1.msra.mxu0 0.0
    %4166 = vmatprep.subr.mxu0 0.0
    %4167 = vmatpush1.msra.mxu0 0.0
    %4168 = vmatprep.subr.mxu0 0.0
    %4169 = vmatpush1.msra.mxu0 0.0
    %4170 = vmatprep.subr.mxu0 0.0
    %4171 = vmatpush1.msra.mxu0 0.0
    %4172 = vmatprep.mubr.f32.mxu0 0.0
    %4173 = vmatmul.mubr.f32.gmra.mrb[0].mxu0 %v4076
    %v4174 = vpop.f32.mrb[0].mxu0
    %v4175 = vadd.f32 0.0, %v4174
    %v4176 = vpop.f32.mrb[0].mxu0
    %4177 = vmatprep.mubr.f32.mxu0 0.0
    %4178 = vmatmul.mubr.f32.gmra.mrb[0].mxu0 %v4077
    %v4179 = vpop.f32.mrb[0].mxu0
    %v4180 = vadd.f32 0.0, %v4179
    %v4181 = vpop.f32.mrb[0].mxu0
    %4182 = vmatprep.mubr.f32.mxu0 0.0
    %4183 = vmatmul.mubr.f32.gmra.mrb[0].mxu0 %v4078
    %v4184 = vpop.f32.mrb[0].mxu0
    %v4185 = vadd.f32 0.0, %v4184
    %v4186 = vpop.f32.mrb[0].mxu0
    %4187 = vmatprep.mubr.f32.mxu0 0.0
    %4188 = vmatmul.mubr.f32.gmra.mrb[0].mxu0 %v4079
    %v4189 = vpop.f32.mrb[0].mxu0
    %v4190 = vadd.f32 0.0, %v4189
    %v4191 = vpop.f32.mrb[0].mxu0
    %4192 = vmatprep.mubr.f32.mxu0 0.0
    %4193 = vmatmul.mubr.f32.gmra.mrb[0].mxu0 %v4080
    %v4194 = vpop.f32.mrb[0].mxu0
    %v4195 = vadd.f32 0.0, %v4194
    %v4196 = vpop.f32.mrb[0].mxu0
    %4197 = vmatprep.mubr.f32.mxu0 0.0
    %4198 = vmatmul.mubr.f32.gmra.mrb[0].mxu0 %v4081
    %v4199 = vpop.f32.mrb[0].mxu0
    %v4200 = vadd.f32 0.0, %v4199
    %v4201 = vpop.f32.mrb[0].mxu0
    %4202 = vmatprep.mubr.f32.mxu0 0.0
    %4203 = vmatmul.mubr.f32.gmra.mrb[0].mxu0 %v4082
    %v4204 = vpop.f32.mrb[0].mxu0
    %v4205 = vadd.f32 0.0, %v4204
    %v4206 = vpop.f32.mrb[0].mxu0
    %4207 = vmatprep.mubr.f32.mxu0 0.0
    %4208 = vmatmul.mubr.f32.gmra.mrb[0].mxu0 %v4083
    %v4209 = vpop.f32.mrb[0].mxu0
    %v4210 = vadd.f32 0.0, %v4209
    %v4211 = vpop.f32.mrb[0].mxu0
    %4212 = vmatprep.mubr.f32.mxu0 0.0
    %4213 = vmatmul.mubr.f32.gmra.mrb[0].mxu0 %v4084
    %v4214 = vpop.f32.mrb[0].mxu0
    %v4215 = vadd.f32 0.0, %v4214
    %v4216 = vpop.f32.mrb[0].mxu0
    %4217 = vmatprep.mubr.f32.mxu0 0.0
    %4218 = vmatmul.mubr.f32.gmra.mrb[0].mxu0 %v4085
    %v4219 = vpop.f32.mrb[0].mxu0
    %v4220 = vadd.f32 0.0, %v4219
    %v4221 = vpop.f32.mrb[0].mxu0
    %4222 = vmatprep.mubr.f32.mxu0 0.0
    %4223 = vmatmul.mubr.f32.gmra.mrb[0].mxu0 %v4086
    %v4224 = vpop.f32.mrb[0].mxu0
    %v4225 = vadd.f32 0.0, %v4224
    %v4226 = vpop.f32.mrb[0].mxu0
    %4227 = vmatprep.mubr.f32.mxu0 0.0
    %4228 = vmatmul.mubr.f32.gmra.mrb[0].mxu0 %v4087
    %v4229 = vpop.f32.mrb[0].mxu0
    %v4230 = vadd.f32 0.0, %v4229
    %v4231 = vpop.f32.mrb[0].mxu0
    %4232 = vmatprep.mubr.f32.mxu0 0.0
    %4233 = vmatmul.mubr.f32.gmra.mrb[0].mxu0 %v4088
    %v4234 = vpop.f32.mrb[0].mxu0
    %v4235 = vadd.f32 0.0, %v4234
    %v4236 = vpop.f32.mrb[0].mxu0
    %4237 = vmatprep.mubr.f32.mxu0 0.0
    %4238 = vmatmul.mubr.f32.gmra.mrb[0].mxu0 %v4089
    %v4239 = vpop.f32.mrb[0].mxu0
    %v4240 = vadd.f32 0.0, %v4239
    %v4241 = vpop.f32.mrb[0].mxu0
    %4242 = vmatprep.mubr.f32.mxu0 0.0
    %4243 = vmatmul.mubr.f32.gmra.mrb[0].mxu0 %v4090
    %v4244 = vpop.f32.mrb[0].mxu0
    %v4245 = vadd.f32 0.0, %v4244
    %v4246 = vpop.f32.mrb[0].mxu0
    %4247 = vmatprep.mubr.f32.mxu0 0.0
    %4248 = vmatmul.mubr.f32.gmra.mrb[0].mxu0 %v4091
    %v4249 = vpop.f32.mrb[0].mxu0
    %v4250 = vadd.f32 0.0, %v4249
    %v4251 = vpop.f32.mrb[0].mxu0
    %4252 = vdwg.mxu0
    %v4253 = vmul.f32 %v4175, 0.7
    %v4254 = vmul.f32 %v4180, 0.7
    %v4255 = vmul.f32 %v4185, 0.7
    %v4256 = vmul.f32 %v4190, 0.7
    %v4257 = vmul.f32 %v4195, 0.7
    %v4258 = vmul.f32 %v4200, 0.7
    %v4259 = vmul.f32 %v4205, 0.7
    %v4260 = vmul.f32 %v4210, 0.7
    %v4261 = vmul.f32 %v4215, 0.7
    %v4262 = vmul.f32 %v4220, 0.7
    %v4263 = vmul.f32 %v4225, 0.7
    %v4264 = vmul.f32 %v4230, 0.7
    %v4265 = vmul.f32 %v4235, 0.7
    %v4266 = vmul.f32 %v4240, 0.7
    %v4267 = vmul.f32 %v4245, 0.7
    %v4268 = vmul.f32 %v4250, 0.7
    %4285 = vrot.lane.b32.xlu0 %v4253, 96
    %v4286 = vpop.permute.xlu0 %4285
    %4287 = vrot.lane.b32.xlu0 %v4254, 96
    %v4288 = vpop.permute.xlu0 %4287
    %4289 = vrot.lane.b32.xlu0 %v4255, 96
    %v4290 = vpop.permute.xlu0 %4289
    %4291 = vrot.lane.b32.xlu0 %v4256, 96
    %v4292 = vpop.permute.xlu0 %4291
    %4293 = vrot.lane.b32.xlu0 %v4257, 96
    %v4294 = vpop.permute.xlu0 %4293
    %4295 = vrot.lane.b32.xlu0 %v4258, 96
    %v4296 = vpop.permute.xlu0 %4295
    %4297 = vrot.lane.b32.xlu0 %v4259, 96
    %v4298 = vpop.permute.xlu0 %4297
    %4299 = vrot.lane.b32.xlu0 %v4260, 96
    %v4300 = vpop.permute.xlu0 %4299
    %4301 = vrot.lane.b32.xlu0 %v4261, 96
    %v4302 = vpop.permute.xlu0 %4301
    %4303 = vrot.lane.b32.xlu0 %v4262, 96
    %v4304 = vpop.permute.xlu0 %4303
    %4305 = vrot.lane.b32.xlu0 %v4263, 96
    %v4306 = vpop.permute.xlu0 %4305
    %4307 = vrot.lane.b32.xlu0 %v4264, 96
    %v4308 = vpop.permute.xlu0 %4307
    %4309 = vrot.lane.b32.xlu0 %v4265, 96
    %v4310 = vpop.permute.xlu0 %4309
    %4311 = vrot.lane.b32.xlu0 %v4266, 96
    %v4312 = vpop.permute.xlu0 %4311
    %4313 = vrot.lane.b32.xlu0 %v4267, 96
    %v4314 = vpop.permute.xlu0 %4313
    %4315 = vrot.lane.b32.xlu0 %v4268, 96
    %v4316 = vpop.permute.xlu0 %4315
    %v4333 = vadd.f32 %v1965, %v4286
    %v4334 = vadd.f32 %v1966, %v4288
    %v4335 = vadd.f32 %v1967, %v4290
    %v4336 = vadd.f32 %v1968, %v4292
    %v4337 = vadd.f32 %v1969, %v4294
    %v4338 = vadd.f32 %v1970, %v4296
    %v4339 = vadd.f32 %v1971, %v4298
    %v4340 = vadd.f32 %v1972, %v4300
    %v4341 = vadd.f32 %v1973, %v4302
    %v4342 = vadd.f32 %v1974, %v4304
    %v4343 = vadd.f32 %v1975, %v4306
    %v4344 = vadd.f32 %v1976, %v4308
    %v4345 = vadd.f32 %v1977, %v4310
    %v4346 = vadd.f32 %v1978, %v4312
    %v4347 = vadd.f32 %v1979, %v4314
    %v4348 = vadd.f32 %v1980, %v4316
    %vm4349 = vcmask 1048320
    %4350 = vst.msk [vmem:[#allocation3] sm:$0xff] %vm4349, %v4333
    %4351 = vst.msk [vmem:[#allocation3 + $0x8] sm:$0xff] %vm4349, %v4334
    %4352 = vst.msk [vmem:[#allocation3 + $0x10] sm:$0xff] %vm4349, %v4335
    %4353 = vst.msk [vmem:[#allocation3 + $0x18] sm:$0xff] %vm4349, %v4336
    %4354 = vst.msk [vmem:[#allocation3 + $0x20] sm:$0xff] %vm4349, %v4337
    %4355 = vst.msk [vmem:[#allocation3 + $0x28] sm:$0xff] %vm4349, %v4338
    %4356 = vst.msk [vmem:[#allocation3 + $0x30] sm:$0xff] %vm4349, %v4339
    %4357 = vst.msk [vmem:[#allocation3 + $0x38] sm:$0xff] %vm4349, %v4340
    %4358 = vst.msk [vmem:[#allocation3 + $0x40] sm:$0xff] %vm4349, %v4341
    %4359 = vst.msk [vmem:[#allocation3 + $0x48] sm:$0xff] %vm4349, %v4342
    %4360 = vst.msk [vmem:[#allocation3 + $0x50] sm:$0xff] %vm4349, %v4343
    %4361 = vst.msk [vmem:[#allocation3 + $0x58] sm:$0xff] %vm4349, %v4344
    %4362 = vst.msk [vmem:[#allocation3 + $0x60] sm:$0xff] %vm4349, %v4345
    %4363 = vst.msk [vmem:[#allocation3 + $0x68] sm:$0xff] %vm4349, %v4346
    %4364 = vst.msk [vmem:[#allocation3 + $0x70] sm:$0xff] %vm4349, %v4347
    %4365 = vst.msk [vmem:[#allocation3 + $0x78] sm:$0xff] %vm4349, %v4348
    %4382 = vrot.lane.b32.xlu0 %v4333, 32
    %v4383 = vpop.permute.xlu0 %4382
    %4384 = vrot.lane.b32.xlu0 %v4334, 32
    %v4385 = vpop.permute.xlu0 %4384
    %4386 = vrot.lane.b32.xlu0 %v4335, 32
    %v4387 = vpop.permute.xlu0 %4386
    %4388 = vrot.lane.b32.xlu0 %v4336, 32
    %v4389 = vpop.permute.xlu0 %4388
    %4390 = vrot.lane.b32.xlu0 %v4337, 32
    %v4391 = vpop.permute.xlu0 %4390
    %4392 = vrot.lane.b32.xlu0 %v4338, 32
    %v4393 = vpop.permute.xlu0 %4392
    %4394 = vrot.lane.b32.xlu0 %v4339, 32
    %v4395 = vpop.permute.xlu0 %4394
    %4396 = vrot.lane.b32.xlu0 %v4340, 32
    %v4397 = vpop.permute.xlu0 %4396
    %4398 = vrot.lane.b32.xlu0 %v4341, 32
    %v4399 = vpop.permute.xlu0 %4398
    %4400 = vrot.lane.b32.xlu0 %v4342, 32
    %v4401 = vpop.permute.xlu0 %4400
    %4402 = vrot.lane.b32.xlu0 %v4343, 32
    %v4403 = vpop.permute.xlu0 %4402
    %4404 = vrot.lane.b32.xlu0 %v4344, 32
    %v4405 = vpop.permute.xlu0 %4404
    %4406 = vrot.lane.b32.xlu0 %v4345, 32
    %v4407 = vpop.permute.xlu0 %4406
    %4408 = vrot.lane.b32.xlu0 %v4346, 32
    %v4409 = vpop.permute.xlu0 %4408
    %4410 = vrot.lane.b32.xlu0 %v4347, 32
    %v4411 = vpop.permute.xlu0 %4410
    %4412 = vrot.lane.b32.xlu0 %v4348, 32
    %v4413 = vpop.permute.xlu0 %4412
    %v4414 = vsel %vm54, %v4383, 0
    %v4416 = vsel %vm54, %v4385, 0
    %v4418 = vsel %vm54, %v4387, 0
    %v4420 = vsel %vm54, %v4389, 0
    %v4422 = vsel %vm54, %v4391, 0
    %v4424 = vsel %vm54, %v4393, 0
    %v4426 = vsel %vm54, %v4395, 0
    %v4428 = vsel %vm54, %v4397, 0
    %v4430 = vsel %vm54, %v4399, 0
    %v4432 = vsel %vm54, %v4401, 0
    %v4434 = vsel %vm54, %v4403, 0
    %v4436 = vsel %vm54, %v4405, 0
    %v4438 = vsel %vm54, %v4407, 0
    %v4440 = vsel %vm54, %v4409, 0
    %v4442 = vsel %vm54, %v4411, 0
    %v4444 = vsel %vm54, %v4413, 0
    %4446 = vmatprep.subr.mxu0 0.0
    %4447 = vmatpush1.xpose.msra.mxu0 %v4414
    %4448 = vmatprep.subr.mxu0 0.0
    %4449 = vmatpush1.xpose.msra.mxu0 %v4416
    %4450 = vmatprep.subr.mxu0 0.0
    %4451 = vmatpush1.xpose.msra.mxu0 %v4418
    %4452 = vmatprep.subr.mxu0 0.0
    %4453 = vmatpush1.xpose.msra.mxu0 %v4420
    %4454 = vmatprep.subr.mxu0 0.0
    %4455 = vmatpush1.xpose.msra.mxu0 %v4422
    %4456 = vmatprep.subr.mxu0 0.0
    %4457 = vmatpush1.xpose.msra.mxu0 %v4424
    %4458 = vmatprep.subr.mxu0 0.0
    %4459 = vmatpush1.xpose.msra.mxu0 %v4426
    %4460 = vmatprep.subr.mxu0 0.0
    %4461 = vmatpush1.xpose.msra.mxu0 %v4428
    %4462 = vmatprep.subr.mxu0 0.0
    %4463 = vmatpush1.xpose.msra.mxu0 %v4430
    %4464 = vmatprep.subr.mxu0 0.0
    %4465 = vmatpush1.xpose.msra.mxu0 %v4432
    %4466 = vmatprep.subr.mxu0 0.0
    %4467 = vmatpush1.xpose.msra.mxu0 %v4434
    %4468 = vmatprep.subr.mxu0 0.0
    %4469 = vmatpush1.xpose.msra.mxu0 %v4436
    %4470 = vmatprep.subr.mxu0 0.0
    %4471 = vmatpush1.xpose.msra.mxu0 %v4438
    %4472 = vmatprep.subr.mxu0 0.0
    %4473 = vmatpush1.xpose.msra.mxu0 %v4440
    %4474 = vmatprep.subr.mxu0 0.0
    %4475 = vmatpush1.xpose.msra.mxu0 %v4442
    %4476 = vmatprep.subr.mxu0 0.0
    %4477 = vmatpush1.xpose.msra.mxu0 %v4444
    %4478 = vmatprep.subr.mxu0 0.0
    %4479 = vmatpush1.xpose.msra.mxu0 0.0
    %4480 = vmatprep.subr.mxu0 0.0
    %4481 = vmatpush1.xpose.msra.mxu0 0.0
    %4482 = vmatprep.subr.mxu0 0.0
    %4483 = vmatpush1.xpose.msra.mxu0 0.0
    %4484 = vmatprep.subr.mxu0 0.0
    %4485 = vmatpush1.xpose.msra.mxu0 0.0
    %4486 = vmatprep.subr.mxu0 0.0
    %4487 = vmatpush1.xpose.msra.mxu0 0.0
    %4488 = vmatprep.subr.mxu0 0.0
    %4489 = vmatpush1.xpose.msra.mxu0 0.0
    %4490 = vmatprep.subr.mxu0 0.0
    %4491 = vmatpush1.xpose.msra.mxu0 0.0
    %4492 = vmatprep.subr.mxu0 0.0
    %4493 = vmatpush1.xpose.msra.mxu0 0.0
    %4494 = vmatprep.subr.mxu0 0.0
    %4495 = vmatpush1.xpose.msra.mxu0 0.0
    %4496 = vmatprep.subr.mxu0 0.0
    %4497 = vmatpush1.xpose.msra.mxu0 0.0
    %4498 = vmatprep.subr.mxu0 0.0
    %4499 = vmatpush1.xpose.msra.mxu0 0.0
    %4500 = vmatprep.subr.mxu0 0.0
    %4501 = vmatpush1.xpose.msra.mxu0 0.0
    %4502 = vmatprep.subr.mxu0 0.0
    %4503 = vmatpush1.xpose.msra.mxu0 0.0
    %4504 = vmatprep.subr.mxu0 0.0
    %4505 = vmatpush1.xpose.msra.mxu0 0.0
    %4506 = vmatprep.subr.mxu0 0.0
    %4507 = vmatpush1.xpose.msra.mxu0 0.0
    %4508 = vmatprep.subr.mxu0 0.0
    %4509 = vmatpush1.xpose.msra.mxu0 0.0
    %4510 = vmatprep.mubr.f32.mxu0 0.0
    %4511 = vmatmul.mubr.f32.gmra.mrb[0].mxu0 %v4414
    %v4512 = vpop.f32.mrb[0].mxu0
    %v4513 = vadd.f32 0.0, %v4512
    %v4514 = vpop.f32.mrb[0].mxu0
    %4515 = vmatprep.mubr.f32.mxu0 0.0
    %4516 = vmatmul.mubr.f32.gmra.mrb[0].mxu0 %v4416
    %v4517 = vpop.f32.mrb[0].mxu0
    %v4518 = vadd.f32 0.0, %v4517
    %v4519 = vpop.f32.mrb[0].mxu0
    %4520 = vmatprep.mubr.f32.mxu0 0.0
    %4521 = vmatmul.mubr.f32.gmra.mrb[0].mxu0 %v4418
    %v4522 = vpop.f32.mrb[0].mxu0
    %v4523 = vadd.f32 0.0, %v4522
    %v4524 = vpop.f32.mrb[0].mxu0
    %4525 = vmatprep.mubr.f32.mxu0 0.0
    %4526 = vmatmul.mubr.f32.gmra.mrb[0].mxu0 %v4420
    %v4527 = vpop.f32.mrb[0].mxu0
    %v4528 = vadd.f32 0.0, %v4527
    %v4529 = vpop.f32.mrb[0].mxu0
    %4530 = vmatprep.mubr.f32.mxu0 0.0
    %4531 = vmatmul.mubr.f32.gmra.mrb[0].mxu0 %v4422
    %v4532 = vpop.f32.mrb[0].mxu0
    %v4533 = vadd.f32 0.0, %v4532
    %v4534 = vpop.f32.mrb[0].mxu0
    %4535 = vmatprep.mubr.f32.mxu0 0.0
    %4536 = vmatmul.mubr.f32.gmra.mrb[0].mxu0 %v4424
    %v4537 = vpop.f32.mrb[0].mxu0
    %v4538 = vadd.f32 0.0, %v4537
    %v4539 = vpop.f32.mrb[0].mxu0
    %4540 = vmatprep.mubr.f32.mxu0 0.0
    %4541 = vmatmul.mubr.f32.gmra.mrb[0].mxu0 %v4426
    %v4542 = vpop.f32.mrb[0].mxu0
    %v4543 = vadd.f32 0.0, %v4542
    %v4544 = vpop.f32.mrb[0].mxu0
    %4545 = vmatprep.mubr.f32.mxu0 0.0
    %4546 = vmatmul.mubr.f32.gmra.mrb[0].mxu0 %v4428
    %v4547 = vpop.f32.mrb[0].mxu0
    %v4548 = vadd.f32 0.0, %v4547
    %v4549 = vpop.f32.mrb[0].mxu0
    %4550 = vmatprep.mubr.f32.mxu0 0.0
    %4551 = vmatmul.mubr.f32.gmra.mrb[0].mxu0 %v4430
    %v4552 = vpop.f32.mrb[0].mxu0
    %v4553 = vadd.f32 0.0, %v4552
    %v4554 = vpop.f32.mrb[0].mxu0
    %4555 = vmatprep.mubr.f32.mxu0 0.0
    %4556 = vmatmul.mubr.f32.gmra.mrb[0].mxu0 %v4432
    %v4557 = vpop.f32.mrb[0].mxu0
    %v4558 = vadd.f32 0.0, %v4557
    %v4559 = vpop.f32.mrb[0].mxu0
    %4560 = vmatprep.mubr.f32.mxu0 0.0
    %4561 = vmatmul.mubr.f32.gmra.mrb[0].mxu0 %v4434
    %v4562 = vpop.f32.mrb[0].mxu0
    %v4563 = vadd.f32 0.0, %v4562
    %v4564 = vpop.f32.mrb[0].mxu0
    %4565 = vmatprep.mubr.f32.mxu0 0.0
    %4566 = vmatmul.mubr.f32.gmra.mrb[0].mxu0 %v4436
    %v4567 = vpop.f32.mrb[0].mxu0
    %v4568 = vadd.f32 0.0, %v4567
    %v4569 = vpop.f32.mrb[0].mxu0
    %4570 = vmatprep.mubr.f32.mxu0 0.0
    %4571 = vmatmul.mubr.f32.gmra.mrb[0].mxu0 %v4438
    %v4572 = vpop.f32.mrb[0].mxu0
    %v4573 = vadd.f32 0.0, %v4572
    %v4574 = vpop.f32.mrb[0].mxu0
    %4575 = vmatprep.mubr.f32.mxu0 0.0
    %4576 = vmatmul.mubr.f32.gmra.mrb[0].mxu0 %v4440
    %v4577 = vpop.f32.mrb[0].mxu0
    %v4578 = vadd.f32 0.0, %v4577
    %v4579 = vpop.f32.mrb[0].mxu0
    %4580 = vmatprep.mubr.f32.mxu0 0.0
    %4581 = vmatmul.mubr.f32.gmra.mrb[0].mxu0 %v4442
    %v4582 = vpop.f32.mrb[0].mxu0
    %v4583 = vadd.f32 0.0, %v4582
    %v4584 = vpop.f32.mrb[0].mxu0
    %4585 = vmatprep.mubr.f32.mxu0 0.0
    %4586 = vmatmul.mubr.f32.gmra.mrb[0].mxu0 %v4444
    %v4587 = vpop.f32.mrb[0].mxu0
    %v4588 = vadd.f32 0.0, %v4587
    %v4589 = vpop.f32.mrb[0].mxu0
    %4590 = vdwg.mxu0
    %v4591 = vmul.f32 %v4513, %v3903
    %v4592 = vmul.f32 %v4518, %v3904
    %v4593 = vmul.f32 %v4523, %v3905
    %v4594 = vmul.f32 %v4528, %v3906
    %v4595 = vmul.f32 %v4533, %v3907
    %v4596 = vmul.f32 %v4538, %v3908
    %v4597 = vmul.f32 %v4543, %v3909
    %v4598 = vmul.f32 %v4548, %v3910
    %v4599 = vmul.f32 %v4553, %v3911
    %v4600 = vmul.f32 %v4558, %v3912
    %v4601 = vmul.f32 %v4563, %v3913
    %v4602 = vmul.f32 %v4568, %v3914
    %v4603 = vmul.f32 %v4573, %v3915
    %v4604 = vmul.f32 %v4578, %v3916
    %v4605 = vmul.f32 %v4583, %v3917
    %v4606 = vmul.f32 %v4588, %v3918
    %v4607 = vld [vmem:[#allocation5] sm:$0xff]
    %v4608 = vld [vmem:[#allocation5 + $0x8] sm:$0xff]
    %v4609 = vld [vmem:[#allocation5 + $0x10] sm:$0xff]
    %v4610 = vld [vmem:[#allocation5 + $0x18] sm:$0xff]
    %v4611 = vld [vmem:[#allocation5 + $0x20] sm:$0xff]
    %v4612 = vld [vmem:[#allocation5 + $0x28] sm:$0xff]
    %v4613 = vld [vmem:[#allocation5 + $0x30] sm:$0xff]
    %v4614 = vld [vmem:[#allocation5 + $0x38] sm:$0xff]
    %v4615 = vld [vmem:[#allocation5 + $0x40] sm:$0xff]
    %v4616 = vld [vmem:[#allocation5 + $0x48] sm:$0xff]
    %v4617 = vld [vmem:[#allocation5 + $0x50] sm:$0xff]
    %v4618 = vld [vmem:[#allocation5 + $0x58] sm:$0xff]
    %v4619 = vld [vmem:[#allocation5 + $0x60] sm:$0xff]
    %v4620 = vld [vmem:[#allocation5 + $0x68] sm:$0xff]
    %v4621 = vld [vmem:[#allocation5 + $0x70] sm:$0xff]
    %v4622 = vld [vmem:[#allocation5 + $0x78] sm:$0xff]
    %v4623 = vadd.f32 %v4607, %v4591
    %v4624 = vadd.f32 %v4608, %v4592
    %v4625 = vadd.f32 %v4609, %v4593
    %v4626 = vadd.f32 %v4610, %v4594
    %v4627 = vadd.f32 %v4611, %v4595
    %v4628 = vadd.f32 %v4612, %v4596
    %v4629 = vadd.f32 %v4613, %v4597
    %v4630 = vadd.f32 %v4614, %v4598
    %v4631 = vadd.f32 %v4615, %v4599
    %v4632 = vadd.f32 %v4616, %v4600
    %v4633 = vadd.f32 %v4617, %v4601
    %v4634 = vadd.f32 %v4618, %v4602
    %v4635 = vadd.f32 %v4619, %v4603
    %v4636 = vadd.f32 %v4620, %v4604
    %v4637 = vadd.f32 %v4621, %v4605
    %v4638 = vadd.f32 %v4622, %v4606
    %4639 = vst [vmem:[#allocation5] sm:$0xff] %v4623
    %4640 = vst [vmem:[#allocation5 + $0x8] sm:$0xff] %v4624
    %4641 = vst [vmem:[#allocation5 + $0x10] sm:$0xff] %v4625
    %4642 = vst [vmem:[#allocation5 + $0x18] sm:$0xff] %v4626
    %4643 = vst [vmem:[#allocation5 + $0x20] sm:$0xff] %v4627
    %4644 = vst [vmem:[#allocation5 + $0x28] sm:$0xff] %v4628
    %4645 = vst [vmem:[#allocation5 + $0x30] sm:$0xff] %v4629
    %4646 = vst [vmem:[#allocation5 + $0x38] sm:$0xff] %v4630
    %4647 = vst [vmem:[#allocation5 + $0x40] sm:$0xff] %v4631
    %4648 = vst [vmem:[#allocation5 + $0x48] sm:$0xff] %v4632
    %4649 = vst [vmem:[#allocation5 + $0x50] sm:$0xff] %v4633
    %4650 = vst [vmem:[#allocation5 + $0x58] sm:$0xff] %v4634
    %4651 = vst [vmem:[#allocation5 + $0x60] sm:$0xff] %v4635
    %4652 = vst [vmem:[#allocation5 + $0x68] sm:$0xff] %v4636
    %4653 = vst [vmem:[#allocation5 + $0x70] sm:$0xff] %v4637
    %4654 = vst [vmem:[#allocation5 + $0x78] sm:$0xff] %v4638
    %v4655 = vld [vmem:[#allocation5] sm:$0xff]
    %v4656 = vld [vmem:[#allocation5 + $0x8] sm:$0xff]
    %v4657 = vld [vmem:[#allocation5 + $0x10] sm:$0xff]
    %v4658 = vld [vmem:[#allocation5 + $0x18] sm:$0xff]
    %v4659 = vld [vmem:[#allocation5 + $0x20] sm:$0xff]
    %v4660 = vld [vmem:[#allocation5 + $0x28] sm:$0xff]
    %v4661 = vld [vmem:[#allocation5 + $0x30] sm:$0xff]
    %v4662 = vld [vmem:[#allocation5 + $0x38] sm:$0xff]
    %v4663 = vld [vmem:[#allocation5 + $0x40] sm:$0xff]
    %v4664 = vld [vmem:[#allocation5 + $0x48] sm:$0xff]
    %v4665 = vld [vmem:[#allocation5 + $0x50] sm:$0xff]
    %v4666 = vld [vmem:[#allocation5 + $0x58] sm:$0xff]
    %v4667 = vld [vmem:[#allocation5 + $0x60] sm:$0xff]
    %v4668 = vld [vmem:[#allocation5 + $0x68] sm:$0xff]
    %v4669 = vld [vmem:[#allocation5 + $0x70] sm:$0xff]
    %v4670 = vld [vmem:[#allocation5 + $0x78] sm:$0xff]
    %v4671 = vmul.f32 %v4655, 0.5
    %v4672 = vmul.f32 %v4656, 0.5
    %v4673 = vmul.f32 %v4657, 0.5
    %v4674 = vmul.f32 %v4658, 0.5
    %v4675 = vmul.f32 %v4659, 0.5
    %v4676 = vmul.f32 %v4660, 0.5
    %v4677 = vmul.f32 %v4661, 0.5
    %v4678 = vmul.f32 %v4662, 0.5
    %v4679 = vmul.f32 %v4663, 0.5
    %v4680 = vmul.f32 %v4664, 0.5
    %v4681 = vmul.f32 %v4665, 0.5
    %v4682 = vmul.f32 %v4666, 0.5
    %v4683 = vmul.f32 %v4667, 0.5
    %v4684 = vmul.f32 %v4668, 0.5
    %v4685 = vmul.f32 %v4669, 0.5
    %v4686 = vmul.f32 %v4670, 0.5
    %v4687 = vtanh.pop %v4671
    %v4688 = vtanh.pop %v4672
    %v4689 = vtanh.pop %v4673
    %v4690 = vtanh.pop %v4674
    %v4691 = vtanh.pop %v4675
    %v4692 = vtanh.pop %v4676
    %v4693 = vtanh.pop %v4677
    %v4694 = vtanh.pop %v4678
    %v4695 = vtanh.pop %v4679
    %v4696 = vtanh.pop %v4680
    %v4697 = vtanh.pop %v4681
    %v4698 = vtanh.pop %v4682
    %v4699 = vtanh.pop %v4683
    %v4700 = vtanh.pop %v4684
    %v4701 = vtanh.pop %v4685
    %v4702 = vtanh.pop %v4686
    %v4703 = vadd.f32 %v4687, 1.0
    %v4704 = vadd.f32 %v4688, 1.0
    %v4705 = vadd.f32 %v4689, 1.0
    %v4706 = vadd.f32 %v4690, 1.0
    %v4707 = vadd.f32 %v4691, 1.0
    %v4708 = vadd.f32 %v4692, 1.0
    %v4709 = vadd.f32 %v4693, 1.0
    %v4710 = vadd.f32 %v4694, 1.0
    %v4711 = vadd.f32 %v4695, 1.0
    %v4712 = vadd.f32 %v4696, 1.0
    %v4713 = vadd.f32 %v4697, 1.0
    %v4714 = vadd.f32 %v4698, 1.0
    %v4715 = vadd.f32 %v4699, 1.0
    %v4716 = vadd.f32 %v4700, 1.0
    %v4717 = vadd.f32 %v4701, 1.0
    %v4718 = vadd.f32 %v4702, 1.0
    %v4719 = vmul.f32 %v4703, 0.5
    %v4720 = vmul.f32 %v4704, 0.5
    %v4721 = vmul.f32 %v4705, 0.5
    %v4722 = vmul.f32 %v4706, 0.5
    %v4723 = vmul.f32 %v4707, 0.5
    %v4724 = vmul.f32 %v4708, 0.5
    %v4725 = vmul.f32 %v4709, 0.5
    %v4726 = vmul.f32 %v4710, 0.5
    %v4727 = vmul.f32 %v4711, 0.5
    %v4728 = vmul.f32 %v4712, 0.5
    %v4729 = vmul.f32 %v4713, 0.5
    %v4730 = vmul.f32 %v4714, 0.5
    %v4731 = vmul.f32 %v4715, 0.5
    %v4732 = vmul.f32 %v4716, 0.5
    %v4733 = vmul.f32 %v4717, 0.5
    %v4734 = vmul.f32 %v4718, 0.5
    %4735 = vst [vmem:[#allocation5] sm:$0xff] %v4719
    %4736 = vst [vmem:[#allocation5 + $0x8] sm:$0xff] %v4720
    %4737 = vst [vmem:[#allocation5 + $0x10] sm:$0xff] %v4721
    %4738 = vst [vmem:[#allocation5 + $0x18] sm:$0xff] %v4722
    %4739 = vst [vmem:[#allocation5 + $0x20] sm:$0xff] %v4723
    %4740 = vst [vmem:[#allocation5 + $0x28] sm:$0xff] %v4724
    %4741 = vst [vmem:[#allocation5 + $0x30] sm:$0xff] %v4725
    %4742 = vst [vmem:[#allocation5 + $0x38] sm:$0xff] %v4726
    %4743 = vst [vmem:[#allocation5 + $0x40] sm:$0xff] %v4727
    %4744 = vst [vmem:[#allocation5 + $0x48] sm:$0xff] %v4728
    %4745 = vst [vmem:[#allocation5 + $0x50] sm:$0xff] %v4729
    %4746 = vst [vmem:[#allocation5 + $0x58] sm:$0xff] %v4730
    %4747 = vst [vmem:[#allocation5 + $0x60] sm:$0xff] %v4731
    %4748 = vst [vmem:[#allocation5 + $0x68] sm:$0xff] %v4732
    %4749 = vst [vmem:[#allocation5 + $0x70] sm:$0xff] %v4733
    %4750 = vst [vmem:[#allocation5 + $0x78] sm:$0xff] %v4734
    // Predicated region
    $region26: #{disentangle_forward.1} parent=1 // pred_check
      _
    $region27: #{disentangle_forward.1} parent=1 // pred_check_branch
      %4752 = sbr.rel (0) target = $region29
    $region28: #{disentangle_forward.1} parent=1 // pred_region
      %s4754 = ssub.s32 2048, 2048
      %4755 = vsyncadd [#allocation4], %s4754
      %s4756 = sshll.u32 [#allocation3], 4
      %s4757 = int_to_ptr.vmem [resolvable:$true] %s4756
      %4762 = dma.vmem_to_hbm [thread:$0]  %s4757, 2048, %s6, [#allocation4], 128, 128, 8
    $region29: #{disentangle_forward.1} parent=1 // pred_fallthru
      _
    // Predicated region
    $region30: #{disentangle_forward.1} parent=1 // pred_check
      _
    $region31: #{disentangle_forward.1} parent=1 // pred_check_branch
      %4764 = sbr.rel (0) target = $region33
    $region32: #{disentangle_forward.1} parent=1 // pred_region
      %s4766 = ssub.s32 2048, 2048
      %4767 = vsyncadd [#allocation6], %s4766
      %s4768 = sshll.u32 [#allocation5], 4
      %s4769 = int_to_ptr.vmem [resolvable:$true] %s4768
      %4774 = dma.vmem_to_hbm [thread:$0]  %s4769, 2048, %s7, [#allocation6], 128, 128, 8
    $region33: #{disentangle_forward.1} parent=1 // pred_fallthru
      _
    // Predicated region
    $region34: #{disentangle_forward.1} parent=1 // pred_check
      _
    $region35: #{disentangle_forward.1} parent=1 // pred_check_branch
      %4776 = sbr.rel (0) target = $region37
    $region36: #{disentangle_forward.1} parent=1 // pred_region
      %4777 = dma.done [#allocation4], 2048
    $region37: #{disentangle_forward.1} parent=1 // pred_fallthru
      _
    // Predicated region
    $region38: #{disentangle_forward.1} parent=1 // pred_check
      _
    $region39: #{disentangle_forward.1} parent=1 // pred_check_branch
      %4779 = sbr.rel (0) target = $region41
    $region40: #{disentangle_forward.1} parent=1 // pred_region
      %4780 = dma.done [#allocation6], 2048
    $region41: #{disentangle_forward.1} parent=1 // pred_fallthru
      _
    %4781 = vsyncpa [#allocation4], 1
    %4782 = vsyncpa [#allocation6], 1

</llo_original>
